<compile_context>
chip_gen: v7x
topology: tpu7x:2x2x1
jax: 0.10.0
libtpu: 0.0.40
codegen_flags: <defaults>
</compile_context>

<pallas_src>
import functools

import jax
import jax.numpy as jnp
from jax.experimental import pallas as pl
from jax.experimental.pallas import tpu as pltpu


# ---------------------------------------------------------------------------
# Static network geometry (MNIST-sized input implied by `x.view(-1, 256)`).
# ---------------------------------------------------------------------------
H = W = 28            # conv1 input spatial size
K = 5                 # conv kernel size (both convs)
C1, C2 = 6, 16        # conv output channels
OH1 = OW1 = 24        # conv1 output spatial size
PH1 = PW1 = 12        # pool1 output spatial size
OH2 = OW2 = 8         # conv2 output spatial size
PH2 = PW2 = 4         # pool2 output spatial size

XLEN = H * W          # 784 flattened input pixels per sample
XPAD = 800            # padded flat row (max im2col slice end = 116+672 = 788)
L1 = OH1 * W          # 672: conv1 row length (cols with ow >= 24 are junk)
Q1LEN = 640           # pool1 pre-decimation map length (valid idx <= 638)
U2LEN = 408           # conv2 pre-decimation row length (valid idx <= 406)
Y2LEN = OH2 * OW2     # 64
Q2LEN = 55            # pool2 pre-decimation map length (valid idx <= 54)
NFLAT = C2 * PH2 * PW2  # 256


# ---------------------------------------------------------------------------
# Fused whole-network kernel (one grid step == one sample)
# ---------------------------------------------------------------------------
def _convnet_kernel(x_ref, w1_ref, b1_ref, w2_ref, b2_ref, s1_ref, s2_ref,
                    fw1_ref, fb1_ref, fw2_ref, fb2_ref, fw3_ref, fb3_ref,
                    o_ref, a1_ref, flat_ref):
    f32, bf16 = jnp.float32, jnp.bfloat16

    # ---- conv1 ------------------------------------------------------------
    # Transposed im2col rows: a1[kh*5+kw, oh*28+ow] = x[oh+kh, ow+kw]
    # (built with 25 static, stride-1 lane slices; zero tail pad feeds only
    #  junk output columns).
    xrow = x_ref[0]                                         # (1, XPAD) f32
    for kh in range(K):
        for kw in range(K):
            j = kh * K + kw
            s = kh * W + kw
            a1_ref[j:j + 1, :] = xrow[:, s:s + L1]
    # y1[c, oh*28 + ow] = relu(conv1(x) + b1); columns with ow >= 24 are junk.
    y1 = jnp.dot(w1_ref[...], a1_ref[...].astype(bf16),
                 preferred_element_type=f32)                # (6, 672) f32
    y1 = jnp.maximum(y1 + b1_ref[...], 0.0)

    # ---- pool1 (max stage only; stride-2 decimation folded into conv2) ----
    # q1[c, 56*ph + 2*pw] = maxpool2x2(relu(conv1))[c, ph, pw]
    q1 = jnp.maximum(
        jnp.maximum(y1[:, 0:Q1LEN], y1[:, 1:Q1LEN + 1]),
        jnp.maximum(y1[:, W:W + Q1LEN], y1[:, W + 1:W + 1 + Q1LEN]))
    q1 = q1.astype(bf16)                                    # (6, 640)

    # ---- conv2: accumulate over the 25 (kh, kw) taps on the MXU ------------
    # u[c2, 56*ph' + 2*pw'] = conv2(pool1)[c2, ph', pw']   (pre-bias)
    u = jnp.zeros((C2, U2LEN), f32)
    for kh in range(K):
        for kw in range(K):
            off = 2 * (kh * W + kw)                         # 56*kh + 2*kw
            r0 = (kh * K + kw) * C2
            w2_blk = w2_ref[r0:r0 + C2, :]                  # (16, 6) bf16
            u = u + jnp.dot(w2_blk, q1[:, off:off + U2LEN],
                            preferred_element_type=f32)
    # Selection matmul performs the pool1 stride-2 decimation.
    y2 = jnp.dot(u.astype(bf16), s1_ref[...],
                 preferred_element_type=f32)                # (16, 64)
    y2 = jnp.maximum(y2 + b2_ref[...], 0.0)                 # y2[c2, 8*ph'+pw']

    # ---- pool2 (max stage + selection-matmul decimation) -------------------
    q2 = jnp.maximum(
        jnp.maximum(y2[:, 0:Q2LEN], y2[:, 1:Q2LEN + 1]),
        jnp.maximum(y2[:, OW2:OW2 + Q2LEN], y2[:, OW2 + 1:OW2 + 1 + Q2LEN]))
    p2 = jnp.dot(q2.astype(bf16), s2_ref[...],
                 preferred_element_type=f32)                # (16, 16): [c2, 4p+q]

    # ---- flatten (torch .view(-1, 256): index = c*16 + 4*p + q) ------------
    for c in range(C2):
        flat_ref[:, c * (PH2 * PW2):(c + 1) * (PH2 * PW2)] = p2[c:c + 1, :]
    flat = flat_ref[...].astype(bf16)                       # (1, 256)

    # ---- fully connected stack ---------------------------------------------
    h = jnp.dot(flat, fw1_ref[...], preferred_element_type=f32) + fb1_ref[...]
    h = jnp.maximum(h, 0.0).astype(bf16)
    h = jnp.dot(h, fw2_ref[...], preferred_element_type=f32) + fb2_ref[...]
    h = jnp.maximum(h, 0.0).astype(bf16)
    out = jnp.dot(h, fw3_ref[...], preferred_element_type=f32) + fb3_ref[...]
    o_ref[0] = out                                          # (1, 10) logits


# ---------------------------------------------------------------------------
# Host-side wrapper (layout prep on tiny tensors only; single pallas_call)
# ---------------------------------------------------------------------------
def _selection_matrix(src_len, sel_idx, dtype):
    """S[l, m] = 1.0 if l == sel_idx[m] else 0.0  (shape (src_len, len(sel)))."""
    sel = jnp.asarray(sel_idx, jnp.int32)
    return (jnp.arange(src_len, dtype=jnp.int32)[:, None] == sel[None, :]).astype(dtype)


@jax.jit
def convnet_forward(params, x):
    f32, bf16 = jnp.float32, jnp.bfloat16
    N = x.shape[0]

    # Flattened, zero-padded per-sample input row (pad only feeds junk cols).
    xf = x.astype(f32).reshape(N, 1, XLEN)
    xf = jnp.pad(xf, ((0, 0), (0, 0), (0, XPAD - XLEN)))

    # conv1: (6, 25) with column order (kh, kw) — matches in-kernel j = 5*kh+kw
    w1 = params["conv1_w"].reshape(C1, K * K).astype(bf16)
    b1 = params["conv1_b"].reshape(C1, 1).astype(f32)
    # conv2: w2[(kh*5+kw)*16 + co, ci] = conv2_w[co, ci, kh, kw]
    w2 = jnp.transpose(params["conv2_w"], (2, 3, 0, 1)).reshape(K * K * C2, C1)
    w2 = w2.astype(bf16)
    b2 = params["conv2_b"].reshape(C2, 1).astype(f32)
    # 0/1 selection matrices (stride-2 decimation done on the MXU).
    s1 = _selection_matrix(
        U2LEN, [2 * (W * (m // OW2) + m % OW2) for m in range(Y2LEN)], bf16)
    s2 = _selection_matrix(
        Q2LEN, [2 * (OW2 * (m // PW2) + m % PW2) for m in range(PH2 * PW2)], bf16)
    fw1 = params["fc1_w"].T.astype(bf16)                   # (256, 120)
    fb1 = params["fc1_b"].reshape(1, -1).astype(f32)
    fw2 = params["fc2_w"].T.astype(bf16)                   # (120, 84)
    fb2 = params["fc2_b"].reshape(1, -1).astype(f32)
    fw3 = params["fc3_w"].T.astype(bf16)                   # (84, 10)
    fb3 = params["fc3_b"].reshape(1, -1).astype(f32)

    def full(a):
        nd = a.ndim
        return pl.BlockSpec(a.shape, lambda n, _nd=nd: (0,) * _nd)

    out = pl.pallas_call(
        _convnet_kernel,
        out_shape=jax.ShapeDtypeStruct((N, 1, 10), f32),
        grid=(N,),
        in_specs=[
            pl.BlockSpec((1, 1, XPAD), lambda n: (n, 0, 0)),
            full(w1), full(b1), full(w2), full(b2), full(s1), full(s2),
            full(fw1), full(fb1), full(fw2), full(fb2), full(fw3), full(fb3),
        ],
        out_specs=pl.BlockSpec((1, 1, 10), lambda n: (n, 0, 0)),
        scratch_shapes=[
            pltpu.VMEM((K * K, L1), f32),    # conv1 transposed im2col rows
            pltpu.VMEM((1, NFLAT), f32),     # flattened pool2 output
        ],
        compiler_params=pltpu.CompilerParams(
            dimension_semantics=("parallel",)),
    )(xf, w1, b1, w2, b2, s1, s2, fw1, fb1, fw2, fb2, fw3, fb3)
    return out.reshape(N, 10)


# ---------------------------------------------------------------------------
# Parameters (deterministic, PyTorch-style uniform(-1/sqrt(fan_in), ...))
# ---------------------------------------------------------------------------
def init_params(key):
    ks = jax.random.split(key, 10)

    def u(k, shape, fan_in):
        bound = 1.0 / jnp.sqrt(jnp.float32(fan_in))
        return jax.random.uniform(k, shape, jnp.float32, -bound, bound)

    return {
        "conv1_w": u(ks[0], (6, 1, 5, 5), 1 * 5 * 5),
        "conv1_b": u(ks[1], (6,), 1 * 5 * 5),
        "conv2_w": u(ks[2], (16, 6, 5, 5), 6 * 5 * 5),
        "conv2_b": u(ks[3], (16,), 6 * 5 * 5),
        "fc1_w": u(ks[4], (120, 256), 256),
        "fc1_b": u(ks[5], (120,), 256),
        "fc2_w": u(ks[6], (84, 120), 120),
        "fc2_b": u(ks[7], (84,), 120),
        "fc3_w": u(ks[8], (10, 84), 84),
        "fc3_b": u(ks[9], (10,), 84),
    }


# ---------------------------------------------------------------------------
# Pure-JAX reference (mirrors ConvNet.forward) for a loose numeric self-check
# ---------------------------------------------------------------------------
def _reference_forward(params, x):
    def conv2d(a, w, b):
        Co, Ci, k, _ = w.shape
        n, c, h, ww = a.shape
        oh, ow = h - k + 1, ww - k + 1
        cols = jnp.stack([a[:, :, i:i + oh, j:j + ow]
                          for i in range(k) for j in range(k)], axis=2)
        y = jnp.einsum("nckhw,ock->nohw", cols, w.reshape(Co, Ci, k * k))
        return y + b[None, :, None, None]

    def pool2x2(a):
        return jnp.maximum(
            jnp.maximum(a[:, :, 0::2, 0::2], a[:, :, 0::2, 1::2]),
            jnp.maximum(a[:, :, 1::2, 0::2], a[:, :, 1::2, 1::2]))

    a = pool2x2(jax.nn.relu(conv2d(x, params["conv1_w"], params["conv1_b"])))
    a = pool2x2(jax.nn.relu(conv2d(a, params["conv2_w"], params["conv2_b"])))
    a = a.reshape(a.shape[0], -1)
    a = jax.nn.relu(a @ params["fc1_w"].T + params["fc1_b"])
    a = jax.nn.relu(a @ params["fc2_w"].T + params["fc2_b"])
    return a @ params["fc3_w"].T + params["fc3_b"]


if __name__ == "__main__":
    key = jax.random.PRNGKey(0)
    pkey, xkey = jax.random.split(key)
    params = init_params(pkey)
    # Input size implied by `x.view(-1, 256)` after two conv+pool stages:
    # (N, 1, 28, 28) (MNIST-sized). Small batch = 2.
    x = jax.random.normal(xkey, (2, 1, 28, 28), jnp.float32)

    out = convnet_forward(params, x)
    jax.block_until_ready(out)
    assert out.shape == (2, 10) and out.dtype == jnp.float32

    ref = _reference_forward(params, x)
    err = float(jnp.max(jnp.abs(out - ref)))
    # Generous tolerance: only difference vs. the f32 reference is bf16
    # rounding of the MXU operands.
    assert err < 5e-2, f"kernel/reference mismatch: max abs err {err}"
    print("KERNEL_OK")
</pallas_src>

<mosaic_0001>
module attributes {stable_mosaic.version = 11 : i64} {
  func.func @_convnet_kernel(%arg0: i32, %arg1: memref<1x1x800xf32, #tpu.memory_space<vmem>>, %arg2: memref<6x25xbf16, #tpu.memory_space<vmem>>, %arg3: memref<6x1xf32, #tpu.memory_space<vmem>>, %arg4: memref<400x6xbf16, #tpu.memory_space<vmem>>, %arg5: memref<16x1xf32, #tpu.memory_space<vmem>>, %arg6: memref<408x64xbf16, #tpu.memory_space<vmem>>, %arg7: memref<55x16xbf16, #tpu.memory_space<vmem>>, %arg8: memref<256x120xbf16, #tpu.memory_space<vmem>>, %arg9: memref<1x120xf32, #tpu.memory_space<vmem>>, %arg10: memref<120x84xbf16, #tpu.memory_space<vmem>>, %arg11: memref<1x84xf32, #tpu.memory_space<vmem>>, %arg12: memref<84x10xbf16, #tpu.memory_space<vmem>>, %arg13: memref<1x10xf32, #tpu.memory_space<vmem>>, %arg14: memref<1x1x10xf32, #tpu.memory_space<vmem>>, %arg15: memref<25x672xf32, #tpu.memory_space<vmem>>, %arg16: memref<1x256xf32, #tpu.memory_space<vmem>>) attributes {dimension_semantics = [#tpu.dimension_semantics<parallel>], iteration_bounds = array<i64: 2>, scalar_prefetch = 0 : i64, scratch_operands = 2 : i64, tpu.core_type = #tpu.core_type<tc>, window_params = [{transform_indices = @transform_0, window_bounds = array<i64: 1, 1, 800>}, {pipeline_mode = #tpu.pipeline_mode<synchronous>, transform_indices = @transform_1, window_bounds = array<i64: 6, 25>}, {pipeline_mode = #tpu.pipeline_mode<synchronous>, transform_indices = @transform_2, window_bounds = array<i64: 6, 1>}, {pipeline_mode = #tpu.pipeline_mode<synchronous>, transform_indices = @transform_3, window_bounds = array<i64: 400, 6>}, {pipeline_mode = #tpu.pipeline_mode<synchronous>, transform_indices = @transform_4, window_bounds = array<i64: 16, 1>}, {pipeline_mode = #tpu.pipeline_mode<synchronous>, transform_indices = @transform_5, window_bounds = array<i64: 408, 64>}, {pipeline_mode = #tpu.pipeline_mode<synchronous>, transform_indices = @transform_6, window_bounds = array<i64: 55, 16>}, {pipeline_mode = #tpu.pipeline_mode<synchronous>, transform_indices = @transform_7, window_bounds = array<i64: 256, 120>}, {pipeline_mode = #tpu.pipeline_mode<synchronous>, transform_indices = @transform_8, window_bounds = array<i64: 1, 120>}, {pipeline_mode = #tpu.pipeline_mode<synchronous>, transform_indices = @transform_9, window_bounds = array<i64: 120, 84>}, {pipeline_mode = #tpu.pipeline_mode<synchronous>, transform_indices = @transform_10, window_bounds = array<i64: 1, 84>}, {pipeline_mode = #tpu.pipeline_mode<synchronous>, transform_indices = @transform_11, window_bounds = array<i64: 84, 10>}, {pipeline_mode = #tpu.pipeline_mode<synchronous>, transform_indices = @transform_12, window_bounds = array<i64: 1, 10>}, {transform_indices = @transform_13, window_bounds = array<i64: 1, 1, 10>}]} {
    %c0 = arith.constant 0 : index
    %c0_0 = arith.constant 0 : index
    %c0_1 = arith.constant 0 : index
    %0 = vector.load %arg1[%c0, %c0_0, %c0_1] : memref<1x1x800xf32, #tpu.memory_space<vmem>>, vector<1x1x800xf32>
    %1 = vector.shape_cast %0 : vector<1x1x800xf32> to vector<1x800xf32>
    %2 = vector.extract_strided_slice %1 {offsets = [0, 0], sizes = [1, 672], strides = [1, 1]} : vector<1x800xf32> to vector<1x672xf32>
    %c0_2 = arith.constant 0 : index
    %c0_3 = arith.constant 0 : index
    %3 = vector.load %arg15[%c0_2, %c0_3] : memref<25x672xf32, #tpu.memory_space<vmem>>, vector<1x672xf32>
    tpu.vector_store %arg15[%c0_2, %c0_3], %2 {strides = array<i32>} : memref<25x672xf32, #tpu.memory_space<vmem>>, vector<1x672xf32>,
    %4 = vector.extract_strided_slice %1 {offsets = [0, 1], sizes = [1, 672], strides = [1, 1]} : vector<1x800xf32> to vector<1x672xf32>
    %c1 = arith.constant 1 : index
    %c0_4 = arith.constant 0 : index
    %5 = vector.load %arg15[%c1, %c0_4] : memref<25x672xf32, #tpu.memory_space<vmem>>, vector<1x672xf32>
    tpu.vector_store %arg15[%c1, %c0_4], %4 {strides = array<i32>} : memref<25x672xf32, #tpu.memory_space<vmem>>, vector<1x672xf32>,
    %6 = vector.extract_strided_slice %1 {offsets = [0, 2], sizes = [1, 672], strides = [1, 1]} : vector<1x800xf32> to vector<1x672xf32>
    %c2 = arith.constant 2 : index
    %c0_5 = arith.constant 0 : index
    %7 = vector.load %arg15[%c2, %c0_5] : memref<25x672xf32, #tpu.memory_space<vmem>>, vector<1x672xf32>
    tpu.vector_store %arg15[%c2, %c0_5], %6 {strides = array<i32>} : memref<25x672xf32, #tpu.memory_space<vmem>>, vector<1x672xf32>,
    %8 = vector.extract_strided_slice %1 {offsets = [0, 3], sizes = [1, 672], strides = [1, 1]} : vector<1x800xf32> to vector<1x672xf32>
    %c3 = arith.constant 3 : index
    %c0_6 = arith.constant 0 : index
    %9 = vector.load %arg15[%c3, %c0_6] : memref<25x672xf32, #tpu.memory_space<vmem>>, vector<1x672xf32>
    tpu.vector_store %arg15[%c3, %c0_6], %8 {strides = array<i32>} : memref<25x672xf32, #tpu.memory_space<vmem>>, vector<1x672xf32>,
    %10 = vector.extract_strided_slice %1 {offsets = [0, 4], sizes = [1, 672], strides = [1, 1]} : vector<1x800xf32> to vector<1x672xf32>
    %c4 = arith.constant 4 : index
    %c0_7 = arith.constant 0 : index
    %11 = vector.load %arg15[%c4, %c0_7] : memref<25x672xf32, #tpu.memory_space<vmem>>, vector<1x672xf32>
    tpu.vector_store %arg15[%c4, %c0_7], %10 {strides = array<i32>} : memref<25x672xf32, #tpu.memory_space<vmem>>, vector<1x672xf32>,
    %12 = vector.extract_strided_slice %1 {offsets = [0, 28], sizes = [1, 672], strides = [1, 1]} : vector<1x800xf32> to vector<1x672xf32>
    %c5 = arith.constant 5 : index
    %c0_8 = arith.constant 0 : index
    %13 = vector.load %arg15[%c5, %c0_8] : memref<25x672xf32, #tpu.memory_space<vmem>>, vector<1x672xf32>
    tpu.vector_store %arg15[%c5, %c0_8], %12 {strides = array<i32>} : memref<25x672xf32, #tpu.memory_space<vmem>>, vector<1x672xf32>,
    %14 = vector.extract_strided_slice %1 {offsets = [0, 29], sizes = [1, 672], strides = [1, 1]} : vector<1x800xf32> to vector<1x672xf32>
    %c6 = arith.constant 6 : index
    %c0_9 = arith.constant 0 : index
    %15 = vector.load %arg15[%c6, %c0_9] : memref<25x672xf32, #tpu.memory_space<vmem>>, vector<1x672xf32>
    tpu.vector_store %arg15[%c6, %c0_9], %14 {strides = array<i32>} : memref<25x672xf32, #tpu.memory_space<vmem>>, vector<1x672xf32>,
    %16 = vector.extract_strided_slice %1 {offsets = [0, 30], sizes = [1, 672], strides = [1, 1]} : vector<1x800xf32> to vector<1x672xf32>
    %c7 = arith.constant 7 : index
    %c0_10 = arith.constant 0 : index
    %17 = vector.load %arg15[%c7, %c0_10] : memref<25x672xf32, #tpu.memory_space<vmem>>, vector<1x672xf32>
    tpu.vector_store %arg15[%c7, %c0_10], %16 {strides = array<i32>} : memref<25x672xf32, #tpu.memory_space<vmem>>, vector<1x672xf32>,
    %18 = vector.extract_strided_slice %1 {offsets = [0, 31], sizes = [1, 672], strides = [1, 1]} : vector<1x800xf32> to vector<1x672xf32>
    %c8 = arith.constant 8 : index
    %c0_11 = arith.constant 0 : index
    %19 = vector.load %arg15[%c8, %c0_11] : memref<25x672xf32, #tpu.memory_space<vmem>>, vector<1x672xf32>
    tpu.vector_store %arg15[%c8, %c0_11], %18 {strides = array<i32>} : memref<25x672xf32, #tpu.memory_space<vmem>>, vector<1x672xf32>,
    %20 = vector.extract_strided_slice %1 {offsets = [0, 32], sizes = [1, 672], strides = [1, 1]} : vector<1x800xf32> to vector<1x672xf32>
    %c9 = arith.constant 9 : index
    %c0_12 = arith.constant 0 : index
    %21 = vector.load %arg15[%c9, %c0_12] : memref<25x672xf32, #tpu.memory_space<vmem>>, vector<1x672xf32>
    tpu.vector_store %arg15[%c9, %c0_12], %20 {strides = array<i32>} : memref<25x672xf32, #tpu.memory_space<vmem>>, vector<1x672xf32>,
    %22 = vector.extract_strided_slice %1 {offsets = [0, 56], sizes = [1, 672], strides = [1, 1]} : vector<1x800xf32> to vector<1x672xf32>
    %c10 = arith.constant 10 : index
    %c0_13 = arith.constant 0 : index
    %23 = vector.load %arg15[%c10, %c0_13] : memref<25x672xf32, #tpu.memory_space<vmem>>, vector<1x672xf32>
    tpu.vector_store %arg15[%c10, %c0_13], %22 {strides = array<i32>} : memref<25x672xf32, #tpu.memory_space<vmem>>, vector<1x672xf32>,
    %24 = vector.extract_strided_slice %1 {offsets = [0, 57], sizes = [1, 672], strides = [1, 1]} : vector<1x800xf32> to vector<1x672xf32>
    %c11 = arith.constant 11 : index
    %c0_14 = arith.constant 0 : index
    %25 = vector.load %arg15[%c11, %c0_14] : memref<25x672xf32, #tpu.memory_space<vmem>>, vector<1x672xf32>
    tpu.vector_store %arg15[%c11, %c0_14], %24 {strides = array<i32>} : memref<25x672xf32, #tpu.memory_space<vmem>>, vector<1x672xf32>,
    %26 = vector.extract_strided_slice %1 {offsets = [0, 58], sizes = [1, 672], strides = [1, 1]} : vector<1x800xf32> to vector<1x672xf32>
    %c12 = arith.constant 12 : index
    %c0_15 = arith.constant 0 : index
    %27 = vector.load %arg15[%c12, %c0_15] : memref<25x672xf32, #tpu.memory_space<vmem>>, vector<1x672xf32>
    tpu.vector_store %arg15[%c12, %c0_15], %26 {strides = array<i32>} : memref<25x672xf32, #tpu.memory_space<vmem>>, vector<1x672xf32>,
    %28 = vector.extract_strided_slice %1 {offsets = [0, 59], sizes = [1, 672], strides = [1, 1]} : vector<1x800xf32> to vector<1x672xf32>
    %c13 = arith.constant 13 : index
    %c0_16 = arith.constant 0 : index
    %29 = vector.load %arg15[%c13, %c0_16] : memref<25x672xf32, #tpu.memory_space<vmem>>, vector<1x672xf32>
    tpu.vector_store %arg15[%c13, %c0_16], %28 {strides = array<i32>} : memref<25x672xf32, #tpu.memory_space<vmem>>, vector<1x672xf32>,
    %30 = vector.extract_strided_slice %1 {offsets = [0, 60], sizes = [1, 672], strides = [1, 1]} : vector<1x800xf32> to vector<1x672xf32>
    %c14 = arith.constant 14 : index
    %c0_17 = arith.constant 0 : index
    %31 = vector.load %arg15[%c14, %c0_17] : memref<25x672xf32, #tpu.memory_space<vmem>>, vector<1x672xf32>
    tpu.vector_store %arg15[%c14, %c0_17], %30 {strides = array<i32>} : memref<25x672xf32, #tpu.memory_space<vmem>>, vector<1x672xf32>,
    %32 = vector.extract_strided_slice %1 {offsets = [0, 84], sizes = [1, 672], strides = [1, 1]} : vector<1x800xf32> to vector<1x672xf32>
    %c15 = arith.constant 15 : index
    %c0_18 = arith.constant 0 : index
    %33 = vector.load %arg15[%c15, %c0_18] : memref<25x672xf32, #tpu.memory_space<vmem>>, vector<1x672xf32>
    tpu.vector_store %arg15[%c15, %c0_18], %32 {strides = array<i32>} : memref<25x672xf32, #tpu.memory_space<vmem>>, vector<1x672xf32>,
    %34 = vector.extract_strided_slice %1 {offsets = [0, 85], sizes = [1, 672], strides = [1, 1]} : vector<1x800xf32> to vector<1x672xf32>
    %c16 = arith.constant 16 : index
    %c0_19 = arith.constant 0 : index
    %35 = vector.load %arg15[%c16, %c0_19] : memref<25x672xf32, #tpu.memory_space<vmem>>, vector<1x672xf32>
    tpu.vector_store %arg15[%c16, %c0_19], %34 {strides = array<i32>} : memref<25x672xf32, #tpu.memory_space<vmem>>, vector<1x672xf32>,
    %36 = vector.extract_strided_slice %1 {offsets = [0, 86], sizes = [1, 672], strides = [1, 1]} : vector<1x800xf32> to vector<1x672xf32>
    %c17 = arith.constant 17 : index
    %c0_20 = arith.constant 0 : index
    %37 = vector.load %arg15[%c17, %c0_20] : memref<25x672xf32, #tpu.memory_space<vmem>>, vector<1x672xf32>
    tpu.vector_store %arg15[%c17, %c0_20], %36 {strides = array<i32>} : memref<25x672xf32, #tpu.memory_space<vmem>>, vector<1x672xf32>,
    %38 = vector.extract_strided_slice %1 {offsets = [0, 87], sizes = [1, 672], strides = [1, 1]} : vector<1x800xf32> to vector<1x672xf32>
    %c18 = arith.constant 18 : index
    %c0_21 = arith.constant 0 : index
    %39 = vector.load %arg15[%c18, %c0_21] : memref<25x672xf32, #tpu.memory_space<vmem>>, vector<1x672xf32>
    tpu.vector_store %arg15[%c18, %c0_21], %38 {strides = array<i32>} : memref<25x672xf32, #tpu.memory_space<vmem>>, vector<1x672xf32>,
    %40 = vector.extract_strided_slice %1 {offsets = [0, 88], sizes = [1, 672], strides = [1, 1]} : vector<1x800xf32> to vector<1x672xf32>
    %c19 = arith.constant 19 : index
    %c0_22 = arith.constant 0 : index
    %41 = vector.load %arg15[%c19, %c0_22] : memref<25x672xf32, #tpu.memory_space<vmem>>, vector<1x672xf32>
    tpu.vector_store %arg15[%c19, %c0_22], %40 {strides = array<i32>} : memref<25x672xf32, #tpu.memory_space<vmem>>, vector<1x672xf32>,
    %42 = vector.extract_strided_slice %1 {offsets = [0, 112], sizes = [1, 672], strides = [1, 1]} : vector<1x800xf32> to vector<1x672xf32>
    %c20 = arith.constant 20 : index
    %c0_23 = arith.constant 0 : index
    %43 = vector.load %arg15[%c20, %c0_23] : memref<25x672xf32, #tpu.memory_space<vmem>>, vector<1x672xf32>
    tpu.vector_store %arg15[%c20, %c0_23], %42 {strides = array<i32>} : memref<25x672xf32, #tpu.memory_space<vmem>>, vector<1x672xf32>,
    %44 = vector.extract_strided_slice %1 {offsets = [0, 113], sizes = [1, 672], strides = [1, 1]} : vector<1x800xf32> to vector<1x672xf32>
    %c21 = arith.constant 21 : index
    %c0_24 = arith.constant 0 : index
    %45 = vector.load %arg15[%c21, %c0_24] : memref<25x672xf32, #tpu.memory_space<vmem>>, vector<1x672xf32>
    tpu.vector_store %arg15[%c21, %c0_24], %44 {strides = array<i32>} : memref<25x672xf32, #tpu.memory_space<vmem>>, vector<1x672xf32>,
    %46 = vector.extract_strided_slice %1 {offsets = [0, 114], sizes = [1, 672], strides = [1, 1]} : vector<1x800xf32> to vector<1x672xf32>
    %c22 = arith.constant 22 : index
    %c0_25 = arith.constant 0 : index
    %47 = vector.load %arg15[%c22, %c0_25] : memref<25x672xf32, #tpu.memory_space<vmem>>, vector<1x672xf32>
    tpu.vector_store %arg15[%c22, %c0_25], %46 {strides = array<i32>} : memref<25x672xf32, #tpu.memory_space<vmem>>, vector<1x672xf32>,
    %48 = vector.extract_strided_slice %1 {offsets = [0, 115], sizes = [1, 672], strides = [1, 1]} : vector<1x800xf32> to vector<1x672xf32>
    %c23 = arith.constant 23 : index
    %c0_26 = arith.constant 0 : index
    %49 = vector.load %arg15[%c23, %c0_26] : memref<25x672xf32, #tpu.memory_space<vmem>>, vector<1x672xf32>
    tpu.vector_store %arg15[%c23, %c0_26], %48 {strides = array<i32>} : memref<25x672xf32, #tpu.memory_space<vmem>>, vector<1x672xf32>,
    %50 = vector.extract_strided_slice %1 {offsets = [0, 116], sizes = [1, 672], strides = [1, 1]} : vector<1x800xf32> to vector<1x672xf32>
    %c24 = arith.constant 24 : index
    %c0_27 = arith.constant 0 : index
    %51 = vector.load %arg15[%c24, %c0_27] : memref<25x672xf32, #tpu.memory_space<vmem>>, vector<1x672xf32>
    tpu.vector_store %arg15[%c24, %c0_27], %50 {strides = array<i32>} : memref<25x672xf32, #tpu.memory_space<vmem>>, vector<1x672xf32>,
    %c0_28 = arith.constant 0 : index
    %c0_29 = arith.constant 0 : index
    %52 = vector.load %arg2[%c0_28, %c0_29] : memref<6x25xbf16, #tpu.memory_space<vmem>>, vector<6x25xbf16>
    %c0_30 = arith.constant 0 : index
    %c0_31 = arith.constant 0 : index
    %53 = vector.load %arg15[%c0_30, %c0_31] : memref<25x672xf32, #tpu.memory_space<vmem>>, vector<25x672xf32>
    %54 = arith.truncf %53 : vector<25x672xf32> to vector<25x672xbf16>
    %cst = arith.constant dense<0.000000e+00> : vector<6x672xf32>
    %55 = tpu.matmul %52, %54, %cst {dimension_numbers = #tpu.dot_dimension_numbers<[1], [0], [0], [1], [0, 0, 1, 1], [], []>} : vector<6x25xbf16>, vector<25x672xbf16>, vector<6x672xf32> -> vector<6x672xf32>
    %c0_32 = arith.constant 0 : index
    %c0_33 = arith.constant 0 : index
    %56 = vector.load %arg3[%c0_32, %c0_33] : memref<6x1xf32, #tpu.memory_space<vmem>>, vector<6x1xf32>
    %57 = vector.broadcast %56 : vector<6x1xf32> to vector<6x672xf32>
    %58 = arith.addf %55, %57 : vector<6x672xf32>
    %cst_34 = arith.constant 0.000000e+00 : f32
    %59 = vector.broadcast %cst_34 : f32 to vector<6x672xf32>
    %60 = arith.maximumf %58, %59 : vector<6x672xf32>
    %61 = vector.extract_strided_slice %60 {offsets = [0, 0], sizes = [6, 640], strides = [1, 1]} : vector<6x672xf32> to vector<6x640xf32>
    %62 = vector.extract_strided_slice %60 {offsets = [0, 1], sizes = [6, 640], strides = [1, 1]} : vector<6x672xf32> to vector<6x640xf32>
    %63 = arith.maximumf %61, %62 : vector<6x640xf32>
    %64 = vector.extract_strided_slice %60 {offsets = [0, 28], sizes = [6, 640], strides = [1, 1]} : vector<6x672xf32> to vector<6x640xf32>
    %65 = vector.extract_strided_slice %60 {offsets = [0, 29], sizes = [6, 640], strides = [1, 1]} : vector<6x672xf32> to vector<6x640xf32>
    %66 = arith.maximumf %64, %65 : vector<6x640xf32>
    %67 = arith.maximumf %63, %66 : vector<6x640xf32>
    %68 = arith.truncf %67 : vector<6x640xf32> to vector<6x640xbf16>
    %cst_35 = arith.constant 0.000000e+00 : f32
    %69 = vector.broadcast %cst_35 : f32 to vector<16x408xf32>
    %c0_36 = arith.constant 0 : index
    %c0_37 = arith.constant 0 : index
    %70 = vector.load %arg4[%c0_36, %c0_37] : memref<400x6xbf16, #tpu.memory_space<vmem>>, vector<16x6xbf16>
    %71 = vector.extract_strided_slice %68 {offsets = [0, 0], sizes = [6, 408], strides = [1, 1]} : vector<6x640xbf16> to vector<6x408xbf16>
    %cst_38 = arith.constant dense<0.000000e+00> : vector<16x408xf32>
    %72 = tpu.matmul %70, %71, %cst_38 {dimension_numbers = #tpu.dot_dimension_numbers<[1], [0], [0], [1], [0, 0, 1, 1], [], []>} : vector<16x6xbf16>, vector<6x408xbf16>, vector<16x408xf32> -> vector<16x408xf32>
    %73 = arith.addf %69, %72 : vector<16x408xf32>
    %c16_39 = arith.constant 16 : index
    %c0_40 = arith.constant 0 : index
    %74 = vector.load %arg4[%c16_39, %c0_40] : memref<400x6xbf16, #tpu.memory_space<vmem>>, vector<16x6xbf16>
    %75 = vector.extract_strided_slice %68 {offsets = [0, 2], sizes = [6, 408], strides = [1, 1]} : vector<6x640xbf16> to vector<6x408xbf16>
    %cst_41 = arith.constant dense<0.000000e+00> : vector<16x408xf32>
    %76 = tpu.matmul %74, %75, %cst_41 {dimension_numbers = #tpu.dot_dimension_numbers<[1], [0], [0], [1], [0, 0, 1, 1], [], []>} : vector<16x6xbf16>, vector<6x408xbf16>, vector<16x408xf32> -> vector<16x408xf32>
    %77 = arith.addf %73, %76 : vector<16x408xf32>
    %c32 = arith.constant 32 : index
    %c0_42 = arith.constant 0 : index
    %78 = vector.load %arg4[%c32, %c0_42] : memref<400x6xbf16, #tpu.memory_space<vmem>>, vector<16x6xbf16>
    %79 = vector.extract_strided_slice %68 {offsets = [0, 4], sizes = [6, 408], strides = [1, 1]} : vector<6x640xbf16> to vector<6x408xbf16>
    %cst_43 = arith.constant dense<0.000000e+00> : vector<16x408xf32>
    %80 = tpu.matmul %78, %79, %cst_43 {dimension_numbers = #tpu.dot_dimension_numbers<[1], [0], [0], [1], [0, 0, 1, 1], [], []>} : vector<16x6xbf16>, vector<6x408xbf16>, vector<16x408xf32> -> vector<16x408xf32>
    %81 = arith.addf %77, %80 : vector<16x408xf32>
    %c48 = arith.constant 48 : index
    %c0_44 = arith.constant 0 : index
    %82 = vector.load %arg4[%c48, %c0_44] : memref<400x6xbf16, #tpu.memory_space<vmem>>, vector<16x6xbf16>
    %83 = vector.extract_strided_slice %68 {offsets = [0, 6], sizes = [6, 408], strides = [1, 1]} : vector<6x640xbf16> to vector<6x408xbf16>
    %cst_45 = arith.constant dense<0.000000e+00> : vector<16x408xf32>
    %84 = tpu.matmul %82, %83, %cst_45 {dimension_numbers = #tpu.dot_dimension_numbers<[1], [0], [0], [1], [0, 0, 1, 1], [], []>} : vector<16x6xbf16>, vector<6x408xbf16>, vector<16x408xf32> -> vector<16x408xf32>
    %85 = arith.addf %81, %84 : vector<16x408xf32>
    %c64 = arith.constant 64 : index
    %c0_46 = arith.constant 0 : index
    %86 = vector.load %arg4[%c64, %c0_46] : memref<400x6xbf16, #tpu.memory_space<vmem>>, vector<16x6xbf16>
    %87 = vector.extract_strided_slice %68 {offsets = [0, 8], sizes = [6, 408], strides = [1, 1]} : vector<6x640xbf16> to vector<6x408xbf16>
    %cst_47 = arith.constant dense<0.000000e+00> : vector<16x408xf32>
    %88 = tpu.matmul %86, %87, %cst_47 {dimension_numbers = #tpu.dot_dimension_numbers<[1], [0], [0], [1], [0, 0, 1, 1], [], []>} : vector<16x6xbf16>, vector<6x408xbf16>, vector<16x408xf32> -> vector<16x408xf32>
    %89 = arith.addf %85, %88 : vector<16x408xf32>
    %c80 = arith.constant 80 : index
    %c0_48 = arith.constant 0 : index
    %90 = vector.load %arg4[%c80, %c0_48] : memref<400x6xbf16, #tpu.memory_space<vmem>>, vector<16x6xbf16>
    %91 = vector.extract_strided_slice %68 {offsets = [0, 56], sizes = [6, 408], strides = [1, 1]} : vector<6x640xbf16> to vector<6x408xbf16>
    %cst_49 = arith.constant dense<0.000000e+00> : vector<16x408xf32>
    %92 = tpu.matmul %90, %91, %cst_49 {dimension_numbers = #tpu.dot_dimension_numbers<[1], [0], [0], [1], [0, 0, 1, 1], [], []>} : vector<16x6xbf16>, vector<6x408xbf16>, vector<16x408xf32> -> vector<16x408xf32>
    %93 = arith.addf %89, %92 : vector<16x408xf32>
    %c96 = arith.constant 96 : index
    %c0_50 = arith.constant 0 : index
    %94 = vector.load %arg4[%c96, %c0_50] : memref<400x6xbf16, #tpu.memory_space<vmem>>, vector<16x6xbf16>
    %95 = vector.extract_strided_slice %68 {offsets = [0, 58], sizes = [6, 408], strides = [1, 1]} : vector<6x640xbf16> to vector<6x408xbf16>
    %cst_51 = arith.constant dense<0.000000e+00> : vector<16x408xf32>
    %96 = tpu.matmul %94, %95, %cst_51 {dimension_numbers = #tpu.dot_dimension_numbers<[1], [0], [0], [1], [0, 0, 1, 1], [], []>} : vector<16x6xbf16>, vector<6x408xbf16>, vector<16x408xf32> -> vector<16x408xf32>
    %97 = arith.addf %93, %96 : vector<16x408xf32>
    %c112 = arith.constant 112 : index
    %c0_52 = arith.constant 0 : index
    %98 = vector.load %arg4[%c112, %c0_52] : memref<400x6xbf16, #tpu.memory_space<vmem>>, vector<16x6xbf16>
    %99 = vector.extract_strided_slice %68 {offsets = [0, 60], sizes = [6, 408], strides = [1, 1]} : vector<6x640xbf16> to vector<6x408xbf16>
    %cst_53 = arith.constant dense<0.000000e+00> : vector<16x408xf32>
    %100 = tpu.matmul %98, %99, %cst_53 {dimension_numbers = #tpu.dot_dimension_numbers<[1], [0], [0], [1], [0, 0, 1, 1], [], []>} : vector<16x6xbf16>, vector<6x408xbf16>, vector<16x408xf32> -> vector<16x408xf32>
    %101 = arith.addf %97, %100 : vector<16x408xf32>
    %c128 = arith.constant 128 : index
    %c0_54 = arith.constant 0 : index
    %102 = vector.load %arg4[%c128, %c0_54] : memref<400x6xbf16, #tpu.memory_space<vmem>>, vector<16x6xbf16>
    %103 = vector.extract_strided_slice %68 {offsets = [0, 62], sizes = [6, 408], strides = [1, 1]} : vector<6x640xbf16> to vector<6x408xbf16>
    %cst_55 = arith.constant dense<0.000000e+00> : vector<16x408xf32>
    %104 = tpu.matmul %102, %103, %cst_55 {dimension_numbers = #tpu.dot_dimension_numbers<[1], [0], [0], [1], [0, 0, 1, 1], [], []>} : vector<16x6xbf16>, vector<6x408xbf16>, vector<16x408xf32> -> vector<16x408xf32>
    %105 = arith.addf %101, %104 : vector<16x408xf32>
    %c144 = arith.constant 144 : index
    %c0_56 = arith.constant 0 : index
    %106 = vector.load %arg4[%c144, %c0_56] : memref<400x6xbf16, #tpu.memory_space<vmem>>, vector<16x6xbf16>
    %107 = vector.extract_strided_slice %68 {offsets = [0, 64], sizes = [6, 408], strides = [1, 1]} : vector<6x640xbf16> to vector<6x408xbf16>
    %cst_57 = arith.constant dense<0.000000e+00> : vector<16x408xf32>
    %108 = tpu.matmul %106, %107, %cst_57 {dimension_numbers = #tpu.dot_dimension_numbers<[1], [0], [0], [1], [0, 0, 1, 1], [], []>} : vector<16x6xbf16>, vector<6x408xbf16>, vector<16x408xf32> -> vector<16x408xf32>
    %109 = arith.addf %105, %108 : vector<16x408xf32>
    %c160 = arith.constant 160 : index
    %c0_58 = arith.constant 0 : index
    %110 = vector.load %arg4[%c160, %c0_58] : memref<400x6xbf16, #tpu.memory_space<vmem>>, vector<16x6xbf16>
    %111 = vector.extract_strided_slice %68 {offsets = [0, 112], sizes = [6, 408], strides = [1, 1]} : vector<6x640xbf16> to vector<6x408xbf16>
    %cst_59 = arith.constant dense<0.000000e+00> : vector<16x408xf32>
    %112 = tpu.matmul %110, %111, %cst_59 {dimension_numbers = #tpu.dot_dimension_numbers<[1], [0], [0], [1], [0, 0, 1, 1], [], []>} : vector<16x6xbf16>, vector<6x408xbf16>, vector<16x408xf32> -> vector<16x408xf32>
    %113 = arith.addf %109, %112 : vector<16x408xf32>
    %c176 = arith.constant 176 : index
    %c0_60 = arith.constant 0 : index
    %114 = vector.load %arg4[%c176, %c0_60] : memref<400x6xbf16, #tpu.memory_space<vmem>>, vector<16x6xbf16>
    %115 = vector.extract_strided_slice %68 {offsets = [0, 114], sizes = [6, 408], strides = [1, 1]} : vector<6x640xbf16> to vector<6x408xbf16>
    %cst_61 = arith.constant dense<0.000000e+00> : vector<16x408xf32>
    %116 = tpu.matmul %114, %115, %cst_61 {dimension_numbers = #tpu.dot_dimension_numbers<[1], [0], [0], [1], [0, 0, 1, 1], [], []>} : vector<16x6xbf16>, vector<6x408xbf16>, vector<16x408xf32> -> vector<16x408xf32>
    %117 = arith.addf %113, %116 : vector<16x408xf32>
    %c192 = arith.constant 192 : index
    %c0_62 = arith.constant 0 : index
    %118 = vector.load %arg4[%c192, %c0_62] : memref<400x6xbf16, #tpu.memory_space<vmem>>, vector<16x6xbf16>
    %119 = vector.extract_strided_slice %68 {offsets = [0, 116], sizes = [6, 408], strides = [1, 1]} : vector<6x640xbf16> to vector<6x408xbf16>
    %cst_63 = arith.constant dense<0.000000e+00> : vector<16x408xf32>
    %120 = tpu.matmul %118, %119, %cst_63 {dimension_numbers = #tpu.dot_dimension_numbers<[1], [0], [0], [1], [0, 0, 1, 1], [], []>} : vector<16x6xbf16>, vector<6x408xbf16>, vector<16x408xf32> -> vector<16x408xf32>
    %121 = arith.addf %117, %120 : vector<16x408xf32>
    %c208 = arith.constant 208 : index
    %c0_64 = arith.constant 0 : index
    %122 = vector.load %arg4[%c208, %c0_64] : memref<400x6xbf16, #tpu.memory_space<vmem>>, vector<16x6xbf16>
    %123 = vector.extract_strided_slice %68 {offsets = [0, 118], sizes = [6, 408], strides = [1, 1]} : vector<6x640xbf16> to vector<6x408xbf16>
    %cst_65 = arith.constant dense<0.000000e+00> : vector<16x408xf32>
    %124 = tpu.matmul %122, %123, %cst_65 {dimension_numbers = #tpu.dot_dimension_numbers<[1], [0], [0], [1], [0, 0, 1, 1], [], []>} : vector<16x6xbf16>, vector<6x408xbf16>, vector<16x408xf32> -> vector<16x408xf32>
    %125 = arith.addf %121, %124 : vector<16x408xf32>
    %c224 = arith.constant 224 : index
    %c0_66 = arith.constant 0 : index
    %126 = vector.load %arg4[%c224, %c0_66] : memref<400x6xbf16, #tpu.memory_space<vmem>>, vector<16x6xbf16>
    %127 = vector.extract_strided_slice %68 {offsets = [0, 120], sizes = [6, 408], strides = [1, 1]} : vector<6x640xbf16> to vector<6x408xbf16>
    %cst_67 = arith.constant dense<0.000000e+00> : vector<16x408xf32>
    %128 = tpu.matmul %126, %127, %cst_67 {dimension_numbers = #tpu.dot_dimension_numbers<[1], [0], [0], [1], [0, 0, 1, 1], [], []>} : vector<16x6xbf16>, vector<6x408xbf16>, vector<16x408xf32> -> vector<16x408xf32>
    %129 = arith.addf %125, %128 : vector<16x408xf32>
    %c240 = arith.constant 240 : index
    %c0_68 = arith.constant 0 : index
    %130 = vector.load %arg4[%c240, %c0_68] : memref<400x6xbf16, #tpu.memory_space<vmem>>, vector<16x6xbf16>
    %131 = vector.extract_strided_slice %68 {offsets = [0, 168], sizes = [6, 408], strides = [1, 1]} : vector<6x640xbf16> to vector<6x408xbf16>
    %cst_69 = arith.constant dense<0.000000e+00> : vector<16x408xf32>
    %132 = tpu.matmul %130, %131, %cst_69 {dimension_numbers = #tpu.dot_dimension_numbers<[1], [0], [0], [1], [0, 0, 1, 1], [], []>} : vector<16x6xbf16>, vector<6x408xbf16>, vector<16x408xf32> -> vector<16x408xf32>
    %133 = arith.addf %129, %132 : vector<16x408xf32>
    %c256 = arith.constant 256 : index
    %c0_70 = arith.constant 0 : index
    %134 = vector.load %arg4[%c256, %c0_70] : memref<400x6xbf16, #tpu.memory_space<vmem>>, vector<16x6xbf16>
    %135 = vector.extract_strided_slice %68 {offsets = [0, 170], sizes = [6, 408], strides = [1, 1]} : vector<6x640xbf16> to vector<6x408xbf16>
    %cst_71 = arith.constant dense<0.000000e+00> : vector<16x408xf32>
    %136 = tpu.matmul %134, %135, %cst_71 {dimension_numbers = #tpu.dot_dimension_numbers<[1], [0], [0], [1], [0, 0, 1, 1], [], []>} : vector<16x6xbf16>, vector<6x408xbf16>, vector<16x408xf32> -> vector<16x408xf32>
    %137 = arith.addf %133, %136 : vector<16x408xf32>
    %c272 = arith.constant 272 : index
    %c0_72 = arith.constant 0 : index
    %138 = vector.load %arg4[%c272, %c0_72] : memref<400x6xbf16, #tpu.memory_space<vmem>>, vector<16x6xbf16>
    %139 = vector.extract_strided_slice %68 {offsets = [0, 172], sizes = [6, 408], strides = [1, 1]} : vector<6x640xbf16> to vector<6x408xbf16>
    %cst_73 = arith.constant dense<0.000000e+00> : vector<16x408xf32>
    %140 = tpu.matmul %138, %139, %cst_73 {dimension_numbers = #tpu.dot_dimension_numbers<[1], [0], [0], [1], [0, 0, 1, 1], [], []>} : vector<16x6xbf16>, vector<6x408xbf16>, vector<16x408xf32> -> vector<16x408xf32>
    %141 = arith.addf %137, %140 : vector<16x408xf32>
    %c288 = arith.constant 288 : index
    %c0_74 = arith.constant 0 : index
    %142 = vector.load %arg4[%c288, %c0_74] : memref<400x6xbf16, #tpu.memory_space<vmem>>, vector<16x6xbf16>
    %143 = vector.extract_strided_slice %68 {offsets = [0, 174], sizes = [6, 408], strides = [1, 1]} : vector<6x640xbf16> to vector<6x408xbf16>
    %cst_75 = arith.constant dense<0.000000e+00> : vector<16x408xf32>
    %144 = tpu.matmul %142, %143, %cst_75 {dimension_numbers = #tpu.dot_dimension_numbers<[1], [0], [0], [1], [0, 0, 1, 1], [], []>} : vector<16x6xbf16>, vector<6x408xbf16>, vector<16x408xf32> -> vector<16x408xf32>
    %145 = arith.addf %141, %144 : vector<16x408xf32>
    %c304 = arith.constant 304 : index
    %c0_76 = arith.constant 0 : index
    %146 = vector.load %arg4[%c304, %c0_76] : memref<400x6xbf16, #tpu.memory_space<vmem>>, vector<16x6xbf16>
    %147 = vector.extract_strided_slice %68 {offsets = [0, 176], sizes = [6, 408], strides = [1, 1]} : vector<6x640xbf16> to vector<6x408xbf16>
    %cst_77 = arith.constant dense<0.000000e+00> : vector<16x408xf32>
    %148 = tpu.matmul %146, %147, %cst_77 {dimension_numbers = #tpu.dot_dimension_numbers<[1], [0], [0], [1], [0, 0, 1, 1], [], []>} : vector<16x6xbf16>, vector<6x408xbf16>, vector<16x408xf32> -> vector<16x408xf32>
    %149 = arith.addf %145, %148 : vector<16x408xf32>
    %c320 = arith.constant 320 : index
    %c0_78 = arith.constant 0 : index
    %150 = vector.load %arg4[%c320, %c0_78] : memref<400x6xbf16, #tpu.memory_space<vmem>>, vector<16x6xbf16>
    %151 = vector.extract_strided_slice %68 {offsets = [0, 224], sizes = [6, 408], strides = [1, 1]} : vector<6x640xbf16> to vector<6x408xbf16>
    %cst_79 = arith.constant dense<0.000000e+00> : vector<16x408xf32>
    %152 = tpu.matmul %150, %151, %cst_79 {dimension_numbers = #tpu.dot_dimension_numbers<[1], [0], [0], [1], [0, 0, 1, 1], [], []>} : vector<16x6xbf16>, vector<6x408xbf16>, vector<16x408xf32> -> vector<16x408xf32>
    %153 = arith.addf %149, %152 : vector<16x408xf32>
    %c336 = arith.constant 336 : index
    %c0_80 = arith.constant 0 : index
    %154 = vector.load %arg4[%c336, %c0_80] : memref<400x6xbf16, #tpu.memory_space<vmem>>, vector<16x6xbf16>
    %155 = vector.extract_strided_slice %68 {offsets = [0, 226], sizes = [6, 408], strides = [1, 1]} : vector<6x640xbf16> to vector<6x408xbf16>
    %cst_81 = arith.constant dense<0.000000e+00> : vector<16x408xf32>
    %156 = tpu.matmul %154, %155, %cst_81 {dimension_numbers = #tpu.dot_dimension_numbers<[1], [0], [0], [1], [0, 0, 1, 1], [], []>} : vector<16x6xbf16>, vector<6x408xbf16>, vector<16x408xf32> -> vector<16x408xf32>
    %157 = arith.addf %153, %156 : vector<16x408xf32>
    %c352 = arith.constant 352 : index
    %c0_82 = arith.constant 0 : index
    %158 = vector.load %arg4[%c352, %c0_82] : memref<400x6xbf16, #tpu.memory_space<vmem>>, vector<16x6xbf16>
    %159 = vector.extract_strided_slice %68 {offsets = [0, 228], sizes = [6, 408], strides = [1, 1]} : vector<6x640xbf16> to vector<6x408xbf16>
    %cst_83 = arith.constant dense<0.000000e+00> : vector<16x408xf32>
    %160 = tpu.matmul %158, %159, %cst_83 {dimension_numbers = #tpu.dot_dimension_numbers<[1], [0], [0], [1], [0, 0, 1, 1], [], []>} : vector<16x6xbf16>, vector<6x408xbf16>, vector<16x408xf32> -> vector<16x408xf32>
    %161 = arith.addf %157, %160 : vector<16x408xf32>
    %c368 = arith.constant 368 : index
    %c0_84 = arith.constant 0 : index
    %162 = vector.load %arg4[%c368, %c0_84] : memref<400x6xbf16, #tpu.memory_space<vmem>>, vector<16x6xbf16>
    %163 = vector.extract_strided_slice %68 {offsets = [0, 230], sizes = [6, 408], strides = [1, 1]} : vector<6x640xbf16> to vector<6x408xbf16>
    %cst_85 = arith.constant dense<0.000000e+00> : vector<16x408xf32>
    %164 = tpu.matmul %162, %163, %cst_85 {dimension_numbers = #tpu.dot_dimension_numbers<[1], [0], [0], [1], [0, 0, 1, 1], [], []>} : vector<16x6xbf16>, vector<6x408xbf16>, vector<16x408xf32> -> vector<16x408xf32>
    %165 = arith.addf %161, %164 : vector<16x408xf32>
    %c384 = arith.constant 384 : index
    %c0_86 = arith.constant 0 : index
    %166 = vector.load %arg4[%c384, %c0_86] : memref<400x6xbf16, #tpu.memory_space<vmem>>, vector<16x6xbf16>
    %167 = vector.extract_strided_slice %68 {offsets = [0, 232], sizes = [6, 408], strides = [1, 1]} : vector<6x640xbf16> to vector<6x408xbf16>
    %cst_87 = arith.constant dense<0.000000e+00> : vector<16x408xf32>
    %168 = tpu.matmul %166, %167, %cst_87 {dimension_numbers = #tpu.dot_dimension_numbers<[1], [0], [0], [1], [0, 0, 1, 1], [], []>} : vector<16x6xbf16>, vector<6x408xbf16>, vector<16x408xf32> -> vector<16x408xf32>
    %169 = arith.addf %165, %168 : vector<16x408xf32>
    %170 = arith.truncf %169 : vector<16x408xf32> to vector<16x408xbf16>
    %c0_88 = arith.constant 0 : index
    %c0_89 = arith.constant 0 : index
    %171 = vector.load %arg6[%c0_88, %c0_89] : memref<408x64xbf16, #tpu.memory_space<vmem>>, vector<408x64xbf16>
    %cst_90 = arith.constant dense<0.000000e+00> : vector<16x64xf32>
    %172 = tpu.matmul %170, %171, %cst_90 {dimension_numbers = #tpu.dot_dimension_numbers<[1], [0], [0], [1], [0, 0, 1, 1], [], []>} : vector<16x408xbf16>, vector<408x64xbf16>, vector<16x64xf32> -> vector<16x64xf32>
    %c0_91 = arith.constant 0 : index
    %c0_92 = arith.constant 0 : index
    %173 = vector.load %arg5[%c0_91, %c0_92] : memref<16x1xf32, #tpu.memory_space<vmem>>, vector<16x1xf32>
    %174 = vector.broadcast %173 : vector<16x1xf32> to vector<16x64xf32>
    %175 = arith.addf %172, %174 : vector<16x64xf32>
    %cst_93 = arith.constant 0.000000e+00 : f32
    %176 = vector.broadcast %cst_93 : f32 to vector<16x64xf32>
    %177 = arith.maximumf %175, %176 : vector<16x64xf32>
    %178 = vector.extract_strided_slice %177 {offsets = [0, 0], sizes = [16, 55], strides = [1, 1]} : vector<16x64xf32> to vector<16x55xf32>
    %179 = vector.extract_strided_slice %177 {offsets = [0, 1], sizes = [16, 55], strides = [1, 1]} : vector<16x64xf32> to vector<16x55xf32>
    %180 = arith.maximumf %178, %179 : vector<16x55xf32>
    %181 = vector.extract_strided_slice %177 {offsets = [0, 8], sizes = [16, 55], strides = [1, 1]} : vector<16x64xf32> to vector<16x55xf32>
    %182 = vector.extract_strided_slice %177 {offsets = [0, 9], sizes = [16, 55], strides = [1, 1]} : vector<16x64xf32> to vector<16x55xf32>
    %183 = arith.maximumf %181, %182 : vector<16x55xf32>
    %184 = arith.maximumf %180, %183 : vector<16x55xf32>
    %185 = arith.truncf %184 : vector<16x55xf32> to vector<16x55xbf16>
    %c0_94 = arith.constant 0 : index
    %c0_95 = arith.constant 0 : index
    %186 = vector.load %arg7[%c0_94, %c0_95] : memref<55x16xbf16, #tpu.memory_space<vmem>>, vector<55x16xbf16>
    %cst_96 = arith.constant dense<0.000000e+00> : vector<16x16xf32>
    %187 = tpu.matmul %185, %186, %cst_96 {dimension_numbers = #tpu.dot_dimension_numbers<[1], [0], [0], [1], [0, 0, 1, 1], [], []>} : vector<16x55xbf16>, vector<55x16xbf16>, vector<16x16xf32> -> vector<16x16xf32>
    %188 = vector.extract_strided_slice %187 {offsets = [0, 0], sizes = [1, 16], strides = [1, 1]} : vector<16x16xf32> to vector<1x16xf32>
    %c0_97 = arith.constant 0 : index
    %c0_98 = arith.constant 0 : index
    %189 = vector.load %arg16[%c0_97, %c0_98] : memref<1x256xf32, #tpu.memory_space<vmem>>, vector<1x16xf32>
    tpu.vector_store %arg16[%c0_97, %c0_98], %188 {strides = array<i32>} : memref<1x256xf32, #tpu.memory_space<vmem>>, vector<1x16xf32>,
    %190 = vector.extract_strided_slice %187 {offsets = [1, 0], sizes = [1, 16], strides = [1, 1]} : vector<16x16xf32> to vector<1x16xf32>
    %c0_99 = arith.constant 0 : index
    %c16_100 = arith.constant 16 : index
    %191 = vector.load %arg16[%c0_99, %c16_100] : memref<1x256xf32, #tpu.memory_space<vmem>>, vector<1x16xf32>
    tpu.vector_store %arg16[%c0_99, %c16_100], %190 {strides = array<i32>} : memref<1x256xf32, #tpu.memory_space<vmem>>, vector<1x16xf32>,
    %192 = vector.extract_strided_slice %187 {offsets = [2, 0], sizes = [1, 16], strides = [1, 1]} : vector<16x16xf32> to vector<1x16xf32>
    %c0_101 = arith.constant 0 : index
    %c32_102 = arith.constant 32 : index
    %193 = vector.load %arg16[%c0_101, %c32_102] : memref<1x256xf32, #tpu.memory_space<vmem>>, vector<1x16xf32>
    tpu.vector_store %arg16[%c0_101, %c32_102], %192 {strides = array<i32>} : memref<1x256xf32, #tpu.memory_space<vmem>>, vector<1x16xf32>,
    %194 = vector.extract_strided_slice %187 {offsets = [3, 0], sizes = [1, 16], strides = [1, 1]} : vector<16x16xf32> to vector<1x16xf32>
    %c0_103 = arith.constant 0 : index
    %c48_104 = arith.constant 48 : index
    %195 = vector.load %arg16[%c0_103, %c48_104] : memref<1x256xf32, #tpu.memory_space<vmem>>, vector<1x16xf32>
    tpu.vector_store %arg16[%c0_103, %c48_104], %194 {strides = array<i32>} : memref<1x256xf32, #tpu.memory_space<vmem>>, vector<1x16xf32>,
    %196 = vector.extract_strided_slice %187 {offsets = [4, 0], sizes = [1, 16], strides = [1, 1]} : vector<16x16xf32> to vector<1x16xf32>
    %c0_105 = arith.constant 0 : index
    %c64_106 = arith.constant 64 : index
    %197 = vector.load %arg16[%c0_105, %c64_106] : memref<1x256xf32, #tpu.memory_space<vmem>>, vector<1x16xf32>
    tpu.vector_store %arg16[%c0_105, %c64_106], %196 {strides = array<i32>} : memref<1x256xf32, #tpu.memory_space<vmem>>, vector<1x16xf32>,
    %198 = vector.extract_strided_slice %187 {offsets = [5, 0], sizes = [1, 16], strides = [1, 1]} : vector<16x16xf32> to vector<1x16xf32>
    %c0_107 = arith.constant 0 : index
    %c80_108 = arith.constant 80 : index
    %199 = vector.load %arg16[%c0_107, %c80_108] : memref<1x256xf32, #tpu.memory_space<vmem>>, vector<1x16xf32>
    tpu.vector_store %arg16[%c0_107, %c80_108], %198 {strides = array<i32>} : memref<1x256xf32, #tpu.memory_space<vmem>>, vector<1x16xf32>,
    %200 = vector.extract_strided_slice %187 {offsets = [6, 0], sizes = [1, 16], strides = [1, 1]} : vector<16x16xf32> to vector<1x16xf32>
    %c0_109 = arith.constant 0 : index
    %c96_110 = arith.constant 96 : index
    %201 = vector.load %arg16[%c0_109, %c96_110] : memref<1x256xf32, #tpu.memory_space<vmem>>, vector<1x16xf32>
    tpu.vector_store %arg16[%c0_109, %c96_110], %200 {strides = array<i32>} : memref<1x256xf32, #tpu.memory_space<vmem>>, vector<1x16xf32>,
    %202 = vector.extract_strided_slice %187 {offsets = [7, 0], sizes = [1, 16], strides = [1, 1]} : vector<16x16xf32> to vector<1x16xf32>
    %c0_111 = arith.constant 0 : index
    %c112_112 = arith.constant 112 : index
    %203 = vector.load %arg16[%c0_111, %c112_112] : memref<1x256xf32, #tpu.memory_space<vmem>>, vector<1x16xf32>
    tpu.vector_store %arg16[%c0_111, %c112_112], %202 {strides = array<i32>} : memref<1x256xf32, #tpu.memory_space<vmem>>, vector<1x16xf32>,
    %204 = vector.extract_strided_slice %187 {offsets = [8, 0], sizes = [1, 16], strides = [1, 1]} : vector<16x16xf32> to vector<1x16xf32>
    %c0_113 = arith.constant 0 : index
    %c128_114 = arith.constant 128 : index
    %205 = vector.load %arg16[%c0_113, %c128_114] : memref<1x256xf32, #tpu.memory_space<vmem>>, vector<1x16xf32>
    tpu.vector_store %arg16[%c0_113, %c128_114], %204 {strides = array<i32>} : memref<1x256xf32, #tpu.memory_space<vmem>>, vector<1x16xf32>,
    %206 = vector.extract_strided_slice %187 {offsets = [9, 0], sizes = [1, 16], strides = [1, 1]} : vector<16x16xf32> to vector<1x16xf32>
    %c0_115 = arith.constant 0 : index
    %c144_116 = arith.constant 144 : index
    %207 = vector.load %arg16[%c0_115, %c144_116] : memref<1x256xf32, #tpu.memory_space<vmem>>, vector<1x16xf32>
    tpu.vector_store %arg16[%c0_115, %c144_116], %206 {strides = array<i32>} : memref<1x256xf32, #tpu.memory_space<vmem>>, vector<1x16xf32>,
    %208 = vector.extract_strided_slice %187 {offsets = [10, 0], sizes = [1, 16], strides = [1, 1]} : vector<16x16xf32> to vector<1x16xf32>
    %c0_117 = arith.constant 0 : index
    %c160_118 = arith.constant 160 : index
    %209 = vector.load %arg16[%c0_117, %c160_118] : memref<1x256xf32, #tpu.memory_space<vmem>>, vector<1x16xf32>
    tpu.vector_store %arg16[%c0_117, %c160_118], %208 {strides = array<i32>} : memref<1x256xf32, #tpu.memory_space<vmem>>, vector<1x16xf32>,
    %210 = vector.extract_strided_slice %187 {offsets = [11, 0], sizes = [1, 16], strides = [1, 1]} : vector<16x16xf32> to vector<1x16xf32>
    %c0_119 = arith.constant 0 : index
    %c176_120 = arith.constant 176 : index
    %211 = vector.load %arg16[%c0_119, %c176_120] : memref<1x256xf32, #tpu.memory_space<vmem>>, vector<1x16xf32>
    tpu.vector_store %arg16[%c0_119, %c176_120], %210 {strides = array<i32>} : memref<1x256xf32, #tpu.memory_space<vmem>>, vector<1x16xf32>,
    %212 = vector.extract_strided_slice %187 {offsets = [12, 0], sizes = [1, 16], strides = [1, 1]} : vector<16x16xf32> to vector<1x16xf32>
    %c0_121 = arith.constant 0 : index
    %c192_122 = arith.constant 192 : index
    %213 = vector.load %arg16[%c0_121, %c192_122] : memref<1x256xf32, #tpu.memory_space<vmem>>, vector<1x16xf32>
    tpu.vector_store %arg16[%c0_121, %c192_122], %212 {strides = array<i32>} : memref<1x256xf32, #tpu.memory_space<vmem>>, vector<1x16xf32>,
    %214 = vector.extract_strided_slice %187 {offsets = [13, 0], sizes = [1, 16], strides = [1, 1]} : vector<16x16xf32> to vector<1x16xf32>
    %c0_123 = arith.constant 0 : index
    %c208_124 = arith.constant 208 : index
    %215 = vector.load %arg16[%c0_123, %c208_124] : memref<1x256xf32, #tpu.memory_space<vmem>>, vector<1x16xf32>
    tpu.vector_store %arg16[%c0_123, %c208_124], %214 {strides = array<i32>} : memref<1x256xf32, #tpu.memory_space<vmem>>, vector<1x16xf32>,
    %216 = vector.extract_strided_slice %187 {offsets = [14, 0], sizes = [1, 16], strides = [1, 1]} : vector<16x16xf32> to vector<1x16xf32>
    %c0_125 = arith.constant 0 : index
    %c224_126 = arith.constant 224 : index
    %217 = vector.load %arg16[%c0_125, %c224_126] : memref<1x256xf32, #tpu.memory_space<vmem>>, vector<1x16xf32>
    tpu.vector_store %arg16[%c0_125, %c224_126], %216 {strides = array<i32>} : memref<1x256xf32, #tpu.memory_space<vmem>>, vector<1x16xf32>,
    %218 = vector.extract_strided_slice %187 {offsets = [15, 0], sizes = [1, 16], strides = [1, 1]} : vector<16x16xf32> to vector<1x16xf32>
    %c0_127 = arith.constant 0 : index
    %c240_128 = arith.constant 240 : index
    %219 = vector.load %arg16[%c0_127, %c240_128] : memref<1x256xf32, #tpu.memory_space<vmem>>, vector<1x16xf32>
    tpu.vector_store %arg16[%c0_127, %c240_128], %218 {strides = array<i32>} : memref<1x256xf32, #tpu.memory_space<vmem>>, vector<1x16xf32>,
    %c0_129 = arith.constant 0 : index
    %c0_130 = arith.constant 0 : index
    %220 = vector.load %arg16[%c0_129, %c0_130] : memref<1x256xf32, #tpu.memory_space<vmem>>, vector<1x256xf32>
    %221 = arith.truncf %220 : vector<1x256xf32> to vector<1x256xbf16>
    %c0_131 = arith.constant 0 : index
    %c0_132 = arith.constant 0 : index
    %222 = vector.load %arg8[%c0_131, %c0_132] : memref<256x120xbf16, #tpu.memory_space<vmem>>, vector<256x120xbf16>
    %cst_133 = arith.constant dense<0.000000e+00> : vector<1x120xf32>
    %223 = tpu.matmul %221, %222, %cst_133 {dimension_numbers = #tpu.dot_dimension_numbers<[1], [0], [0], [1], [0, 0, 1, 1], [], []>} : vector<1x256xbf16>, vector<256x120xbf16>, vector<1x120xf32> -> vector<1x120xf32>
    %c0_134 = arith.constant 0 : index
    %c0_135 = arith.constant 0 : index
    %224 = vector.load %arg9[%c0_134, %c0_135] : memref<1x120xf32, #tpu.memory_space<vmem>>, vector<1x120xf32>
    %225 = arith.addf %223, %224 : vector<1x120xf32>
    %cst_136 = arith.constant 0.000000e+00 : f32
    %226 = vector.broadcast %cst_136 : f32 to vector<1x120xf32>
    %227 = arith.maximumf %225, %226 : vector<1x120xf32>
    %228 = arith.truncf %227 : vector<1x120xf32> to vector<1x120xbf16>
    %c0_137 = arith.constant 0 : index
    %c0_138 = arith.constant 0 : index
    %229 = vector.load %arg10[%c0_137, %c0_138] : memref<120x84xbf16, #tpu.memory_space<vmem>>, vector<120x84xbf16>
    %cst_139 = arith.constant dense<0.000000e+00> : vector<1x84xf32>
    %230 = tpu.matmul %228, %229, %cst_139 {dimension_numbers = #tpu.dot_dimension_numbers<[1], [0], [0], [1], [0, 0, 1, 1], [], []>} : vector<1x120xbf16>, vector<120x84xbf16>, vector<1x84xf32> -> vector<1x84xf32>
    %c0_140 = arith.constant 0 : index
    %c0_141 = arith.constant 0 : index
    %231 = vector.load %arg11[%c0_140, %c0_141] : memref<1x84xf32, #tpu.memory_space<vmem>>, vector<1x84xf32>
    %232 = arith.addf %230, %231 : vector<1x84xf32>
    %cst_142 = arith.constant 0.000000e+00 : f32
    %233 = vector.broadcast %cst_142 : f32 to vector<1x84xf32>
    %234 = arith.maximumf %232, %233 : vector<1x84xf32>
    %235 = arith.truncf %234 : vector<1x84xf32> to vector<1x84xbf16>
    %c0_143 = arith.constant 0 : index
    %c0_144 = arith.constant 0 : index
    %236 = vector.load %arg12[%c0_143, %c0_144] : memref<84x10xbf16, #tpu.memory_space<vmem>>, vector<84x10xbf16>
    %cst_145 = arith.constant dense<0.000000e+00> : vector<1x10xf32>
    %237 = tpu.matmul %235, %236, %cst_145 {dimension_numbers = #tpu.dot_dimension_numbers<[1], [0], [0], [1], [0, 0, 1, 1], [], []>} : vector<1x84xbf16>, vector<84x10xbf16>, vector<1x10xf32> -> vector<1x10xf32>
    %c0_146 = arith.constant 0 : index
    %c0_147 = arith.constant 0 : index
    %238 = vector.load %arg13[%c0_146, %c0_147] : memref<1x10xf32, #tpu.memory_space<vmem>>, vector<1x10xf32>
    %239 = arith.addf %237, %238 : vector<1x10xf32>
    %c0_148 = arith.constant 0 : index
    %c0_149 = arith.constant 0 : index
    %c0_150 = arith.constant 0 : index
    %240 = vector.load %arg14[%c0_148, %c0_149, %c0_150] : memref<1x1x10xf32, #tpu.memory_space<vmem>>, vector<1x1x10xf32>
    %241 = vector.shape_cast %240 : vector<1x1x10xf32> to vector<1x10xf32>
    %242 = vector.shape_cast %239 : vector<1x10xf32> to vector<1x1x10xf32>
    tpu.vector_store %arg14[%c0_148, %c0_149, %c0_150], %242 {strides = array<i32>} : memref<1x1x10xf32, #tpu.memory_space<vmem>>, vector<1x1x10xf32>,
    return
  }
  func.func @transform_0(%arg0: i32) -> (i32, i32, i32) {
    %c0_i32 = arith.constant 0 : i32
    %c0_i32_0 = arith.constant 0 : i32
    %c0_i32_1 = arith.constant 0 : i32
    return %arg0, %c0_i32, %c0_i32_0 : i32, i32, i32
  }
  func.func @transform_1(%arg0: i32) -> (i32, i32) {
    %c0_i32 = arith.constant 0 : i32
    %c0_i32_0 = arith.constant 0 : i32
    %c0_i32_1 = arith.constant 0 : i32
    return %c0_i32, %c0_i32_0 : i32, i32
  }
  func.func @transform_2(%arg0: i32) -> (i32, i32) {
    %c0_i32 = arith.constant 0 : i32
    %c0_i32_0 = arith.constant 0 : i32
    %c0_i32_1 = arith.constant 0 : i32
    return %c0_i32, %c0_i32_0 : i32, i32
  }
  func.func @transform_3(%arg0: i32) -> (i32, i32) {
    %c0_i32 = arith.constant 0 : i32
    %c0_i32_0 = arith.constant 0 : i32
    %c0_i32_1 = arith.constant 0 : i32
    return %c0_i32, %c0_i32_0 : i32, i32
  }
  func.func @transform_4(%arg0: i32) -> (i32, i32) {
    %c0_i32 = arith.constant 0 : i32
    %c0_i32_0 = arith.constant 0 : i32
    %c0_i32_1 = arith.constant 0 : i32
    return %c0_i32, %c0_i32_0 : i32, i32
  }
  func.func @transform_5(%arg0: i32) -> (i32, i32) {
    %c0_i32 = arith.constant 0 : i32
    %c0_i32_0 = arith.constant 0 : i32
    %c0_i32_1 = arith.constant 0 : i32
    return %c0_i32, %c0_i32_0 : i32, i32
  }
  func.func @transform_6(%arg0: i32) -> (i32, i32) {
    %c0_i32 = arith.constant 0 : i32
    %c0_i32_0 = arith.constant 0 : i32
    %c0_i32_1 = arith.constant 0 : i32
    return %c0_i32, %c0_i32_0 : i32, i32
  }
  func.func @transform_7(%arg0: i32) -> (i32, i32) {
    %c0_i32 = arith.constant 0 : i32
    %c0_i32_0 = arith.constant 0 : i32
    %c0_i32_1 = arith.constant 0 : i32
    return %c0_i32, %c0_i32_0 : i32, i32
  }
  func.func @transform_8(%arg0: i32) -> (i32, i32) {
    %c0_i32 = arith.constant 0 : i32
    %c0_i32_0 = arith.constant 0 : i32
    %c0_i32_1 = arith.constant 0 : i32
    return %c0_i32, %c0_i32_0 : i32, i32
  }
  func.func @transform_9(%arg0: i32) -> (i32, i32) {
    %c0_i32 = arith.constant 0 : i32
    %c0_i32_0 = arith.constant 0 : i32
    %c0_i32_1 = arith.constant 0 : i32
    return %c0_i32, %c0_i32_0 : i32, i32
  }
  func.func @transform_10(%arg0: i32) -> (i32, i32) {
    %c0_i32 = arith.constant 0 : i32
    %c0_i32_0 = arith.constant 0 : i32
    %c0_i32_1 = arith.constant 0 : i32
    return %c0_i32, %c0_i32_0 : i32, i32
  }
  func.func @transform_11(%arg0: i32) -> (i32, i32) {
    %c0_i32 = arith.constant 0 : i32
    %c0_i32_0 = arith.constant 0 : i32
    %c0_i32_1 = arith.constant 0 : i32
    return %c0_i32, %c0_i32_0 : i32, i32
  }
  func.func @transform_12(%arg0: i32) -> (i32, i32) {
    %c0_i32 = arith.constant 0 : i32
    %c0_i32_0 = arith.constant 0 : i32
    %c0_i32_1 = arith.constant 0 : i32
    return %c0_i32, %c0_i32_0 : i32, i32
  }
  func.func @transform_13(%arg0: i32) -> (i32, i32, i32) {
    %c0_i32 = arith.constant 0 : i32
    %c0_i32_0 = arith.constant 0 : i32
    %c0_i32_1 = arith.constant 0 : i32
    return %arg0, %c0_i32, %c0_i32_0 : i32, i32, i32
  }
}

</mosaic_0001>

<llo_original>
// kernel: convnet_forward.1
$region0: #{convnet_forward.1}
  #allocation0 [shape = 'u32[]', space=smem, size = 0x4, offset = 0x4, fixed_abs, tag = 'smem constant byte address 0x4 - core index']
  #allocation1 [shape = 'u32[144,128]{1,0:T(1,128)}', space=vmem, size = 0x12000, scoped, tag = 'internal scratch']
  #allocation2 [shape = 'f32[25,672]{1,0:T(8,128)}', space=vmem, size = 0x18000, scoped, tag = 'scratch operand']
  #allocation3 [shape = 'f32[1,256]{1,0:T(1,128)}', space=vmem, size = 0x400, scoped, tag = 'scratch operand']
  %s0 = inlined_call_operand.vmem [shape: f32[2,1,800], index: 0, kind: input, shape index: {}]
  %s1 = inlined_call_operand.vmem [shape: bf16[6,25], index: 1, kind: input, shape index: {}]
  %s2 = inlined_call_operand.vmem [shape: f32[6,1], index: 2, kind: input, shape index: {}]
  %s3 = inlined_call_operand.vmem [shape: bf16[400,6], index: 3, kind: input, shape index: {}]
  %s4 = inlined_call_operand.vmem [shape: f32[16,1], index: 4, kind: input, shape index: {}]
  %s5 = inlined_call_operand.vmem [shape: bf16[408,64], index: 5, kind: input, shape index: {}]
  %s6 = inlined_call_operand.vmem [shape: bf16[55,16], index: 6, kind: input, shape index: {}]
  %s7 = inlined_call_operand.vmem [shape: bf16[256,120], index: 7, kind: input, shape index: {}]
  %s8 = inlined_call_operand.vmem [shape: f32[1,120], index: 8, kind: input, shape index: {}]
  %s9 = inlined_call_operand.vmem [shape: bf16[120,84], index: 9, kind: input, shape index: {}]
  %s10 = inlined_call_operand.vmem [shape: f32[1,84], index: 10, kind: input, shape index: {}]
  %s11 = inlined_call_operand.vmem [shape: bf16[84,10], index: 11, kind: input, shape index: {}]
  %s12 = inlined_call_operand.vmem [shape: f32[1,10], index: 12, kind: input, shape index: {}]
  %s13 = inlined_call_operand.hbm [shape: f32[2,1,10], index: 13, kind: output, shape index: {}]
  %s14 = sld [smem:[#allocation0]]
  $region85: #{convnet_forward.1} parent=0
    _
  %s16 = ssub.s32 1, %s14
  %s17 = scalar_select 0, %s16, %s14
  $region1: #{convnet_forward.1} parent=0
    #allocation4 [shape = 'u8[1024]{0}', space=vmem, size = 0x400, scoped, tag = 'output window, operand 0']
    #allocation5 [shape = 's32[2]{0}', space=sflag, size = 0x8, scoped, tag = 'scoped memory for convnet_forward.1']
    %18 = vsyncpa [#allocation5], 0
    %s19 = scalar_lea.sflag [#allocation5], 1
    %20 = vsyncpa %s19, 0
    loop: start=0, step=1, limit=4
    $region2: #{convnet_forward.1} parent=1 // loop_pre_header
      _
    $region3: #{convnet_forward.1} parent=1 // loop_header
      %s22 = sphi 0, %s26
      %p23 = scmp.ge.s32.totalorder %s22, 4
      %s32 = sphi 0, %s34
      %s35 = sphi 0, %s32
      %s36 = sphi 0, %s35
      %s52 = sphi 0, %s36
      %s56 = sphi 0, %s56
      %s58 = sphi 0, %s56
      %s59 = sphi 0, %s58
      %s73 = sphi 0, %s59
      %s77 = sphi 0, %s77
      %s79 = sphi 0, %s77
      %s80 = sphi 0, %s79
      %s94 = sphi 0, %s80
      %s98 = sphi 0, %s98
      %s100 = sphi 0, %s98
      %s101 = sphi 0, %s100
      %s115 = sphi 0, %s101
      %s119 = sphi 0, %s119
      %s121 = sphi 0, %s119
      %s122 = sphi 0, %s121
      %s136 = sphi 0, %s122
      %s140 = sphi 0, %s140
      %s142 = sphi 0, %s140
      %s143 = sphi 0, %s142
      %s157 = sphi 0, %s143
      %s161 = sphi 0, %s161
      %s163 = sphi 0, %s161
      %s164 = sphi 0, %s163
      %s178 = sphi 0, %s164
      %s182 = sphi 0, %s182
      %s184 = sphi 0, %s182
      %s185 = sphi 0, %s184
      %s199 = sphi 0, %s185
      %s203 = sphi 0, %s203
      %s205 = sphi 0, %s203
      %s206 = sphi 0, %s205
      %s220 = sphi 0, %s206
      %s224 = sphi 0, %s224
      %s226 = sphi 0, %s224
      %s227 = sphi 0, %s226
      %s241 = sphi 0, %s227
      %s245 = sphi 0, %s245
      %s247 = sphi 0, %s245
      %s248 = sphi 0, %s247
      %s262 = sphi 0, %s248
      %s266 = sphi 0, %s266
      %s268 = sphi 0, %s266
      %s269 = sphi 0, %s268
      %s283 = sphi 0, %s269
      %s287 = sphi 0, %s287
      %s289 = sphi 0, %s287
      %s290 = sphi 0, %s289
      %s304 = sphi 0, %s290
      %s310 = sphi 0, %s312
      %s313 = sphi 0, %s310
      %s314 = sphi 0, %s313
      %s330 = sphi 0, %s314
    $region4: #{convnet_forward.1} parent=1 // loop_header_branch
      %25 = sbr.rel (%p23) target = $region8
    $region5: #{convnet_forward.1} parent=1 // loop_body
      %s27 = ssub.s32 %s22, 1
      %s28 = ssub.s32 %s22, 2
      %s29 = sadd.s32 %s22, 1
      %s30 = ssub.s32 %s22, %s29
      %p31 = scmp.eq.s32.totalorder %s30, 0
      %s33 = sadd.s32 %s32, 1
      %s34 = scalar_select %p31, %s32, %s33
      %p37 = pneg %p31
      %p38 = scmp.eq.s32.totalorder %s22, 1
      %p39 = por %p37, %p38
      %p40 = scmp.ne.s32.totalorder %s32, %s35
      %p41 = scmp.eq.s32.totalorder %s22, 0
      %p42 = por %p40, %p41
      %p43 = scmp.ne.s32.totalorder %s32, %s35
      %p44 = scmp.eq.s32.totalorder %s27, 1
      %p45 = por %p43, %p44
      %p46 = scmp.ne.s32.totalorder %s35, %s36
      %p47 = scmp.eq.s32.totalorder %s27, 0
      %p48 = por %p46, %p47
      %p49 = scmp.ne.s32.totalorder %s35, %s36
      %p50 = scmp.eq.s32.totalorder %s28, 1
      %p51 = por %p49, %p50
      %p53 = scmp.ne.s32.totalorder %s36, %s52
      %p54 = scmp.eq.s32.totalorder %s28, 0
      %p55 = por %p53, %p54
      %s57 = sadd.s32 %s56, 1
      %p60 = scmp.eq.s32.totalorder %s22, 1
      %p61 = scmp.ne.s32.totalorder %s56, %s58
      %p62 = scmp.eq.s32.totalorder %s22, 0
      %p63 = por %p61, %p62
      %p64 = scmp.ne.s32.totalorder %s56, %s58
      %p65 = scmp.eq.s32.totalorder %s27, 1
      %p66 = por %p64, %p65
      %p67 = scmp.ne.s32.totalorder %s58, %s59
      %p68 = scmp.eq.s32.totalorder %s27, 0
      %p69 = por %p67, %p68
      %p70 = scmp.ne.s32.totalorder %s58, %s59
      %p71 = scmp.eq.s32.totalorder %s28, 1
      %p72 = por %p70, %p71
      %p74 = scmp.ne.s32.totalorder %s59, %s73
      %p75 = scmp.eq.s32.totalorder %s28, 0
      %p76 = por %p74, %p75
      %s78 = sadd.s32 %s77, 1
      %p81 = scmp.eq.s32.totalorder %s22, 1
      %p82 = scmp.ne.s32.totalorder %s77, %s79
      %p83 = scmp.eq.s32.totalorder %s22, 0
      %p84 = por %p82, %p83
      %p85 = scmp.ne.s32.totalorder %s77, %s79
      %p86 = scmp.eq.s32.totalorder %s27, 1
      %p87 = por %p85, %p86
      %p88 = scmp.ne.s32.totalorder %s79, %s80
      %p89 = scmp.eq.s32.totalorder %s27, 0
      %p90 = por %p88, %p89
      %p91 = scmp.ne.s32.totalorder %s79, %s80
      %p92 = scmp.eq.s32.totalorder %s28, 1
      %p93 = por %p91, %p92
      %p95 = scmp.ne.s32.totalorder %s80, %s94
      %p96 = scmp.eq.s32.totalorder %s28, 0
      %p97 = por %p95, %p96
      %s99 = sadd.s32 %s98, 1
      %p102 = scmp.eq.s32.totalorder %s22, 1
      %p103 = scmp.ne.s32.totalorder %s98, %s100
      %p104 = scmp.eq.s32.totalorder %s22, 0
      %p105 = por %p103, %p104
      %p106 = scmp.ne.s32.totalorder %s98, %s100
      %p107 = scmp.eq.s32.totalorder %s27, 1
      %p108 = por %p106, %p107
      %p109 = scmp.ne.s32.totalorder %s100, %s101
      %p110 = scmp.eq.s32.totalorder %s27, 0
      %p111 = por %p109, %p110
      %p112 = scmp.ne.s32.totalorder %s100, %s101
      %p113 = scmp.eq.s32.totalorder %s28, 1
      %p114 = por %p112, %p113
      %p116 = scmp.ne.s32.totalorder %s101, %s115
      %p117 = scmp.eq.s32.totalorder %s28, 0
      %p118 = por %p116, %p117
      %s120 = sadd.s32 %s119, 1
      %p123 = scmp.eq.s32.totalorder %s22, 1
      %p124 = scmp.ne.s32.totalorder %s119, %s121
      %p125 = scmp.eq.s32.totalorder %s22, 0
      %p126 = por %p124, %p125
      %p127 = scmp.ne.s32.totalorder %s119, %s121
      %p128 = scmp.eq.s32.totalorder %s27, 1
      %p129 = por %p127, %p128
      %p130 = scmp.ne.s32.totalorder %s121, %s122
      %p131 = scmp.eq.s32.totalorder %s27, 0
      %p132 = por %p130, %p131
      %p133 = scmp.ne.s32.totalorder %s121, %s122
      %p134 = scmp.eq.s32.totalorder %s28, 1
      %p135 = por %p133, %p134
      %p137 = scmp.ne.s32.totalorder %s122, %s136
      %p138 = scmp.eq.s32.totalorder %s28, 0
      %p139 = por %p137, %p138
      %s141 = sadd.s32 %s140, 1
      %p144 = scmp.eq.s32.totalorder %s22, 1
      %p145 = scmp.ne.s32.totalorder %s140, %s142
      %p146 = scmp.eq.s32.totalorder %s22, 0
      %p147 = por %p145, %p146
      %p148 = scmp.ne.s32.totalorder %s140, %s142
      %p149 = scmp.eq.s32.totalorder %s27, 1
      %p150 = por %p148, %p149
      %p151 = scmp.ne.s32.totalorder %s142, %s143
      %p152 = scmp.eq.s32.totalorder %s27, 0
      %p153 = por %p151, %p152
      %p154 = scmp.ne.s32.totalorder %s142, %s143
      %p155 = scmp.eq.s32.totalorder %s28, 1
      %p156 = por %p154, %p155
      %p158 = scmp.ne.s32.totalorder %s143, %s157
      %p159 = scmp.eq.s32.totalorder %s28, 0
      %p160 = por %p158, %p159
      %s162 = sadd.s32 %s161, 1
      %p165 = scmp.eq.s32.totalorder %s22, 1
      %p166 = scmp.ne.s32.totalorder %s161, %s163
      %p167 = scmp.eq.s32.totalorder %s22, 0
      %p168 = por %p166, %p167
      %p169 = scmp.ne.s32.totalorder %s161, %s163
      %p170 = scmp.eq.s32.totalorder %s27, 1
      %p171 = por %p169, %p170
      %p172 = scmp.ne.s32.totalorder %s163, %s164
      %p173 = scmp.eq.s32.totalorder %s27, 0
      %p174 = por %p172, %p173
      %p175 = scmp.ne.s32.totalorder %s163, %s164
      %p176 = scmp.eq.s32.totalorder %s28, 1
      %p177 = por %p175, %p176
      %p179 = scmp.ne.s32.totalorder %s164, %s178
      %p180 = scmp.eq.s32.totalorder %s28, 0
      %p181 = por %p179, %p180
      %s183 = sadd.s32 %s182, 1
      %p186 = scmp.eq.s32.totalorder %s22, 1
      %p187 = scmp.ne.s32.totalorder %s182, %s184
      %p188 = scmp.eq.s32.totalorder %s22, 0
      %p189 = por %p187, %p188
      %p190 = scmp.ne.s32.totalorder %s182, %s184
      %p191 = scmp.eq.s32.totalorder %s27, 1
      %p192 = por %p190, %p191
      %p193 = scmp.ne.s32.totalorder %s184, %s185
      %p194 = scmp.eq.s32.totalorder %s27, 0
      %p195 = por %p193, %p194
      %p196 = scmp.ne.s32.totalorder %s184, %s185
      %p197 = scmp.eq.s32.totalorder %s28, 1
      %p198 = por %p196, %p197
      %p200 = scmp.ne.s32.totalorder %s185, %s199
      %p201 = scmp.eq.s32.totalorder %s28, 0
      %p202 = por %p200, %p201
      %s204 = sadd.s32 %s203, 1
      %p207 = scmp.eq.s32.totalorder %s22, 1
      %p208 = scmp.ne.s32.totalorder %s203, %s205
      %p209 = scmp.eq.s32.totalorder %s22, 0
      %p210 = por %p208, %p209
      %p211 = scmp.ne.s32.totalorder %s203, %s205
      %p212 = scmp.eq.s32.totalorder %s27, 1
      %p213 = por %p211, %p212
      %p214 = scmp.ne.s32.totalorder %s205, %s206
      %p215 = scmp.eq.s32.totalorder %s27, 0
      %p216 = por %p214, %p215
      %p217 = scmp.ne.s32.totalorder %s205, %s206
      %p218 = scmp.eq.s32.totalorder %s28, 1
      %p219 = por %p217, %p218
      %p221 = scmp.ne.s32.totalorder %s206, %s220
      %p222 = scmp.eq.s32.totalorder %s28, 0
      %p223 = por %p221, %p222
      %s225 = sadd.s32 %s224, 1
      %p228 = scmp.eq.s32.totalorder %s22, 1
      %p229 = scmp.ne.s32.totalorder %s224, %s226
      %p230 = scmp.eq.s32.totalorder %s22, 0
      %p231 = por %p229, %p230
      %p232 = scmp.ne.s32.totalorder %s224, %s226
      %p233 = scmp.eq.s32.totalorder %s27, 1
      %p234 = por %p232, %p233
      %p235 = scmp.ne.s32.totalorder %s226, %s227
      %p236 = scmp.eq.s32.totalorder %s27, 0
      %p237 = por %p235, %p236
      %p238 = scmp.ne.s32.totalorder %s226, %s227
      %p239 = scmp.eq.s32.totalorder %s28, 1
      %p240 = por %p238, %p239
      %p242 = scmp.ne.s32.totalorder %s227, %s241
      %p243 = scmp.eq.s32.totalorder %s28, 0
      %p244 = por %p242, %p243
      %s246 = sadd.s32 %s245, 1
      %p249 = scmp.eq.s32.totalorder %s22, 1
      %p250 = scmp.ne.s32.totalorder %s245, %s247
      %p251 = scmp.eq.s32.totalorder %s22, 0
      %p252 = por %p250, %p251
      %p253 = scmp.ne.s32.totalorder %s245, %s247
      %p254 = scmp.eq.s32.totalorder %s27, 1
      %p255 = por %p253, %p254
      %p256 = scmp.ne.s32.totalorder %s247, %s248
      %p257 = scmp.eq.s32.totalorder %s27, 0
      %p258 = por %p256, %p257
      %p259 = scmp.ne.s32.totalorder %s247, %s248
      %p260 = scmp.eq.s32.totalorder %s28, 1
      %p261 = por %p259, %p260
      %p263 = scmp.ne.s32.totalorder %s248, %s262
      %p264 = scmp.eq.s32.totalorder %s28, 0
      %p265 = por %p263, %p264
      %s267 = sadd.s32 %s266, 1
      %p270 = scmp.eq.s32.totalorder %s22, 1
      %p271 = scmp.ne.s32.totalorder %s266, %s268
      %p272 = scmp.eq.s32.totalorder %s22, 0
      %p273 = por %p271, %p272
      %p274 = scmp.ne.s32.totalorder %s266, %s268
      %p275 = scmp.eq.s32.totalorder %s27, 1
      %p276 = por %p274, %p275
      %p277 = scmp.ne.s32.totalorder %s268, %s269
      %p278 = scmp.eq.s32.totalorder %s27, 0
      %p279 = por %p277, %p278
      %p280 = scmp.ne.s32.totalorder %s268, %s269
      %p281 = scmp.eq.s32.totalorder %s28, 1
      %p282 = por %p280, %p281
      %p284 = scmp.ne.s32.totalorder %s269, %s283
      %p285 = scmp.eq.s32.totalorder %s28, 0
      %p286 = por %p284, %p285
      %s288 = sadd.s32 %s287, 1
      %p291 = scmp.eq.s32.totalorder %s22, 1
      %p292 = scmp.ne.s32.totalorder %s287, %s289
      %p293 = scmp.eq.s32.totalorder %s22, 0
      %p294 = por %p292, %p293
      %p295 = scmp.ne.s32.totalorder %s287, %s289
      %p296 = scmp.eq.s32.totalorder %s27, 1
      %p297 = por %p295, %p296
      %p298 = scmp.ne.s32.totalorder %s289, %s290
      %p299 = scmp.eq.s32.totalorder %s27, 0
      %p300 = por %p298, %p299
      %p301 = scmp.ne.s32.totalorder %s289, %s290
      %p302 = scmp.eq.s32.totalorder %s28, 1
      %p303 = por %p301, %p302
      %p305 = scmp.ne.s32.totalorder %s290, %s304
      %p306 = scmp.eq.s32.totalorder %s28, 0
      %p307 = por %p305, %p306
      %s308 = ssub.s32 %s22, %s29
      %p309 = scmp.eq.s32.totalorder %s308, 0
      %s311 = sadd.s32 %s310, 1
      %s312 = scalar_select %p309, %s310, %s311
      %p315 = pneg %p309
      %p316 = scmp.eq.s32.totalorder %s22, 1
      %p317 = por %p315, %p316
      %p318 = scmp.ne.s32.totalorder %s310, %s313
      %p319 = scmp.eq.s32.totalorder %s22, 0
      %p320 = por %p318, %p319
      %p321 = scmp.ne.s32.totalorder %s310, %s313
      %p322 = scmp.eq.s32.totalorder %s27, 1
      %p323 = por %p321, %p322
      %p324 = scmp.ne.s32.totalorder %s313, %s314
      %p325 = scmp.eq.s32.totalorder %s27, 0
      %p326 = por %p324, %p325
      %p327 = scmp.ne.s32.totalorder %s313, %s314
      %p328 = scmp.eq.s32.totalorder %s28, 1
      %p329 = por %p327, %p328
      %p331 = scmp.ne.s32.totalorder %s314, %s330
      %p332 = scmp.eq.s32.totalorder %s28, 0
      %p333 = por %p331, %p332
      %p334 = scmp.le.s32.totalorder 1, %s22
      %p335 = scmp.lt.s32.totalorder %s22, 3
      %p336 = pnand %p334, %p335
      %p337 = pneg %p336
      // Predicated region
      $region9: #{convnet_forward.1} parent=5 // pred_check
        _
      $region10: #{convnet_forward.1} parent=5 // pred_check_branch
        %339 = sbr.rel (%p336) target = $region12
      $region11: #{convnet_forward.1} parent=5 // pred_region
        %s340 = ssub.s32 %s22, 1
        // Predicated region
        $region13: #{convnet_forward.1} parent=11 // pred_check
          %p341 = pneg %p69
        $region14: #{convnet_forward.1} parent=11 // pred_check_branch
          %343 = sbr.rel (%p341) target = $region16
        $region15: #{convnet_forward.1} parent=11 // pred_region
          _
        $region16: #{convnet_forward.1} parent=11 // pred_fallthru
          _
        // Predicated region
        $region17: #{convnet_forward.1} parent=11 // pred_check
          %p344 = pneg %p90
        $region18: #{convnet_forward.1} parent=11 // pred_check_branch
          %346 = sbr.rel (%p344) target = $region20
        $region19: #{convnet_forward.1} parent=11 // pred_region
          _
        $region20: #{convnet_forward.1} parent=11 // pred_fallthru
          _
        // Predicated region
        $region21: #{convnet_forward.1} parent=11 // pred_check
          %p347 = pneg %p111
        $region22: #{convnet_forward.1} parent=11 // pred_check_branch
          %349 = sbr.rel (%p347) target = $region24
        $region23: #{convnet_forward.1} parent=11 // pred_region
          _
        $region24: #{convnet_forward.1} parent=11 // pred_fallthru
          _
        // Predicated region
        $region25: #{convnet_forward.1} parent=11 // pred_check
          %p350 = pneg %p132
        $region26: #{convnet_forward.1} parent=11 // pred_check_branch
          %352 = sbr.rel (%p350) target = $region28
        $region27: #{convnet_forward.1} parent=11 // pred_region
          _
        $region28: #{convnet_forward.1} parent=11 // pred_fallthru
          _
        // Predicated region
        $region29: #{convnet_forward.1} parent=11 // pred_check
          %p353 = pneg %p153
        $region30: #{convnet_forward.1} parent=11 // pred_check_branch
          %355 = sbr.rel (%p353) target = $region32
        $region31: #{convnet_forward.1} parent=11 // pred_region
          _
        $region32: #{convnet_forward.1} parent=11 // pred_fallthru
          _
        // Predicated region
        $region33: #{convnet_forward.1} parent=11 // pred_check
          %p356 = pneg %p174
        $region34: #{convnet_forward.1} parent=11 // pred_check_branch
          %358 = sbr.rel (%p356) target = $region36
        $region35: #{convnet_forward.1} parent=11 // pred_region
          _
        $region36: #{convnet_forward.1} parent=11 // pred_fallthru
          _
        // Predicated region
        $region37: #{convnet_forward.1} parent=11 // pred_check
          %p359 = pneg %p195
        $region38: #{convnet_forward.1} parent=11 // pred_check_branch
          %361 = sbr.rel (%p359) target = $region40
        $region39: #{convnet_forward.1} parent=11 // pred_region
          _
        $region40: #{convnet_forward.1} parent=11 // pred_fallthru
          _
        // Predicated region
        $region41: #{convnet_forward.1} parent=11 // pred_check
          %p362 = pneg %p216
        $region42: #{convnet_forward.1} parent=11 // pred_check_branch
          %364 = sbr.rel (%p362) target = $region44
        $region43: #{convnet_forward.1} parent=11 // pred_region
          _
        $region44: #{convnet_forward.1} parent=11 // pred_fallthru
          _
        // Predicated region
        $region45: #{convnet_forward.1} parent=11 // pred_check
          %p365 = pneg %p237
        $region46: #{convnet_forward.1} parent=11 // pred_check_branch
          %367 = sbr.rel (%p365) target = $region48
        $region47: #{convnet_forward.1} parent=11 // pred_region
          _
        $region48: #{convnet_forward.1} parent=11 // pred_fallthru
          _
        // Predicated region
        $region49: #{convnet_forward.1} parent=11 // pred_check
          %p368 = pneg %p258
        $region50: #{convnet_forward.1} parent=11 // pred_check_branch
          %370 = sbr.rel (%p368) target = $region52
        $region51: #{convnet_forward.1} parent=11 // pred_region
          _
        $region52: #{convnet_forward.1} parent=11 // pred_fallthru
          _
        // Predicated region
        $region53: #{convnet_forward.1} parent=11 // pred_check
          %p371 = pneg %p279
        $region54: #{convnet_forward.1} parent=11 // pred_check_branch
          %373 = sbr.rel (%p371) target = $region56
        $region55: #{convnet_forward.1} parent=11 // pred_region
          _
        $region56: #{convnet_forward.1} parent=11 // pred_fallthru
          _
        // Predicated region
        $region57: #{convnet_forward.1} parent=11 // pred_check
          %p374 = pneg %p300
        $region58: #{convnet_forward.1} parent=11 // pred_check_branch
          %376 = sbr.rel (%p374) target = $region60
        $region59: #{convnet_forward.1} parent=11 // pred_region
          _
        $region60: #{convnet_forward.1} parent=11 // pred_fallthru
          _
      $region12: #{convnet_forward.1} parent=5 // pred_fallthru
        _
      %p377 = scmp.lt.s32.totalorder %s22, 2
      // Predicated region
      $region61: #{convnet_forward.1} parent=5 // pred_check
        %p378 = pneg %p377
      $region62: #{convnet_forward.1} parent=5 // pred_check_branch
        %380 = sbr.rel (%p378) target = $region64
      $region63: #{convnet_forward.1} parent=5 // pred_region
        // Predicated region
        $region65: #{convnet_forward.1} parent=63 // pred_check
          %p381 = pneg %p42
        $region66: #{convnet_forward.1} parent=63 // pred_check_branch
          %383 = sbr.rel (%p381) target = $region68
        $region67: #{convnet_forward.1} parent=63 // pred_region
          %p384 = scmp.lt.s32.totalorder %s22, 1
          %s385 = scalar_select %p384, %s22, 1
          %s386 = smul.addr %s385, 7
          %s387 = scalar_lea.vmem %s0, %s386
        $region68: #{convnet_forward.1} parent=63 // pred_fallthru
          _
      $region64: #{convnet_forward.1} parent=5 // pred_fallthru
        _
      %p388 = scmp.le.s32.totalorder 1, %s22
      %p389 = scmp.lt.s32.totalorder %s22, 3
      %p390 = pnand %p388, %p389
      %p391 = pneg %p390
      // Predicated region
      $region69: #{convnet_forward.1} parent=5 // pred_check
        _
      $region70: #{convnet_forward.1} parent=5 // pred_check_branch
        %393 = sbr.rel (%p390) target = $region72
      $region71: #{convnet_forward.1} parent=5 // pred_region
        %s394 = ssub.s32 %s22, 1
        %p395 = scmp.lt.s32.totalorder %s27, 1
        %s396 = scalar_select %p395, %s27, 1
        %s397 = smul.addr %s396, 7
        %s398 = scalar_lea.vmem %s0, %s397
        %p399 = pneg %p48
        %p400 = pneg %p45
        %p401 = pneg %p69
        %p402 = pneg %p66
        %p403 = pneg %p90
        %p404 = pneg %p87
        %p405 = pneg %p111
        %p406 = pneg %p108
        %p407 = pneg %p132
        %p408 = pneg %p129
        %p409 = pneg %p153
        %p410 = pneg %p150
        %p411 = pneg %p174
        %p412 = pneg %p171
        %p413 = pneg %p195
        %p414 = pneg %p192
        %p415 = pneg %p216
        %p416 = pneg %p213
        %p417 = pneg %p237
        %p418 = pneg %p234
        %p419 = pneg %p258
        %p420 = pneg %p255
        %p421 = pneg %p279
        %p422 = pneg %p276
        %p423 = pneg %p300
        %p424 = pneg %p297
        %p425 = pneg %p326
        %p426 = pneg %p323
        %s427 = sand.u32 %s313, 1
        %s428 = scalar_lea.sflag [#allocation5], %s427
        %s429 = sand.u32 %s313, 1
        %s430 = scalar_lea.vmem [#allocation4], %s429
        %p431 = scmp.lt.s32.totalorder %s27, 1
        %s432 = scalar_select %p431, %s27, 1
        %s433 = smul.addr %s432, 7
        %s434 = scalar_lea.vmem %s0, %s433
        %v436 = vld [vmem:[%s434] sm:$0x7f]
        %v437 = vlaneseq
        %vm438 = vcmp.ge.s32.totalorder %v437, 0
        %vm439 = vcmp.lt.s32.totalorder %v437, 672
        %vm440 = vmand %vm438, %vm439
        %441 = vst.msk [vmem:[#allocation2] ss:$8 sm:$0xf] %vm440, %v436
        %442 = vst.msk [vmem:[#allocation2] ss:$8 sm:$0x30] %vm440, %v436
        %444 = vrot.lane.b32.xlu0 %v436, 127
        %v445 = vpop.permute.xlu0 %444
        %v446 = vrot.slane %v445, 1
        %vm447 = vcmask 1039360
        %v448 = vsel %vm447, %v445, %v446
        %s450 = scalar_lea.vmem [#allocation2], 1
        %451 = vst.msk [vmem:[%s450] ss:$8 sm:$0xf] %vm440, %v448
        %452 = vst.msk [vmem:[%s450] ss:$8 sm:$0x30] %vm440, %v448
        %453 = vrot.lane.b32.xlu0 %v436, 126
        %v454 = vpop.permute.xlu0 %453
        %v455 = vrot.slane %v454, 1
        %vm456 = vcmask 1031168
        %v457 = vsel %vm456, %v454, %v455
        %s459 = scalar_lea.vmem [#allocation2], 2
        %460 = vst.msk [vmem:[%s459] ss:$8 sm:$0xf] %vm440, %v457
        %461 = vst.msk [vmem:[%s459] ss:$8 sm:$0x30] %vm440, %v457
        %462 = vrot.lane.b32.xlu0 %v436, 125
        %v463 = vpop.permute.xlu0 %462
        %v464 = vrot.slane %v463, 1
        %vm465 = vcmask 1022976
        %v466 = vsel %vm465, %v463, %v464
        %s468 = scalar_lea.vmem [#allocation2], 3
        %469 = vst.msk [vmem:[%s468] ss:$8 sm:$0xf] %vm440, %v466
        %470 = vst.msk [vmem:[%s468] ss:$8 sm:$0x30] %vm440, %v466
        %471 = vrot.lane.b32.xlu0 %v436, 124
        %v472 = vpop.permute.xlu0 %471
        %v473 = vrot.slane %v472, 1
        %vm474 = vcmask 1014784
        %v475 = vsel %vm474, %v472, %v473
        %s477 = scalar_lea.vmem [#allocation2], 4
        %478 = vst.msk [vmem:[%s477] ss:$8 sm:$0xf] %vm440, %v475
        %479 = vst.msk [vmem:[%s477] ss:$8 sm:$0x30] %vm440, %v475
        %480 = vrot.lane.b32.xlu0 %v436, 100
        %v481 = vpop.permute.xlu0 %480
        %v482 = vrot.slane %v481, 1
        %vm483 = vcmask 818176
        %v484 = vsel %vm483, %v481, %v482
        %s486 = scalar_lea.vmem [#allocation2], 5
        %487 = vst.msk [vmem:[%s486] ss:$8 sm:$0xf] %vm440, %v484
        %488 = vst.msk [vmem:[%s486] ss:$8 sm:$0x30] %vm440, %v484
        %489 = vrot.lane.b32.xlu0 %v436, 99
        %v490 = vpop.permute.xlu0 %489
        %v491 = vrot.slane %v490, 1
        %vm492 = vcmask 809984
        %v493 = vsel %vm492, %v490, %v491
        %s495 = scalar_lea.vmem [#allocation2], 6
        %496 = vst.msk [vmem:[%s495] ss:$8 sm:$0xf] %vm440, %v493
        %497 = vst.msk [vmem:[%s495] ss:$8 sm:$0x30] %vm440, %v493
        %498 = vrot.lane.b32.xlu0 %v436, 98
        %v499 = vpop.permute.xlu0 %498
        %v500 = vrot.slane %v499, 1
        %vm501 = vcmask 801792
        %v502 = vsel %vm501, %v499, %v500
        %s504 = scalar_lea.vmem [#allocation2], 7
        %505 = vst.msk [vmem:[%s504] ss:$8 sm:$0xf] %vm440, %v502
        %506 = vst.msk [vmem:[%s504] ss:$8 sm:$0x30] %vm440, %v502
        %507 = vrot.lane.b32.xlu0 %v436, 97
        %v508 = vpop.permute.xlu0 %507
        %v509 = vrot.slane %v508, 1
        %vm510 = vcmask 793600
        %v511 = vsel %vm510, %v508, %v509
        %s513 = scalar_lea.vmem [#allocation2], 48
        %514 = vst.msk [vmem:[%s513] ss:$8 sm:$0xf] %vm440, %v511
        %515 = vst.msk [vmem:[%s513] ss:$8 sm:$0x30] %vm440, %v511
        %516 = vrot.lane.b32.xlu0 %v436, 96
        %v517 = vpop.permute.xlu0 %516
        %v518 = vrot.slane %v517, 1
        %vm519 = vcmask 785408
        %v520 = vsel %vm519, %v517, %v518
        %s522 = scalar_lea.vmem [#allocation2], 49
        %523 = vst.msk [vmem:[%s522] ss:$8 sm:$0xf] %vm440, %v520
        %524 = vst.msk [vmem:[%s522] ss:$8 sm:$0x30] %vm440, %v520
        %525 = vrot.lane.b32.xlu0 %v436, 72
        %v526 = vpop.permute.xlu0 %525
        %v527 = vrot.slane %v526, 1
        %vm528 = vcmask 588800
        %v529 = vsel %vm528, %v526, %v527
        %s531 = scalar_lea.vmem [#allocation2], 50
        %532 = vst.msk [vmem:[%s531] ss:$8 sm:$0xf] %vm440, %v529
        %533 = vst.msk [vmem:[%s531] ss:$8 sm:$0x30] %vm440, %v529
        %534 = vrot.lane.b32.xlu0 %v436, 71
        %v535 = vpop.permute.xlu0 %534
        %v536 = vrot.slane %v535, 1
        %vm537 = vcmask 580608
        %v538 = vsel %vm537, %v535, %v536
        %s540 = scalar_lea.vmem [#allocation2], 51
        %541 = vst.msk [vmem:[%s540] ss:$8 sm:$0xf] %vm440, %v538
        %542 = vst.msk [vmem:[%s540] ss:$8 sm:$0x30] %vm440, %v538
        %543 = vrot.lane.b32.xlu0 %v436, 70
        %v544 = vpop.permute.xlu0 %543
        %v545 = vrot.slane %v544, 1
        %vm546 = vcmask 572416
        %v547 = vsel %vm546, %v544, %v545
        %s549 = scalar_lea.vmem [#allocation2], 52
        %550 = vst.msk [vmem:[%s549] ss:$8 sm:$0xf] %vm440, %v547
        %551 = vst.msk [vmem:[%s549] ss:$8 sm:$0x30] %vm440, %v547
        %552 = vrot.lane.b32.xlu0 %v436, 69
        %v553 = vpop.permute.xlu0 %552
        %v554 = vrot.slane %v553, 1
        %vm555 = vcmask 564224
        %v556 = vsel %vm555, %v553, %v554
        %s558 = scalar_lea.vmem [#allocation2], 53
        %559 = vst.msk [vmem:[%s558] ss:$8 sm:$0xf] %vm440, %v556
        %560 = vst.msk [vmem:[%s558] ss:$8 sm:$0x30] %vm440, %v556
        %561 = vrot.lane.b32.xlu0 %v436, 68
        %v562 = vpop.permute.xlu0 %561
        %v563 = vrot.slane %v562, 1
        %vm564 = vcmask 556032
        %v565 = vsel %vm564, %v562, %v563
        %s567 = scalar_lea.vmem [#allocation2], 54
        %568 = vst.msk [vmem:[%s567] ss:$8 sm:$0xf] %vm440, %v565
        %569 = vst.msk [vmem:[%s567] ss:$8 sm:$0x30] %vm440, %v565
        %570 = vrot.lane.b32.xlu0 %v436, 44
        %v571 = vpop.permute.xlu0 %570
        %v572 = vrot.slane %v571, 1
        %vm573 = vcmask 359424
        %v574 = vsel %vm573, %v571, %v572
        %s576 = scalar_lea.vmem [#allocation2], 55
        %577 = vst.msk [vmem:[%s576] ss:$8 sm:$0xf] %vm440, %v574
        %578 = vst.msk [vmem:[%s576] ss:$8 sm:$0x30] %vm440, %v574
        %579 = vrot.lane.b32.xlu0 %v436, 43
        %v580 = vpop.permute.xlu0 %579
        %v581 = vrot.slane %v580, 1
        %vm582 = vcmask 351232
        %v583 = vsel %vm582, %v580, %v581
        %s585 = scalar_lea.vmem [#allocation2], 96
        %586 = vst.msk [vmem:[%s585] ss:$8 sm:$0xf] %vm440, %v583
        %587 = vst.msk [vmem:[%s585] ss:$8 sm:$0x30] %vm440, %v583
        %588 = vrot.lane.b32.xlu0 %v436, 42
        %v589 = vpop.permute.xlu0 %588
        %v590 = vrot.slane %v589, 1
        %vm591 = vcmask 343040
        %v592 = vsel %vm591, %v589, %v590
        %s594 = scalar_lea.vmem [#allocation2], 97
        %595 = vst.msk [vmem:[%s594] ss:$8 sm:$0xf] %vm440, %v592
        %596 = vst.msk [vmem:[%s594] ss:$8 sm:$0x30] %vm440, %v592
        %597 = vrot.lane.b32.xlu0 %v436, 41
        %v598 = vpop.permute.xlu0 %597
        %v599 = vrot.slane %v598, 1
        %vm600 = vcmask 334848
        %v601 = vsel %vm600, %v598, %v599
        %s603 = scalar_lea.vmem [#allocation2], 98
        %604 = vst.msk [vmem:[%s603] ss:$8 sm:$0xf] %vm440, %v601
        %605 = vst.msk [vmem:[%s603] ss:$8 sm:$0x30] %vm440, %v601
        %606 = vrot.lane.b32.xlu0 %v436, 40
        %v607 = vpop.permute.xlu0 %606
        %v608 = vrot.slane %v607, 1
        %vm609 = vcmask 326656
        %v610 = vsel %vm609, %v607, %v608
        %s612 = scalar_lea.vmem [#allocation2], 99
        %613 = vst.msk [vmem:[%s612] ss:$8 sm:$0xf] %vm440, %v610
        %614 = vst.msk [vmem:[%s612] ss:$8 sm:$0x30] %vm440, %v610
        %615 = vrot.lane.b32.xlu0 %v436, 16
        %v616 = vpop.permute.xlu0 %615
        %v617 = vrot.slane %v616, 1
        %vm618 = vcmask 130048
        %v619 = vsel %vm618, %v616, %v617
        %s621 = scalar_lea.vmem [#allocation2], 100
        %622 = vst.msk [vmem:[%s621] ss:$8 sm:$0xf] %vm440, %v619
        %623 = vst.msk [vmem:[%s621] ss:$8 sm:$0x30] %vm440, %v619
        %624 = vrot.lane.b32.xlu0 %v436, 15
        %v625 = vpop.permute.xlu0 %624
        %v626 = vrot.slane %v625, 1
        %vm627 = vcmask 121856
        %v628 = vsel %vm627, %v625, %v626
        %s630 = scalar_lea.vmem [#allocation2], 101
        %631 = vst.msk [vmem:[%s630] ss:$8 sm:$0xf] %vm440, %v628
        %632 = vst.msk [vmem:[%s630] ss:$8 sm:$0x30] %vm440, %v628
        %633 = vrot.lane.b32.xlu0 %v436, 14
        %v634 = vpop.permute.xlu0 %633
        %v635 = vrot.slane %v634, 1
        %vm636 = vcmask 113664
        %v637 = vsel %vm636, %v634, %v635
        %s639 = scalar_lea.vmem [#allocation2], 102
        %640 = vst.msk [vmem:[%s639] ss:$8 sm:$0xf] %vm440, %v637
        %641 = vst.msk [vmem:[%s639] ss:$8 sm:$0x30] %vm440, %v637
        %642 = vrot.lane.b32.xlu0 %v436, 13
        %v643 = vpop.permute.xlu0 %642
        %v644 = vrot.slane %v643, 1
        %vm645 = vcmask 105472
        %v646 = vsel %vm645, %v643, %v644
        %s648 = scalar_lea.vmem [#allocation2], 103
        %649 = vst.msk [vmem:[%s648] ss:$8 sm:$0xf] %vm440, %v646
        %650 = vst.msk [vmem:[%s648] ss:$8 sm:$0x30] %vm440, %v646
        %651 = vrot.lane.b32.xlu0 %v436, 12
        %v652 = vpop.permute.xlu0 %651
        %v653 = vrot.slane %v652, 1
        %vm654 = vcmask 97280
        %v655 = vsel %vm654, %v652, %v653
        %s657 = scalar_lea.vmem [#allocation2], 144
        %658 = vst.msk [vmem:[%s657] ss:$8 sm:$0xf] %vm440, %v655
        %659 = vst.msk [vmem:[%s657] ss:$8 sm:$0x30] %vm440, %v655
        %v660 = vld [vmem:[%s1] sm:$0x7]
        %v661 = vld [vmem:[#allocation2] sm:$0xff]
        %v662 = vld [vmem:[#allocation2 + $0x8] sm:$0xff]
        %v663 = vld [vmem:[#allocation2 + $0x10] sm:$0xff]
        %v664 = vld [vmem:[#allocation2 + $0x18] sm:$0xff]
        %v665 = vld [vmem:[#allocation2 + $0x20] sm:$0xff]
        %v666 = vld [vmem:[#allocation2 + $0x28] sm:$0xff]
        %v667 = vld [vmem:[#allocation2 + $0x30] sm:$0xff]
        %v668 = vld [vmem:[#allocation2 + $0x38] sm:$0xff]
        %v669 = vld [vmem:[#allocation2 + $0x40] sm:$0xff]
        %v670 = vld [vmem:[#allocation2 + $0x48] sm:$0xff]
        %v671 = vld [vmem:[#allocation2 + $0x50] sm:$0xff]
        %v672 = vld [vmem:[#allocation2 + $0x58] sm:$0xff]
        %v673 = vld [vmem:[#allocation2 + $0x60] sm:$0xff]
        %v674 = vld [vmem:[#allocation2 + $0x68] sm:$0xff]
        %v675 = vld [vmem:[#allocation2 + $0x70] sm:$0xff]
        %v676 = vld [vmem:[#allocation2 + $0x78] sm:$0xff]
        %v677 = vld [vmem:[#allocation2 + $0x80] sm:$0xff]
        %v678 = vld [vmem:[#allocation2 + $0x88] sm:$0xff]
        %v679 = vld [vmem:[#allocation2 + $0x90] sm:$0x1]
        %v680 = vld [vmem:[#allocation2 + $0x98] sm:$0x1]
        %v681 = vld [vmem:[#allocation2 + $0xa0] sm:$0x1]
        %v682 = vld [vmem:[#allocation2 + $0xa8] sm:$0x1]
        %v683 = vld [vmem:[#allocation2 + $0xb0] sm:$0x1]
        %v684 = vld [vmem:[#allocation2 + $0xb8] sm:$0x1]
        %v685 = vpack.c.bf16 %v667, %v661
        %v686 = vpack.c.bf16 %v668, %v662
        %v687 = vpack.c.bf16 %v669, %v663
        %v688 = vpack.c.bf16 %v670, %v664
        %v689 = vpack.c.bf16 %v671, %v665
        %v690 = vpack.c.bf16 %v672, %v666
        %v691 = vpack.c.bf16 %v679, %v673
        %v692 = vpack.c.bf16 %v680, %v674
        %v693 = vpack.c.bf16 %v681, %v675
        %v694 = vpack.c.bf16 %v682, %v676
        %v695 = vpack.c.bf16 %v683, %v677
        %v696 = vpack.c.bf16 %v684, %v678
        %v697 = vld [vmem:[%s2] sm:$0x3f]
        %699 = vset.pattern.permute.xlu0 0
        %700 = vperm.xlu0 %699, %v697
        %v701 = vpop.permute.xlu0 %700
        %vm703 = vcmask 203776
        %v705 = vsel %vm703, %v660, 0
        %vm707 = vcmask 1043456
        %vm708 = vcmask 1044480
        %v709 = vsel %vm707, 4294967295, 65535
        %v710 = vsel %vm708, %v709, 0
        %v712 = vand.u32 %v691, %v710
        %v715 = vand.u32 %v692, %v710
        %v718 = vand.u32 %v693, %v710
        %v721 = vand.u32 %v694, %v710
        %v724 = vand.u32 %v695, %v710
        %v727 = vand.u32 %v696, %v710
        %729 = vmatprep.subr.bf16.mxu0 %v686
        %730 = vmatpush1.bf16.msra.mxu0 %v685
        %731 = vmatprep.subr.bf16.mxu0 %v715
        %732 = vmatpush1.bf16.msra.mxu0 %v712
        %733 = vmatprep.subr.bf16.mxu0 0
        %734 = vmatpush1.bf16.msra.mxu0 0
        %735 = vmatprep.subr.bf16.mxu0 0
        %736 = vmatpush1.bf16.msra.mxu0 0
        %737 = vmatprep.subr.bf16.mxu0 0
        %738 = vmatpush1.bf16.msra.mxu0 0
        %739 = vmatprep.subr.bf16.mxu0 0
        %740 = vmatpush1.bf16.msra.mxu0 0
        %741 = vmatprep.subr.bf16.mxu0 0
        %742 = vmatpush1.bf16.msra.mxu0 0
        %743 = vmatprep.subr.bf16.mxu0 0
        %744 = vmatpush1.bf16.msra.mxu0 0
        %745 = vmatprep.subr.bf16.mxu0 0
        %746 = vmatpush1.bf16.msra.mxu0 0
        %747 = vmatprep.subr.bf16.mxu0 0
        %748 = vmatpush1.bf16.msra.mxu0 0
        %749 = vmatprep.subr.bf16.mxu0 0
        %750 = vmatpush1.bf16.msra.mxu0 0
        %751 = vmatprep.subr.bf16.mxu0 0
        %752 = vmatpush1.bf16.msra.mxu0 0
        %753 = vmatprep.subr.bf16.mxu0 0
        %754 = vmatpush1.bf16.msra.mxu0 0
        %755 = vmatprep.subr.bf16.mxu0 0
        %756 = vmatpush1.bf16.msra.mxu0 0
        %757 = vmatprep.subr.bf16.mxu0 0
        %758 = vmatpush1.bf16.msra.mxu0 0
        %759 = vmatprep.subr.bf16.mxu0 0
        %760 = vmatpush1.bf16.msra.mxu0 0
        %761 = vmatprep.mubr.bf16.mxu0 0
        %762 = vmatmul.mubr.bf16.gmra.mrb[0].mxu0 %v705
        %v763 = vpop.f32.mrb[0].mxu0
        %v764 = vadd.f32 %v701, %v763
        %v765 = vpop.f32.mrb[0].mxu0
        %v766 = vadd.f32 %v701, %v765
        %v767 = vpop.f32.mrb[0].mxu0
        %v768 = vpop.f32.mrb[0].mxu0
        %769 = vdwg.mxu0
        %770 = vmatprep.subr.bf16.mxu0 %v688
        %771 = vmatpush1.bf16.msra.mxu0 %v687
        %772 = vmatprep.subr.bf16.mxu0 %v721
        %773 = vmatpush1.bf16.msra.mxu0 %v718
        %774 = vmatprep.subr.bf16.mxu0 0
        %775 = vmatpush1.bf16.msra.mxu0 0
        %776 = vmatprep.subr.bf16.mxu0 0
        %777 = vmatpush1.bf16.msra.mxu0 0
        %778 = vmatprep.subr.bf16.mxu0 0
        %779 = vmatpush1.bf16.msra.mxu0 0
        %780 = vmatprep.subr.bf16.mxu0 0
        %781 = vmatpush1.bf16.msra.mxu0 0
        %782 = vmatprep.subr.bf16.mxu0 0
        %783 = vmatpush1.bf16.msra.mxu0 0
        %784 = vmatprep.subr.bf16.mxu0 0
        %785 = vmatpush1.bf16.msra.mxu0 0
        %786 = vmatprep.subr.bf16.mxu0 0
        %787 = vmatpush1.bf16.msra.mxu0 0
        %788 = vmatprep.subr.bf16.mxu0 0
        %789 = vmatpush1.bf16.msra.mxu0 0
        %790 = vmatprep.subr.bf16.mxu0 0
        %791 = vmatpush1.bf16.msra.mxu0 0
        %792 = vmatprep.subr.bf16.mxu0 0
        %793 = vmatpush1.bf16.msra.mxu0 0
        %794 = vmatprep.subr.bf16.mxu0 0
        %795 = vmatpush1.bf16.msra.mxu0 0
        %796 = vmatprep.subr.bf16.mxu0 0
        %797 = vmatpush1.bf16.msra.mxu0 0
        %798 = vmatprep.subr.bf16.mxu0 0
        %799 = vmatpush1.bf16.msra.mxu0 0
        %800 = vmatprep.subr.bf16.mxu0 0
        %801 = vmatpush1.bf16.msra.mxu0 0
        %802 = vmatprep.mubr.bf16.mxu0 0
        %803 = vmatmul.mubr.bf16.gmra.mrb[0].mxu0 %v705
        %v804 = vpop.f32.mrb[0].mxu0
        %v805 = vadd.f32 %v701, %v804
        %v806 = vpop.f32.mrb[0].mxu0
        %v807 = vadd.f32 %v701, %v806
        %v808 = vpop.f32.mrb[0].mxu0
        %v809 = vpop.f32.mrb[0].mxu0
        %810 = vdwg.mxu0
        %811 = vmatprep.subr.bf16.mxu0 %v690
        %812 = vmatpush1.bf16.msra.mxu0 %v689
        %813 = vmatprep.subr.bf16.mxu0 %v727
        %814 = vmatpush1.bf16.msra.mxu0 %v724
        %815 = vmatprep.subr.bf16.mxu0 0
        %816 = vmatpush1.bf16.msra.mxu0 0
        %817 = vmatprep.subr.bf16.mxu0 0
        %818 = vmatpush1.bf16.msra.mxu0 0
        %819 = vmatprep.subr.bf16.mxu0 0
        %820 = vmatpush1.bf16.msra.mxu0 0
        %821 = vmatprep.subr.bf16.mxu0 0
        %822 = vmatpush1.bf16.msra.mxu0 0
        %823 = vmatprep.subr.bf16.mxu0 0
        %824 = vmatpush1.bf16.msra.mxu0 0
        %825 = vmatprep.subr.bf16.mxu0 0
        %826 = vmatpush1.bf16.msra.mxu0 0
        %827 = vmatprep.subr.bf16.mxu0 0
        %828 = vmatpush1.bf16.msra.mxu0 0
        %829 = vmatprep.subr.bf16.mxu0 0
        %830 = vmatpush1.bf16.msra.mxu0 0
        %831 = vmatprep.subr.bf16.mxu0 0
        %832 = vmatpush1.bf16.msra.mxu0 0
        %833 = vmatprep.subr.bf16.mxu0 0
        %834 = vmatpush1.bf16.msra.mxu0 0
        %835 = vmatprep.subr.bf16.mxu0 0
        %836 = vmatpush1.bf16.msra.mxu0 0
        %837 = vmatprep.subr.bf16.mxu0 0
        %838 = vmatpush1.bf16.msra.mxu0 0
        %839 = vmatprep.subr.bf16.mxu0 0
        %840 = vmatpush1.bf16.msra.mxu0 0
        %841 = vmatprep.subr.bf16.mxu0 0
        %842 = vmatpush1.bf16.msra.mxu0 0
        %843 = vmatprep.mubr.bf16.mxu0 0
        %844 = vmatmul.mubr.bf16.gmra.mrb[0].mxu0 %v705
        %v845 = vpop.f32.mrb[0].mxu0
        %v846 = vadd.f32 %v701, %v845
        %v847 = vpop.f32.mrb[0].mxu0
        %v848 = vadd.f32 %v701, %v847
        %v849 = vpop.f32.mrb[0].mxu0
        %v850 = vpop.f32.mrb[0].mxu0
        %851 = vdwg.mxu0
        %v852 = vmax.f32 %v764, 0.0
        %v853 = vmax.f32 %v766, 0.0
        %v854 = vmax.f32 %v805, 0.0
        %v855 = vmax.f32 %v807, 0.0
        %v856 = vmax.f32 %v846, 0.0
        %v857 = vmax.f32 %v848, 0.0
        %864 = vrot.lane.b32.xlu0 %v852, 127
        %v865 = vpop.permute.xlu0 %864
        %866 = vrot.lane.b32.xlu0 %v853, 127
        %v867 = vpop.permute.xlu0 %866
        %868 = vrot.lane.b32.xlu0 %v854, 127
        %v869 = vpop.permute.xlu0 %868
        %870 = vrot.lane.b32.xlu0 %v855, 127
        %v871 = vpop.permute.xlu0 %870
        %872 = vrot.lane.b32.xlu0 %v856, 127
        %v873 = vpop.permute.xlu0 %872
        %874 = vrot.lane.b32.xlu0 %v857, 127
        %v875 = vpop.permute.xlu0 %874
        %v876 = vsel %vm447, %v865, %v867
        %v877 = vsel %vm447, %v867, %v869
        %v878 = vsel %vm447, %v869, %v871
        %v879 = vsel %vm447, %v871, %v873
        %v880 = vsel %vm447, %v873, %v875
        %v886 = vmax.f32 %v852, %v876
        %v887 = vmax.f32 %v853, %v877
        %v888 = vmax.f32 %v854, %v878
        %v889 = vmax.f32 %v855, %v879
        %v890 = vmax.f32 %v856, %v880
        %v892 = vmax.f32 %v857, %v875
        %899 = vrot.lane.b32.xlu0 %v886, 100
        %v900 = vpop.permute.xlu0 %899
        %901 = vrot.lane.b32.xlu0 %v887, 100
        %v902 = vpop.permute.xlu0 %901
        %903 = vrot.lane.b32.xlu0 %v888, 100
        %v904 = vpop.permute.xlu0 %903
        %905 = vrot.lane.b32.xlu0 %v889, 100
        %v906 = vpop.permute.xlu0 %905
        %907 = vrot.lane.b32.xlu0 %v890, 100
        %v908 = vpop.permute.xlu0 %907
        %909 = vrot.lane.b32.xlu0 %v892, 100
        %v910 = vpop.permute.xlu0 %909
        %v911 = vsel %vm483, %v900, %v902
        %v912 = vsel %vm483, %v902, %v904
        %v913 = vsel %vm483, %v904, %v906
        %v914 = vsel %vm483, %v906, %v908
        %v915 = vsel %vm483, %v908, %v910
        %v921 = vmax.f32 %v886, %v911
        %v922 = vmax.f32 %v887, %v912
        %v923 = vmax.f32 %v888, %v913
        %v924 = vmax.f32 %v889, %v914
        %v925 = vmax.f32 %v890, %v915
        %v926 = vpack.c.bf16 %v921, %v921
        %v927 = vpack.c.bf16 %v922, %v922
        %v928 = vpack.c.bf16 %v923, %v923
        %v929 = vpack.c.bf16 %v924, %v924
        %v930 = vpack.c.bf16 %v925, %v925
        %v931 = vld [vmem:[%s3] sm:$0xf]
        %v932 = vld [vmem:[%s3 + $0x4] sm:$0xf]
        %v933 = vld [vmem:[%s3 + $0x8] sm:$0xf]
        %v934 = vld [vmem:[%s3 + $0xc] sm:$0xf]
        %v937 = vunpack.c.l.b16 %v933
        %v938 = vunpack.c.l.b16 %v934
        %v939 = vpack.c.b16 %v938, %v937
        %944 = vrot.lane.b32.xlu0 %v926, 126
        %v945 = vpop.permute.xlu0 %944
        %946 = vrot.lane.b32.xlu0 %v927, 126
        %v947 = vpop.permute.xlu0 %946
        %948 = vrot.lane.b32.xlu0 %v928, 126
        %v949 = vpop.permute.xlu0 %948
        %950 = vrot.lane.b32.xlu0 %v929, 126
        %v951 = vpop.permute.xlu0 %950
        %vm952 = vcmask 1031168
        %v953 = vsel %vm952, %v945, %v947
        %v954 = vsel %vm952, %v947, %v949
        %v955 = vsel %vm952, %v949, %v951
        %vm956 = vcmask 48128
        %v958 = vsel %vm956, %v939, 0
        %vm960 = vcmask 1042432
        %v962 = vsel %vm960, %v953, 0
        %v965 = vsel %vm960, %v954, 0
        %v968 = vsel %vm960, %v955, 0
        %v971 = vsel %vm960, %v951, 0
        %973 = vmatprep.subr.bf16.mxu0 %v965
        %974 = vmatpush1.bf16.msra.mxu0 %v962
        %975 = vmatprep.subr.bf16.mxu0 0
        %976 = vmatpush1.bf16.msra.mxu0 0
        %977 = vmatprep.subr.bf16.mxu0 0
        %978 = vmatpush1.bf16.msra.mxu0 0
        %979 = vmatprep.subr.bf16.mxu0 0
        %980 = vmatpush1.bf16.msra.mxu0 0
        %981 = vmatprep.subr.bf16.mxu0 0
        %982 = vmatpush1.bf16.msra.mxu0 0
        %983 = vmatprep.subr.bf16.mxu0 0
        %984 = vmatpush1.bf16.msra.mxu0 0
        %985 = vmatprep.subr.bf16.mxu0 0
        %986 = vmatpush1.bf16.msra.mxu0 0
        %987 = vmatprep.subr.bf16.mxu0 0
        %988 = vmatpush1.bf16.msra.mxu0 0
        %989 = vmatprep.subr.bf16.mxu0 0
        %990 = vmatpush1.bf16.msra.mxu0 0
        %991 = vmatprep.subr.bf16.mxu0 0
        %992 = vmatpush1.bf16.msra.mxu0 0
        %993 = vmatprep.subr.bf16.mxu0 0
        %994 = vmatpush1.bf16.msra.mxu0 0
        %995 = vmatprep.subr.bf16.mxu0 0
        %996 = vmatpush1.bf16.msra.mxu0 0
        %997 = vmatprep.subr.bf16.mxu0 0
        %998 = vmatpush1.bf16.msra.mxu0 0
        %999 = vmatprep.subr.bf16.mxu0 0
        %1000 = vmatpush1.bf16.msra.mxu0 0
        %1001 = vmatprep.subr.bf16.mxu0 0
        %1002 = vmatpush1.bf16.msra.mxu0 0
        %1003 = vmatprep.subr.bf16.mxu0 0
        %1004 = vmatpush1.bf16.msra.mxu0 0
        %1005 = vmatprep.mubr.bf16.mxu0 0
        %1006 = vmatmul.mubr.bf16.gmra.mrb[0].mxu0 %v958
        %v1007 = vpop.f32.mrb[0].mxu0
        %v1008 = vadd.f32 0.0, %v1007
        %v1009 = vpop.f32.mrb[0].mxu0
        %v1010 = vadd.f32 0.0, %v1009
        %v1011 = vpop.f32.mrb[0].mxu0
        %v1012 = vadd.f32 0.0, %v1011
        %v1013 = vpop.f32.mrb[0].mxu0
        %v1014 = vadd.f32 0.0, %v1013
        %1015 = vdwg.mxu0
        %1016 = vmatprep.subr.bf16.mxu0 %v971
        %1017 = vmatpush1.bf16.msra.mxu0 %v968
        %1018 = vmatprep.subr.bf16.mxu0 0
        %1019 = vmatpush1.bf16.msra.mxu0 0
        %1020 = vmatprep.subr.bf16.mxu0 0
        %1021 = vmatpush1.bf16.msra.mxu0 0
        %1022 = vmatprep.subr.bf16.mxu0 0
        %1023 = vmatpush1.bf16.msra.mxu0 0
        %1024 = vmatprep.subr.bf16.mxu0 0
        %1025 = vmatpush1.bf16.msra.mxu0 0
        %1026 = vmatprep.subr.bf16.mxu0 0
        %1027 = vmatpush1.bf16.msra.mxu0 0
        %1028 = vmatprep.subr.bf16.mxu0 0
        %1029 = vmatpush1.bf16.msra.mxu0 0
        %1030 = vmatprep.subr.bf16.mxu0 0
        %1031 = vmatpush1.bf16.msra.mxu0 0
        %1032 = vmatprep.subr.bf16.mxu0 0
        %1033 = vmatpush1.bf16.msra.mxu0 0
        %1034 = vmatprep.subr.bf16.mxu0 0
        %1035 = vmatpush1.bf16.msra.mxu0 0
        %1036 = vmatprep.subr.bf16.mxu0 0
        %1037 = vmatpush1.bf16.msra.mxu0 0
        %1038 = vmatprep.subr.bf16.mxu0 0
        %1039 = vmatpush1.bf16.msra.mxu0 0
        %1040 = vmatprep.subr.bf16.mxu0 0
        %1041 = vmatpush1.bf16.msra.mxu0 0
        %1042 = vmatprep.subr.bf16.mxu0 0
        %1043 = vmatpush1.bf16.msra.mxu0 0
        %1044 = vmatprep.subr.bf16.mxu0 0
        %1045 = vmatpush1.bf16.msra.mxu0 0
        %1046 = vmatprep.subr.bf16.mxu0 0
        %1047 = vmatpush1.bf16.msra.mxu0 0
        %1048 = vmatprep.mubr.bf16.mxu0 0
        %1049 = vmatmul.mubr.bf16.gmra.mrb[0].mxu0 %v958
        %v1050 = vpop.f32.mrb[0].mxu0
        %v1051 = vadd.f32 0.0, %v1050
        %v1052 = vpop.f32.mrb[0].mxu0
        %v1053 = vadd.f32 0.0, %v1052
        %v1054 = vpop.f32.mrb[0].mxu0
        %v1055 = vadd.f32 0.0, %v1054
        %v1056 = vpop.f32.mrb[0].mxu0
        %v1057 = vadd.f32 0.0, %v1056
        %1058 = vdwg.mxu0
        %v1061 = vunpack.c.l.b16 %v931
        %v1062 = vunpack.c.l.b16 %v932
        %v1063 = vpack.c.b16 %v1062, %v1061
        %v1065 = vsel %vm956, %v1063, 0
        %v1068 = vsel %vm960, %v926, 0
        %v1071 = vsel %vm960, %v927, 0
        %v1074 = vsel %vm960, %v928, 0
        %v1077 = vsel %vm960, %v929, 0
        %1079 = vmatprep.subr.bf16.mxu0 %v1071
        %1080 = vmatpush1.bf16.msra.mxu0 %v1068
        %1081 = vmatprep.subr.bf16.mxu0 0
        %1082 = vmatpush1.bf16.msra.mxu0 0
        %1083 = vmatprep.subr.bf16.mxu0 0
        %1084 = vmatpush1.bf16.msra.mxu0 0
        %1085 = vmatprep.subr.bf16.mxu0 0
        %1086 = vmatpush1.bf16.msra.mxu0 0
        %1087 = vmatprep.subr.bf16.mxu0 0
        %1088 = vmatpush1.bf16.msra.mxu0 0
        %1089 = vmatprep.subr.bf16.mxu0 0
        %1090 = vmatpush1.bf16.msra.mxu0 0
        %1091 = vmatprep.subr.bf16.mxu0 0
        %1092 = vmatpush1.bf16.msra.mxu0 0
        %1093 = vmatprep.subr.bf16.mxu0 0
        %1094 = vmatpush1.bf16.msra.mxu0 0
        %1095 = vmatprep.subr.bf16.mxu0 0
        %1096 = vmatpush1.bf16.msra.mxu0 0
        %1097 = vmatprep.subr.bf16.mxu0 0
        %1098 = vmatpush1.bf16.msra.mxu0 0
        %1099 = vmatprep.subr.bf16.mxu0 0
        %1100 = vmatpush1.bf16.msra.mxu0 0
        %1101 = vmatprep.subr.bf16.mxu0 0
        %1102 = vmatpush1.bf16.msra.mxu0 0
        %1103 = vmatprep.subr.bf16.mxu0 0
        %1104 = vmatpush1.bf16.msra.mxu0 0
        %1105 = vmatprep.subr.bf16.mxu0 0
        %1106 = vmatpush1.bf16.msra.mxu0 0
        %1107 = vmatprep.subr.bf16.mxu0 0
        %1108 = vmatpush1.bf16.msra.mxu0 0
        %1109 = vmatprep.subr.bf16.mxu0 0
        %1110 = vmatpush1.bf16.msra.mxu0 0
        %1111 = vmatprep.mubr.bf16.mxu0 0
        %1112 = vmatmul.mubr.bf16.gmra.mrb[0].mxu0 %v1065
        %v1113 = vpop.f32.mrb[0].mxu0
        %v1114 = vadd.f32 %v1008, %v1113
        %v1115 = vpop.f32.mrb[0].mxu0
        %v1116 = vadd.f32 %v1010, %v1115
        %v1117 = vpop.f32.mrb[0].mxu0
        %v1118 = vadd.f32 %v1012, %v1117
        %v1119 = vpop.f32.mrb[0].mxu0
        %v1120 = vadd.f32 %v1014, %v1119
        %1121 = vdwg.mxu0
        %1122 = vmatprep.subr.bf16.mxu0 %v1077
        %1123 = vmatpush1.bf16.msra.mxu0 %v1074
        %1124 = vmatprep.subr.bf16.mxu0 0
        %1125 = vmatpush1.bf16.msra.mxu0 0
        %1126 = vmatprep.subr.bf16.mxu0 0
        %1127 = vmatpush1.bf16.msra.mxu0 0
        %1128 = vmatprep.subr.bf16.mxu0 0
        %1129 = vmatpush1.bf16.msra.mxu0 0
        %1130 = vmatprep.subr.bf16.mxu0 0
        %1131 = vmatpush1.bf16.msra.mxu0 0
        %1132 = vmatprep.subr.bf16.mxu0 0
        %1133 = vmatpush1.bf16.msra.mxu0 0
        %1134 = vmatprep.subr.bf16.mxu0 0
        %1135 = vmatpush1.bf16.msra.mxu0 0
        %1136 = vmatprep.subr.bf16.mxu0 0
        %1137 = vmatpush1.bf16.msra.mxu0 0
        %1138 = vmatprep.subr.bf16.mxu0 0
        %1139 = vmatpush1.bf16.msra.mxu0 0
        %1140 = vmatprep.subr.bf16.mxu0 0
        %1141 = vmatpush1.bf16.msra.mxu0 0
        %1142 = vmatprep.subr.bf16.mxu0 0
        %1143 = vmatpush1.bf16.msra.mxu0 0
        %1144 = vmatprep.subr.bf16.mxu0 0
        %1145 = vmatpush1.bf16.msra.mxu0 0
        %1146 = vmatprep.subr.bf16.mxu0 0
        %1147 = vmatpush1.bf16.msra.mxu0 0
        %1148 = vmatprep.subr.bf16.mxu0 0
        %1149 = vmatpush1.bf16.msra.mxu0 0
        %1150 = vmatprep.subr.bf16.mxu0 0
        %1151 = vmatpush1.bf16.msra.mxu0 0
        %1152 = vmatprep.subr.bf16.mxu0 0
        %1153 = vmatpush1.bf16.msra.mxu0 0
        %1154 = vmatprep.mubr.bf16.mxu0 0
        %1155 = vmatmul.mubr.bf16.gmra.mrb[0].mxu0 %v1065
        %v1156 = vpop.f32.mrb[0].mxu0
        %v1157 = vadd.f32 %v1051, %v1156
        %v1158 = vpop.f32.mrb[0].mxu0
        %v1159 = vadd.f32 %v1053, %v1158
        %v1160 = vpop.f32.mrb[0].mxu0
        %v1161 = vadd.f32 %v1055, %v1160
        %v1162 = vpop.f32.mrb[0].mxu0
        %v1163 = vadd.f32 %v1057, %v1162
        %1164 = vdwg.mxu0
        %v1165 = vld [vmem:[%s3 + $0x10] sm:$0xf]
        %v1166 = vld [vmem:[%s3 + $0x14] sm:$0xf]
        %v1169 = vunpack.c.l.b16 %v1165
        %v1170 = vunpack.c.l.b16 %v1166
        %v1171 = vpack.c.b16 %v1170, %v1169
        %1172 = vrot.lane.b32.xlu0 %v926, 124
        %v1173 = vpop.permute.xlu0 %1172
        %1174 = vrot.lane.b32.xlu0 %v927, 124
        %v1175 = vpop.permute.xlu0 %1174
        %1176 = vrot.lane.b32.xlu0 %v928, 124
        %v1177 = vpop.permute.xlu0 %1176
        %1178 = vrot.lane.b32.xlu0 %v929, 124
        %v1179 = vpop.permute.xlu0 %1178
        %vm1180 = vcmask 1014784
        %v1181 = vsel %vm1180, %v1173, %v1175
        %v1182 = vsel %vm1180, %v1175, %v1177
        %v1183 = vsel %vm1180, %v1177, %v1179
        %v1185 = vsel %vm956, %v1171, 0
        %v1188 = vsel %vm960, %v1181, 0
        %v1191 = vsel %vm960, %v1182, 0
        %v1194 = vsel %vm960, %v1183, 0
        %v1197 = vsel %vm960, %v1179, 0
        %1199 = vmatprep.subr.bf16.mxu0 %v1191
        %1200 = vmatpush1.bf16.msra.mxu0 %v1188
        %1201 = vmatprep.subr.bf16.mxu0 0
        %1202 = vmatpush1.bf16.msra.mxu0 0
        %1203 = vmatprep.subr.bf16.mxu0 0
        %1204 = vmatpush1.bf16.msra.mxu0 0
        %1205 = vmatprep.subr.bf16.mxu0 0
        %1206 = vmatpush1.bf16.msra.mxu0 0
        %1207 = vmatprep.subr.bf16.mxu0 0
        %1208 = vmatpush1.bf16.msra.mxu0 0
        %1209 = vmatprep.subr.bf16.mxu0 0
        %1210 = vmatpush1.bf16.msra.mxu0 0
        %1211 = vmatprep.subr.bf16.mxu0 0
        %1212 = vmatpush1.bf16.msra.mxu0 0
        %1213 = vmatprep.subr.bf16.mxu0 0
        %1214 = vmatpush1.bf16.msra.mxu0 0
        %1215 = vmatprep.subr.bf16.mxu0 0
        %1216 = vmatpush1.bf16.msra.mxu0 0
        %1217 = vmatprep.subr.bf16.mxu0 0
        %1218 = vmatpush1.bf16.msra.mxu0 0
        %1219 = vmatprep.subr.bf16.mxu0 0
        %1220 = vmatpush1.bf16.msra.mxu0 0
        %1221 = vmatprep.subr.bf16.mxu0 0
        %1222 = vmatpush1.bf16.msra.mxu0 0
        %1223 = vmatprep.subr.bf16.mxu0 0
        %1224 = vmatpush1.bf16.msra.mxu0 0
        %1225 = vmatprep.subr.bf16.mxu0 0
        %1226 = vmatpush1.bf16.msra.mxu0 0
        %1227 = vmatprep.subr.bf16.mxu0 0
        %1228 = vmatpush1.bf16.msra.mxu0 0
        %1229 = vmatprep.subr.bf16.mxu0 0
        %1230 = vmatpush1.bf16.msra.mxu0 0
        %1231 = vmatprep.mubr.bf16.mxu0 0
        %1232 = vmatmul.mubr.bf16.gmra.mrb[0].mxu0 %v1185
        %v1233 = vpop.f32.mrb[0].mxu0
        %v1234 = vadd.f32 0.0, %v1233
        %v1235 = vpop.f32.mrb[0].mxu0
        %v1236 = vadd.f32 0.0, %v1235
        %v1237 = vpop.f32.mrb[0].mxu0
        %v1238 = vadd.f32 0.0, %v1237
        %v1239 = vpop.f32.mrb[0].mxu0
        %v1240 = vadd.f32 0.0, %v1239
        %1241 = vdwg.mxu0
        %1242 = vmatprep.subr.bf16.mxu0 %v1197
        %1243 = vmatpush1.bf16.msra.mxu0 %v1194
        %1244 = vmatprep.subr.bf16.mxu0 0
        %1245 = vmatpush1.bf16.msra.mxu0 0
        %1246 = vmatprep.subr.bf16.mxu0 0
        %1247 = vmatpush1.bf16.msra.mxu0 0
        %1248 = vmatprep.subr.bf16.mxu0 0
        %1249 = vmatpush1.bf16.msra.mxu0 0
        %1250 = vmatprep.subr.bf16.mxu0 0
        %1251 = vmatpush1.bf16.msra.mxu0 0
        %1252 = vmatprep.subr.bf16.mxu0 0
        %1253 = vmatpush1.bf16.msra.mxu0 0
        %1254 = vmatprep.subr.bf16.mxu0 0
        %1255 = vmatpush1.bf16.msra.mxu0 0
        %1256 = vmatprep.subr.bf16.mxu0 0
        %1257 = vmatpush1.bf16.msra.mxu0 0
        %1258 = vmatprep.subr.bf16.mxu0 0
        %1259 = vmatpush1.bf16.msra.mxu0 0
        %1260 = vmatprep.subr.bf16.mxu0 0
        %1261 = vmatpush1.bf16.msra.mxu0 0
        %1262 = vmatprep.subr.bf16.mxu0 0
        %1263 = vmatpush1.bf16.msra.mxu0 0
        %1264 = vmatprep.subr.bf16.mxu0 0
        %1265 = vmatpush1.bf16.msra.mxu0 0
        %1266 = vmatprep.subr.bf16.mxu0 0
        %1267 = vmatpush1.bf16.msra.mxu0 0
        %1268 = vmatprep.subr.bf16.mxu0 0
        %1269 = vmatpush1.bf16.msra.mxu0 0
        %1270 = vmatprep.subr.bf16.mxu0 0
        %1271 = vmatpush1.bf16.msra.mxu0 0
        %1272 = vmatprep.subr.bf16.mxu0 0
        %1273 = vmatpush1.bf16.msra.mxu0 0
        %1274 = vmatprep.mubr.bf16.mxu0 0
        %1275 = vmatmul.mubr.bf16.gmra.mrb[0].mxu0 %v1185
        %v1276 = vpop.f32.mrb[0].mxu0
        %v1277 = vadd.f32 0.0, %v1276
        %v1278 = vpop.f32.mrb[0].mxu0
        %v1279 = vadd.f32 0.0, %v1278
        %v1280 = vpop.f32.mrb[0].mxu0
        %v1281 = vadd.f32 0.0, %v1280
        %v1282 = vpop.f32.mrb[0].mxu0
        %v1283 = vadd.f32 0.0, %v1282
        %1284 = vdwg.mxu0
        %v1285 = vadd.f32 %v1114, %v1234
        %v1286 = vadd.f32 %v1116, %v1236
        %v1287 = vadd.f32 %v1157, %v1277
        %v1288 = vadd.f32 %v1159, %v1279
        %v1289 = vadd.f32 %v1118, %v1238
        %v1290 = vadd.f32 %v1120, %v1240
        %v1291 = vadd.f32 %v1161, %v1281
        %v1292 = vadd.f32 %v1163, %v1283
        %v1293 = vld [vmem:[%s3 + $0x18] sm:$0xf]
        %v1294 = vld [vmem:[%s3 + $0x1c] sm:$0xf]
        %v1297 = vunpack.c.l.b16 %v1293
        %v1298 = vunpack.c.l.b16 %v1294
        %v1299 = vpack.c.b16 %v1298, %v1297
        %1300 = vrot.lane.b32.xlu0 %v926, 122
        %v1301 = vpop.permute.xlu0 %1300
        %1302 = vrot.lane.b32.xlu0 %v927, 122
        %v1303 = vpop.permute.xlu0 %1302
        %1304 = vrot.lane.b32.xlu0 %v928, 122
        %v1305 = vpop.permute.xlu0 %1304
        %1306 = vrot.lane.b32.xlu0 %v929, 122
        %v1307 = vpop.permute.xlu0 %1306
        %vm1308 = vcmask 998400
        %v1309 = vsel %vm1308, %v1301, %v1303
        %v1310 = vsel %vm1308, %v1303, %v1305
        %v1311 = vsel %vm1308, %v1305, %v1307
        %v1313 = vsel %vm956, %v1299, 0
        %v1316 = vsel %vm960, %v1309, 0
        %v1319 = vsel %vm960, %v1310, 0
        %v1322 = vsel %vm960, %v1311, 0
        %v1325 = vsel %vm960, %v1307, 0
        %1327 = vmatprep.subr.bf16.mxu0 %v1319
        %1328 = vmatpush1.bf16.msra.mxu0 %v1316
        %1329 = vmatprep.subr.bf16.mxu0 0
        %1330 = vmatpush1.bf16.msra.mxu0 0
        %1331 = vmatprep.subr.bf16.mxu0 0
        %1332 = vmatpush1.bf16.msra.mxu0 0
        %1333 = vmatprep.subr.bf16.mxu0 0
        %1334 = vmatpush1.bf16.msra.mxu0 0
        %1335 = vmatprep.subr.bf16.mxu0 0
        %1336 = vmatpush1.bf16.msra.mxu0 0
        %1337 = vmatprep.subr.bf16.mxu0 0
        %1338 = vmatpush1.bf16.msra.mxu0 0
        %1339 = vmatprep.subr.bf16.mxu0 0
        %1340 = vmatpush1.bf16.msra.mxu0 0
        %1341 = vmatprep.subr.bf16.mxu0 0
        %1342 = vmatpush1.bf16.msra.mxu0 0
        %1343 = vmatprep.subr.bf16.mxu0 0
        %1344 = vmatpush1.bf16.msra.mxu0 0
        %1345 = vmatprep.subr.bf16.mxu0 0
        %1346 = vmatpush1.bf16.msra.mxu0 0
        %1347 = vmatprep.subr.bf16.mxu0 0
        %1348 = vmatpush1.bf16.msra.mxu0 0
        %1349 = vmatprep.subr.bf16.mxu0 0
        %1350 = vmatpush1.bf16.msra.mxu0 0
        %1351 = vmatprep.subr.bf16.mxu0 0
        %1352 = vmatpush1.bf16.msra.mxu0 0
        %1353 = vmatprep.subr.bf16.mxu0 0
        %1354 = vmatpush1.bf16.msra.mxu0 0
        %1355 = vmatprep.subr.bf16.mxu0 0
        %1356 = vmatpush1.bf16.msra.mxu0 0
        %1357 = vmatprep.subr.bf16.mxu0 0
        %1358 = vmatpush1.bf16.msra.mxu0 0
        %1359 = vmatprep.mubr.bf16.mxu0 0
        %1360 = vmatmul.mubr.bf16.gmra.mrb[0].mxu0 %v1313
        %v1361 = vpop.f32.mrb[0].mxu0
        %v1362 = vadd.f32 0.0, %v1361
        %v1363 = vpop.f32.mrb[0].mxu0
        %v1364 = vadd.f32 0.0, %v1363
        %v1365 = vpop.f32.mrb[0].mxu0
        %v1366 = vadd.f32 0.0, %v1365
        %v1367 = vpop.f32.mrb[0].mxu0
        %v1368 = vadd.f32 0.0, %v1367
        %1369 = vdwg.mxu0
        %1370 = vmatprep.subr.bf16.mxu0 %v1325
        %1371 = vmatpush1.bf16.msra.mxu0 %v1322
        %1372 = vmatprep.subr.bf16.mxu0 0
        %1373 = vmatpush1.bf16.msra.mxu0 0
        %1374 = vmatprep.subr.bf16.mxu0 0
        %1375 = vmatpush1.bf16.msra.mxu0 0
        %1376 = vmatprep.subr.bf16.mxu0 0
        %1377 = vmatpush1.bf16.msra.mxu0 0
        %1378 = vmatprep.subr.bf16.mxu0 0
        %1379 = vmatpush1.bf16.msra.mxu0 0
        %1380 = vmatprep.subr.bf16.mxu0 0
        %1381 = vmatpush1.bf16.msra.mxu0 0
        %1382 = vmatprep.subr.bf16.mxu0 0
        %1383 = vmatpush1.bf16.msra.mxu0 0
        %1384 = vmatprep.subr.bf16.mxu0 0
        %1385 = vmatpush1.bf16.msra.mxu0 0
        %1386 = vmatprep.subr.bf16.mxu0 0
        %1387 = vmatpush1.bf16.msra.mxu0 0
        %1388 = vmatprep.subr.bf16.mxu0 0
        %1389 = vmatpush1.bf16.msra.mxu0 0
        %1390 = vmatprep.subr.bf16.mxu0 0
        %1391 = vmatpush1.bf16.msra.mxu0 0
        %1392 = vmatprep.subr.bf16.mxu0 0
        %1393 = vmatpush1.bf16.msra.mxu0 0
        %1394 = vmatprep.subr.bf16.mxu0 0
        %1395 = vmatpush1.bf16.msra.mxu0 0
        %1396 = vmatprep.subr.bf16.mxu0 0
        %1397 = vmatpush1.bf16.msra.mxu0 0
        %1398 = vmatprep.subr.bf16.mxu0 0
        %1399 = vmatpush1.bf16.msra.mxu0 0
        %1400 = vmatprep.subr.bf16.mxu0 0
        %1401 = vmatpush1.bf16.msra.mxu0 0
        %1402 = vmatprep.mubr.bf16.mxu0 0
        %1403 = vmatmul.mubr.bf16.gmra.mrb[0].mxu0 %v1313
        %v1404 = vpop.f32.mrb[0].mxu0
        %v1405 = vadd.f32 0.0, %v1404
        %v1406 = vpop.f32.mrb[0].mxu0
        %v1407 = vadd.f32 0.0, %v1406
        %v1408 = vpop.f32.mrb[0].mxu0
        %v1409 = vadd.f32 0.0, %v1408
        %v1410 = vpop.f32.mrb[0].mxu0
        %v1411 = vadd.f32 0.0, %v1410
        %1412 = vdwg.mxu0
        %v1413 = vadd.f32 %v1285, %v1362
        %v1414 = vadd.f32 %v1286, %v1364
        %v1415 = vadd.f32 %v1287, %v1405
        %v1416 = vadd.f32 %v1288, %v1407
        %v1417 = vadd.f32 %v1289, %v1366
        %v1418 = vadd.f32 %v1290, %v1368
        %v1419 = vadd.f32 %v1291, %v1409
        %v1420 = vadd.f32 %v1292, %v1411
        %v1421 = vld [vmem:[%s3 + $0x20] sm:$0xf]
        %v1422 = vld [vmem:[%s3 + $0x24] sm:$0xf]
        %v1425 = vunpack.c.l.b16 %v1421
        %v1426 = vunpack.c.l.b16 %v1422
        %v1427 = vpack.c.b16 %v1426, %v1425
        %1428 = vrot.lane.b32.xlu0 %v926, 120
        %v1429 = vpop.permute.xlu0 %1428
        %1430 = vrot.lane.b32.xlu0 %v927, 120
        %v1431 = vpop.permute.xlu0 %1430
        %1432 = vrot.lane.b32.xlu0 %v928, 120
        %v1433 = vpop.permute.xlu0 %1432
        %1434 = vrot.lane.b32.xlu0 %v929, 120
        %v1435 = vpop.permute.xlu0 %1434
        %vm1436 = vcmask 982016
        %v1437 = vsel %vm1436, %v1429, %v1431
        %v1438 = vsel %vm1436, %v1431, %v1433
        %v1439 = vsel %vm1436, %v1433, %v1435
        %v1441 = vsel %vm956, %v1427, 0
        %v1444 = vsel %vm960, %v1437, 0
        %v1447 = vsel %vm960, %v1438, 0
        %v1450 = vsel %vm960, %v1439, 0
        %v1453 = vsel %vm960, %v1435, 0
        %1455 = vmatprep.subr.bf16.mxu0 %v1447
        %1456 = vmatpush1.bf16.msra.mxu0 %v1444
        %1457 = vmatprep.subr.bf16.mxu0 0
        %1458 = vmatpush1.bf16.msra.mxu0 0
        %1459 = vmatprep.subr.bf16.mxu0 0
        %1460 = vmatpush1.bf16.msra.mxu0 0
        %1461 = vmatprep.subr.bf16.mxu0 0
        %1462 = vmatpush1.bf16.msra.mxu0 0
        %1463 = vmatprep.subr.bf16.mxu0 0
        %1464 = vmatpush1.bf16.msra.mxu0 0
        %1465 = vmatprep.subr.bf16.mxu0 0
        %1466 = vmatpush1.bf16.msra.mxu0 0
        %1467 = vmatprep.subr.bf16.mxu0 0
        %1468 = vmatpush1.bf16.msra.mxu0 0
        %1469 = vmatprep.subr.bf16.mxu0 0
        %1470 = vmatpush1.bf16.msra.mxu0 0
        %1471 = vmatprep.subr.bf16.mxu0 0
        %1472 = vmatpush1.bf16.msra.mxu0 0
        %1473 = vmatprep.subr.bf16.mxu0 0
        %1474 = vmatpush1.bf16.msra.mxu0 0
        %1475 = vmatprep.subr.bf16.mxu0 0
        %1476 = vmatpush1.bf16.msra.mxu0 0
        %1477 = vmatprep.subr.bf16.mxu0 0
        %1478 = vmatpush1.bf16.msra.mxu0 0
        %1479 = vmatprep.subr.bf16.mxu0 0
        %1480 = vmatpush1.bf16.msra.mxu0 0
        %1481 = vmatprep.subr.bf16.mxu0 0
        %1482 = vmatpush1.bf16.msra.mxu0 0
        %1483 = vmatprep.subr.bf16.mxu0 0
        %1484 = vmatpush1.bf16.msra.mxu0 0
        %1485 = vmatprep.subr.bf16.mxu0 0
        %1486 = vmatpush1.bf16.msra.mxu0 0
        %1487 = vmatprep.mubr.bf16.mxu0 0
        %1488 = vmatmul.mubr.bf16.gmra.mrb[0].mxu0 %v1441
        %v1489 = vpop.f32.mrb[0].mxu0
        %v1490 = vadd.f32 0.0, %v1489
        %v1491 = vpop.f32.mrb[0].mxu0
        %v1492 = vadd.f32 0.0, %v1491
        %v1493 = vpop.f32.mrb[0].mxu0
        %v1494 = vadd.f32 0.0, %v1493
        %v1495 = vpop.f32.mrb[0].mxu0
        %v1496 = vadd.f32 0.0, %v1495
        %1497 = vdwg.mxu0
        %1498 = vmatprep.subr.bf16.mxu0 %v1453
        %1499 = vmatpush1.bf16.msra.mxu0 %v1450
        %1500 = vmatprep.subr.bf16.mxu0 0
        %1501 = vmatpush1.bf16.msra.mxu0 0
        %1502 = vmatprep.subr.bf16.mxu0 0
        %1503 = vmatpush1.bf16.msra.mxu0 0
        %1504 = vmatprep.subr.bf16.mxu0 0
        %1505 = vmatpush1.bf16.msra.mxu0 0
        %1506 = vmatprep.subr.bf16.mxu0 0
        %1507 = vmatpush1.bf16.msra.mxu0 0
        %1508 = vmatprep.subr.bf16.mxu0 0
        %1509 = vmatpush1.bf16.msra.mxu0 0
        %1510 = vmatprep.subr.bf16.mxu0 0
        %1511 = vmatpush1.bf16.msra.mxu0 0
        %1512 = vmatprep.subr.bf16.mxu0 0
        %1513 = vmatpush1.bf16.msra.mxu0 0
        %1514 = vmatprep.subr.bf16.mxu0 0
        %1515 = vmatpush1.bf16.msra.mxu0 0
        %1516 = vmatprep.subr.bf16.mxu0 0
        %1517 = vmatpush1.bf16.msra.mxu0 0
        %1518 = vmatprep.subr.bf16.mxu0 0
        %1519 = vmatpush1.bf16.msra.mxu0 0
        %1520 = vmatprep.subr.bf16.mxu0 0
        %1521 = vmatpush1.bf16.msra.mxu0 0
        %1522 = vmatprep.subr.bf16.mxu0 0
        %1523 = vmatpush1.bf16.msra.mxu0 0
        %1524 = vmatprep.subr.bf16.mxu0 0
        %1525 = vmatpush1.bf16.msra.mxu0 0
        %1526 = vmatprep.subr.bf16.mxu0 0
        %1527 = vmatpush1.bf16.msra.mxu0 0
        %1528 = vmatprep.subr.bf16.mxu0 0
        %1529 = vmatpush1.bf16.msra.mxu0 0
        %1530 = vmatprep.mubr.bf16.mxu0 0
        %1531 = vmatmul.mubr.bf16.gmra.mrb[0].mxu0 %v1441
        %v1532 = vpop.f32.mrb[0].mxu0
        %v1533 = vadd.f32 0.0, %v1532
        %v1534 = vpop.f32.mrb[0].mxu0
        %v1535 = vadd.f32 0.0, %v1534
        %v1536 = vpop.f32.mrb[0].mxu0
        %v1537 = vadd.f32 0.0, %v1536
        %v1538 = vpop.f32.mrb[0].mxu0
        %v1539 = vadd.f32 0.0, %v1538
        %1540 = vdwg.mxu0
        %v1541 = vadd.f32 %v1413, %v1490
        %v1542 = vadd.f32 %v1414, %v1492
        %v1543 = vadd.f32 %v1415, %v1533
        %v1544 = vadd.f32 %v1416, %v1535
        %v1545 = vadd.f32 %v1417, %v1494
        %v1546 = vadd.f32 %v1418, %v1496
        %v1547 = vadd.f32 %v1419, %v1537
        %v1548 = vadd.f32 %v1420, %v1539
        %v1549 = vld [vmem:[%s3 + $0x28] sm:$0xf]
        %v1550 = vld [vmem:[%s3 + $0x2c] sm:$0xf]
        %v1553 = vunpack.c.l.b16 %v1549
        %v1554 = vunpack.c.l.b16 %v1550
        %v1555 = vpack.c.b16 %v1554, %v1553
        %1556 = vrot.lane.b32.xlu0 %v926, 72
        %v1557 = vpop.permute.xlu0 %1556
        %1558 = vrot.lane.b32.xlu0 %v927, 72
        %v1559 = vpop.permute.xlu0 %1558
        %1560 = vrot.lane.b32.xlu0 %v928, 72
        %v1561 = vpop.permute.xlu0 %1560
        %1562 = vrot.lane.b32.xlu0 %v929, 72
        %v1563 = vpop.permute.xlu0 %1562
        %vm1564 = vcmask 588800
        %v1565 = vsel %vm1564, %v1557, %v1559
        %v1566 = vsel %vm1564, %v1559, %v1561
        %v1567 = vsel %vm1564, %v1561, %v1563
        %v1569 = vsel %vm956, %v1555, 0
        %v1572 = vsel %vm960, %v1565, 0
        %v1575 = vsel %vm960, %v1566, 0
        %v1578 = vsel %vm960, %v1567, 0
        %v1581 = vsel %vm960, %v1563, 0
        %1583 = vmatprep.subr.bf16.mxu0 %v1575
        %1584 = vmatpush1.bf16.msra.mxu0 %v1572
        %1585 = vmatprep.subr.bf16.mxu0 0
        %1586 = vmatpush1.bf16.msra.mxu0 0
        %1587 = vmatprep.subr.bf16.mxu0 0
        %1588 = vmatpush1.bf16.msra.mxu0 0
        %1589 = vmatprep.subr.bf16.mxu0 0
        %1590 = vmatpush1.bf16.msra.mxu0 0
        %1591 = vmatprep.subr.bf16.mxu0 0
        %1592 = vmatpush1.bf16.msra.mxu0 0
        %1593 = vmatprep.subr.bf16.mxu0 0
        %1594 = vmatpush1.bf16.msra.mxu0 0
        %1595 = vmatprep.subr.bf16.mxu0 0
        %1596 = vmatpush1.bf16.msra.mxu0 0
        %1597 = vmatprep.subr.bf16.mxu0 0
        %1598 = vmatpush1.bf16.msra.mxu0 0
        %1599 = vmatprep.subr.bf16.mxu0 0
        %1600 = vmatpush1.bf16.msra.mxu0 0
        %1601 = vmatprep.subr.bf16.mxu0 0
        %1602 = vmatpush1.bf16.msra.mxu0 0
        %1603 = vmatprep.subr.bf16.mxu0 0
        %1604 = vmatpush1.bf16.msra.mxu0 0
        %1605 = vmatprep.subr.bf16.mxu0 0
        %1606 = vmatpush1.bf16.msra.mxu0 0
        %1607 = vmatprep.subr.bf16.mxu0 0
        %1608 = vmatpush1.bf16.msra.mxu0 0
        %1609 = vmatprep.subr.bf16.mxu0 0
        %1610 = vmatpush1.bf16.msra.mxu0 0
        %1611 = vmatprep.subr.bf16.mxu0 0
        %1612 = vmatpush1.bf16.msra.mxu0 0
        %1613 = vmatprep.subr.bf16.mxu0 0
        %1614 = vmatpush1.bf16.msra.mxu0 0
        %1615 = vmatprep.mubr.bf16.mxu0 0
        %1616 = vmatmul.mubr.bf16.gmra.mrb[0].mxu0 %v1569
        %v1617 = vpop.f32.mrb[0].mxu0
        %v1618 = vadd.f32 0.0, %v1617
        %v1619 = vpop.f32.mrb[0].mxu0
        %v1620 = vadd.f32 0.0, %v1619
        %v1621 = vpop.f32.mrb[0].mxu0
        %v1622 = vadd.f32 0.0, %v1621
        %v1623 = vpop.f32.mrb[0].mxu0
        %v1624 = vadd.f32 0.0, %v1623
        %1625 = vdwg.mxu0
        %1626 = vmatprep.subr.bf16.mxu0 %v1581
        %1627 = vmatpush1.bf16.msra.mxu0 %v1578
        %1628 = vmatprep.subr.bf16.mxu0 0
        %1629 = vmatpush1.bf16.msra.mxu0 0
        %1630 = vmatprep.subr.bf16.mxu0 0
        %1631 = vmatpush1.bf16.msra.mxu0 0
        %1632 = vmatprep.subr.bf16.mxu0 0
        %1633 = vmatpush1.bf16.msra.mxu0 0
        %1634 = vmatprep.subr.bf16.mxu0 0
        %1635 = vmatpush1.bf16.msra.mxu0 0
        %1636 = vmatprep.subr.bf16.mxu0 0
        %1637 = vmatpush1.bf16.msra.mxu0 0
        %1638 = vmatprep.subr.bf16.mxu0 0
        %1639 = vmatpush1.bf16.msra.mxu0 0
        %1640 = vmatprep.subr.bf16.mxu0 0
        %1641 = vmatpush1.bf16.msra.mxu0 0
        %1642 = vmatprep.subr.bf16.mxu0 0
        %1643 = vmatpush1.bf16.msra.mxu0 0
        %1644 = vmatprep.subr.bf16.mxu0 0
        %1645 = vmatpush1.bf16.msra.mxu0 0
        %1646 = vmatprep.subr.bf16.mxu0 0
        %1647 = vmatpush1.bf16.msra.mxu0 0
        %1648 = vmatprep.subr.bf16.mxu0 0
        %1649 = vmatpush1.bf16.msra.mxu0 0
        %1650 = vmatprep.subr.bf16.mxu0 0
        %1651 = vmatpush1.bf16.msra.mxu0 0
        %1652 = vmatprep.subr.bf16.mxu0 0
        %1653 = vmatpush1.bf16.msra.mxu0 0
        %1654 = vmatprep.subr.bf16.mxu0 0
        %1655 = vmatpush1.bf16.msra.mxu0 0
        %1656 = vmatprep.subr.bf16.mxu0 0
        %1657 = vmatpush1.bf16.msra.mxu0 0
        %1658 = vmatprep.mubr.bf16.mxu0 0
        %1659 = vmatmul.mubr.bf16.gmra.mrb[0].mxu0 %v1569
        %v1660 = vpop.f32.mrb[0].mxu0
        %v1661 = vadd.f32 0.0, %v1660
        %v1662 = vpop.f32.mrb[0].mxu0
        %v1663 = vadd.f32 0.0, %v1662
        %v1664 = vpop.f32.mrb[0].mxu0
        %v1665 = vadd.f32 0.0, %v1664
        %v1666 = vpop.f32.mrb[0].mxu0
        %v1667 = vadd.f32 0.0, %v1666
        %1668 = vdwg.mxu0
        %v1669 = vadd.f32 %v1541, %v1618
        %v1670 = vadd.f32 %v1542, %v1620
        %v1671 = vadd.f32 %v1543, %v1661
        %v1672 = vadd.f32 %v1544, %v1663
        %v1673 = vadd.f32 %v1545, %v1622
        %v1674 = vadd.f32 %v1546, %v1624
        %v1675 = vadd.f32 %v1547, %v1665
        %v1676 = vadd.f32 %v1548, %v1667
        %v1677 = vld [vmem:[%s3 + $0x30] sm:$0xf]
        %v1678 = vld [vmem:[%s3 + $0x34] sm:$0xf]
        %v1681 = vunpack.c.l.b16 %v1677
        %v1682 = vunpack.c.l.b16 %v1678
        %v1683 = vpack.c.b16 %v1682, %v1681
        %1684 = vrot.lane.b32.xlu0 %v926, 70
        %v1685 = vpop.permute.xlu0 %1684
        %1686 = vrot.lane.b32.xlu0 %v927, 70
        %v1687 = vpop.permute.xlu0 %1686
        %1688 = vrot.lane.b32.xlu0 %v928, 70
        %v1689 = vpop.permute.xlu0 %1688
        %1690 = vrot.lane.b32.xlu0 %v929, 70
        %v1691 = vpop.permute.xlu0 %1690
        %vm1692 = vcmask 572416
        %v1693 = vsel %vm1692, %v1685, %v1687
        %v1694 = vsel %vm1692, %v1687, %v1689
        %v1695 = vsel %vm1692, %v1689, %v1691
        %v1697 = vsel %vm956, %v1683, 0
        %v1700 = vsel %vm960, %v1693, 0
        %v1703 = vsel %vm960, %v1694, 0
        %v1706 = vsel %vm960, %v1695, 0
        %v1709 = vsel %vm960, %v1691, 0
        %1711 = vmatprep.subr.bf16.mxu0 %v1703
        %1712 = vmatpush1.bf16.msra.mxu0 %v1700
        %1713 = vmatprep.subr.bf16.mxu0 0
        %1714 = vmatpush1.bf16.msra.mxu0 0
        %1715 = vmatprep.subr.bf16.mxu0 0
        %1716 = vmatpush1.bf16.msra.mxu0 0
        %1717 = vmatprep.subr.bf16.mxu0 0
        %1718 = vmatpush1.bf16.msra.mxu0 0
        %1719 = vmatprep.subr.bf16.mxu0 0
        %1720 = vmatpush1.bf16.msra.mxu0 0
        %1721 = vmatprep.subr.bf16.mxu0 0
        %1722 = vmatpush1.bf16.msra.mxu0 0
        %1723 = vmatprep.subr.bf16.mxu0 0
        %1724 = vmatpush1.bf16.msra.mxu0 0
        %1725 = vmatprep.subr.bf16.mxu0 0
        %1726 = vmatpush1.bf16.msra.mxu0 0
        %1727 = vmatprep.subr.bf16.mxu0 0
        %1728 = vmatpush1.bf16.msra.mxu0 0
        %1729 = vmatprep.subr.bf16.mxu0 0
        %1730 = vmatpush1.bf16.msra.mxu0 0
        %1731 = vmatprep.subr.bf16.mxu0 0
        %1732 = vmatpush1.bf16.msra.mxu0 0
        %1733 = vmatprep.subr.bf16.mxu0 0
        %1734 = vmatpush1.bf16.msra.mxu0 0
        %1735 = vmatprep.subr.bf16.mxu0 0
        %1736 = vmatpush1.bf16.msra.mxu0 0
        %1737 = vmatprep.subr.bf16.mxu0 0
        %1738 = vmatpush1.bf16.msra.mxu0 0
        %1739 = vmatprep.subr.bf16.mxu0 0
        %1740 = vmatpush1.bf16.msra.mxu0 0
        %1741 = vmatprep.subr.bf16.mxu0 0
        %1742 = vmatpush1.bf16.msra.mxu0 0
        %1743 = vmatprep.mubr.bf16.mxu0 0
        %1744 = vmatmul.mubr.bf16.gmra.mrb[0].mxu0 %v1697
        %v1745 = vpop.f32.mrb[0].mxu0
        %v1746 = vadd.f32 0.0, %v1745
        %v1747 = vpop.f32.mrb[0].mxu0
        %v1748 = vadd.f32 0.0, %v1747
        %v1749 = vpop.f32.mrb[0].mxu0
        %v1750 = vadd.f32 0.0, %v1749
        %v1751 = vpop.f32.mrb[0].mxu0
        %v1752 = vadd.f32 0.0, %v1751
        %1753 = vdwg.mxu0
        %1754 = vmatprep.subr.bf16.mxu0 %v1709
        %1755 = vmatpush1.bf16.msra.mxu0 %v1706
        %1756 = vmatprep.subr.bf16.mxu0 0
        %1757 = vmatpush1.bf16.msra.mxu0 0
        %1758 = vmatprep.subr.bf16.mxu0 0
        %1759 = vmatpush1.bf16.msra.mxu0 0
        %1760 = vmatprep.subr.bf16.mxu0 0
        %1761 = vmatpush1.bf16.msra.mxu0 0
        %1762 = vmatprep.subr.bf16.mxu0 0
        %1763 = vmatpush1.bf16.msra.mxu0 0
        %1764 = vmatprep.subr.bf16.mxu0 0
        %1765 = vmatpush1.bf16.msra.mxu0 0
        %1766 = vmatprep.subr.bf16.mxu0 0
        %1767 = vmatpush1.bf16.msra.mxu0 0
        %1768 = vmatprep.subr.bf16.mxu0 0
        %1769 = vmatpush1.bf16.msra.mxu0 0
        %1770 = vmatprep.subr.bf16.mxu0 0
        %1771 = vmatpush1.bf16.msra.mxu0 0
        %1772 = vmatprep.subr.bf16.mxu0 0
        %1773 = vmatpush1.bf16.msra.mxu0 0
        %1774 = vmatprep.subr.bf16.mxu0 0
        %1775 = vmatpush1.bf16.msra.mxu0 0
        %1776 = vmatprep.subr.bf16.mxu0 0
        %1777 = vmatpush1.bf16.msra.mxu0 0
        %1778 = vmatprep.subr.bf16.mxu0 0
        %1779 = vmatpush1.bf16.msra.mxu0 0
        %1780 = vmatprep.subr.bf16.mxu0 0
        %1781 = vmatpush1.bf16.msra.mxu0 0
        %1782 = vmatprep.subr.bf16.mxu0 0
        %1783 = vmatpush1.bf16.msra.mxu0 0
        %1784 = vmatprep.subr.bf16.mxu0 0
        %1785 = vmatpush1.bf16.msra.mxu0 0
        %1786 = vmatprep.mubr.bf16.mxu0 0
        %1787 = vmatmul.mubr.bf16.gmra.mrb[0].mxu0 %v1697
        %v1788 = vpop.f32.mrb[0].mxu0
        %v1789 = vadd.f32 0.0, %v1788
        %v1790 = vpop.f32.mrb[0].mxu0
        %v1791 = vadd.f32 0.0, %v1790
        %v1792 = vpop.f32.mrb[0].mxu0
        %v1793 = vadd.f32 0.0, %v1792
        %v1794 = vpop.f32.mrb[0].mxu0
        %v1795 = vadd.f32 0.0, %v1794
        %1796 = vdwg.mxu0
        %v1797 = vadd.f32 %v1669, %v1746
        %v1798 = vadd.f32 %v1670, %v1748
        %v1799 = vadd.f32 %v1671, %v1789
        %v1800 = vadd.f32 %v1672, %v1791
        %v1801 = vadd.f32 %v1673, %v1750
        %v1802 = vadd.f32 %v1674, %v1752
        %v1803 = vadd.f32 %v1675, %v1793
        %v1804 = vadd.f32 %v1676, %v1795
        %v1805 = vld [vmem:[%s3 + $0x38] sm:$0xf]
        %v1806 = vld [vmem:[%s3 + $0x3c] sm:$0xf]
        %v1809 = vunpack.c.l.b16 %v1805
        %v1810 = vunpack.c.l.b16 %v1806
        %v1811 = vpack.c.b16 %v1810, %v1809
        %1812 = vrot.lane.b32.xlu0 %v926, 68
        %v1813 = vpop.permute.xlu0 %1812
        %1814 = vrot.lane.b32.xlu0 %v927, 68
        %v1815 = vpop.permute.xlu0 %1814
        %1816 = vrot.lane.b32.xlu0 %v928, 68
        %v1817 = vpop.permute.xlu0 %1816
        %1818 = vrot.lane.b32.xlu0 %v929, 68
        %v1819 = vpop.permute.xlu0 %1818
        %vm1820 = vcmask 556032
        %v1821 = vsel %vm1820, %v1813, %v1815
        %v1822 = vsel %vm1820, %v1815, %v1817
        %v1823 = vsel %vm1820, %v1817, %v1819
        %v1825 = vsel %vm956, %v1811, 0
        %v1828 = vsel %vm960, %v1821, 0
        %v1831 = vsel %vm960, %v1822, 0
        %v1834 = vsel %vm960, %v1823, 0
        %v1837 = vsel %vm960, %v1819, 0
        %1839 = vmatprep.subr.bf16.mxu0 %v1831
        %1840 = vmatpush1.bf16.msra.mxu0 %v1828
        %1841 = vmatprep.subr.bf16.mxu0 0
        %1842 = vmatpush1.bf16.msra.mxu0 0
        %1843 = vmatprep.subr.bf16.mxu0 0
        %1844 = vmatpush1.bf16.msra.mxu0 0
        %1845 = vmatprep.subr.bf16.mxu0 0
        %1846 = vmatpush1.bf16.msra.mxu0 0
        %1847 = vmatprep.subr.bf16.mxu0 0
        %1848 = vmatpush1.bf16.msra.mxu0 0
        %1849 = vmatprep.subr.bf16.mxu0 0
        %1850 = vmatpush1.bf16.msra.mxu0 0
        %1851 = vmatprep.subr.bf16.mxu0 0
        %1852 = vmatpush1.bf16.msra.mxu0 0
        %1853 = vmatprep.subr.bf16.mxu0 0
        %1854 = vmatpush1.bf16.msra.mxu0 0
        %1855 = vmatprep.subr.bf16.mxu0 0
        %1856 = vmatpush1.bf16.msra.mxu0 0
        %1857 = vmatprep.subr.bf16.mxu0 0
        %1858 = vmatpush1.bf16.msra.mxu0 0
        %1859 = vmatprep.subr.bf16.mxu0 0
        %1860 = vmatpush1.bf16.msra.mxu0 0
        %1861 = vmatprep.subr.bf16.mxu0 0
        %1862 = vmatpush1.bf16.msra.mxu0 0
        %1863 = vmatprep.subr.bf16.mxu0 0
        %1864 = vmatpush1.bf16.msra.mxu0 0
        %1865 = vmatprep.subr.bf16.mxu0 0
        %1866 = vmatpush1.bf16.msra.mxu0 0
        %1867 = vmatprep.subr.bf16.mxu0 0
        %1868 = vmatpush1.bf16.msra.mxu0 0
        %1869 = vmatprep.subr.bf16.mxu0 0
        %1870 = vmatpush1.bf16.msra.mxu0 0
        %1871 = vmatprep.mubr.bf16.mxu0 0
        %1872 = vmatmul.mubr.bf16.gmra.mrb[0].mxu0 %v1825
        %v1873 = vpop.f32.mrb[0].mxu0
        %v1874 = vadd.f32 0.0, %v1873
        %v1875 = vpop.f32.mrb[0].mxu0
        %v1876 = vadd.f32 0.0, %v1875
        %v1877 = vpop.f32.mrb[0].mxu0
        %v1878 = vadd.f32 0.0, %v1877
        %v1879 = vpop.f32.mrb[0].mxu0
        %v1880 = vadd.f32 0.0, %v1879
        %1881 = vdwg.mxu0
        %1882 = vmatprep.subr.bf16.mxu0 %v1837
        %1883 = vmatpush1.bf16.msra.mxu0 %v1834
        %1884 = vmatprep.subr.bf16.mxu0 0
        %1885 = vmatpush1.bf16.msra.mxu0 0
        %1886 = vmatprep.subr.bf16.mxu0 0
        %1887 = vmatpush1.bf16.msra.mxu0 0
        %1888 = vmatprep.subr.bf16.mxu0 0
        %1889 = vmatpush1.bf16.msra.mxu0 0
        %1890 = vmatprep.subr.bf16.mxu0 0
        %1891 = vmatpush1.bf16.msra.mxu0 0
        %1892 = vmatprep.subr.bf16.mxu0 0
        %1893 = vmatpush1.bf16.msra.mxu0 0
        %1894 = vmatprep.subr.bf16.mxu0 0
        %1895 = vmatpush1.bf16.msra.mxu0 0
        %1896 = vmatprep.subr.bf16.mxu0 0
        %1897 = vmatpush1.bf16.msra.mxu0 0
        %1898 = vmatprep.subr.bf16.mxu0 0
        %1899 = vmatpush1.bf16.msra.mxu0 0
        %1900 = vmatprep.subr.bf16.mxu0 0
        %1901 = vmatpush1.bf16.msra.mxu0 0
        %1902 = vmatprep.subr.bf16.mxu0 0
        %1903 = vmatpush1.bf16.msra.mxu0 0
        %1904 = vmatprep.subr.bf16.mxu0 0
        %1905 = vmatpush1.bf16.msra.mxu0 0
        %1906 = vmatprep.subr.bf16.mxu0 0
        %1907 = vmatpush1.bf16.msra.mxu0 0
        %1908 = vmatprep.subr.bf16.mxu0 0
        %1909 = vmatpush1.bf16.msra.mxu0 0
        %1910 = vmatprep.subr.bf16.mxu0 0
        %1911 = vmatpush1.bf16.msra.mxu0 0
        %1912 = vmatprep.subr.bf16.mxu0 0
        %1913 = vmatpush1.bf16.msra.mxu0 0
        %1914 = vmatprep.mubr.bf16.mxu0 0
        %1915 = vmatmul.mubr.bf16.gmra.mrb[0].mxu0 %v1825
        %v1916 = vpop.f32.mrb[0].mxu0
        %v1917 = vadd.f32 0.0, %v1916
        %v1918 = vpop.f32.mrb[0].mxu0
        %v1919 = vadd.f32 0.0, %v1918
        %v1920 = vpop.f32.mrb[0].mxu0
        %v1921 = vadd.f32 0.0, %v1920
        %v1922 = vpop.f32.mrb[0].mxu0
        %v1923 = vadd.f32 0.0, %v1922
        %1924 = vdwg.mxu0
        %v1925 = vadd.f32 %v1797, %v1874
        %v1926 = vadd.f32 %v1798, %v1876
        %v1927 = vadd.f32 %v1799, %v1917
        %v1928 = vadd.f32 %v1800, %v1919
        %v1929 = vadd.f32 %v1801, %v1878
        %v1930 = vadd.f32 %v1802, %v1880
        %v1931 = vadd.f32 %v1803, %v1921
        %v1932 = vadd.f32 %v1804, %v1923
        %v1933 = vld [vmem:[%s3 + $0x40] sm:$0xf]
        %v1934 = vld [vmem:[%s3 + $0x44] sm:$0xf]
        %v1937 = vunpack.c.l.b16 %v1933
        %v1938 = vunpack.c.l.b16 %v1934
        %v1939 = vpack.c.b16 %v1938, %v1937
        %1940 = vrot.lane.b32.xlu0 %v926, 66
        %v1941 = vpop.permute.xlu0 %1940
        %1942 = vrot.lane.b32.xlu0 %v927, 66
        %v1943 = vpop.permute.xlu0 %1942
        %1944 = vrot.lane.b32.xlu0 %v928, 66
        %v1945 = vpop.permute.xlu0 %1944
        %1946 = vrot.lane.b32.xlu0 %v929, 66
        %v1947 = vpop.permute.xlu0 %1946
        %vm1948 = vcmask 539648
        %v1949 = vsel %vm1948, %v1941, %v1943
        %v1950 = vsel %vm1948, %v1943, %v1945
        %v1951 = vsel %vm1948, %v1945, %v1947
        %v1953 = vsel %vm956, %v1939, 0
        %v1956 = vsel %vm960, %v1949, 0
        %v1959 = vsel %vm960, %v1950, 0
        %v1962 = vsel %vm960, %v1951, 0
        %v1965 = vsel %vm960, %v1947, 0
        %1967 = vmatprep.subr.bf16.mxu0 %v1959
        %1968 = vmatpush1.bf16.msra.mxu0 %v1956
        %1969 = vmatprep.subr.bf16.mxu0 0
        %1970 = vmatpush1.bf16.msra.mxu0 0
        %1971 = vmatprep.subr.bf16.mxu0 0
        %1972 = vmatpush1.bf16.msra.mxu0 0
        %1973 = vmatprep.subr.bf16.mxu0 0
        %1974 = vmatpush1.bf16.msra.mxu0 0
        %1975 = vmatprep.subr.bf16.mxu0 0
        %1976 = vmatpush1.bf16.msra.mxu0 0
        %1977 = vmatprep.subr.bf16.mxu0 0
        %1978 = vmatpush1.bf16.msra.mxu0 0
        %1979 = vmatprep.subr.bf16.mxu0 0
        %1980 = vmatpush1.bf16.msra.mxu0 0
        %1981 = vmatprep.subr.bf16.mxu0 0
        %1982 = vmatpush1.bf16.msra.mxu0 0
        %1983 = vmatprep.subr.bf16.mxu0 0
        %1984 = vmatpush1.bf16.msra.mxu0 0
        %1985 = vmatprep.subr.bf16.mxu0 0
        %1986 = vmatpush1.bf16.msra.mxu0 0
        %1987 = vmatprep.subr.bf16.mxu0 0
        %1988 = vmatpush1.bf16.msra.mxu0 0
        %1989 = vmatprep.subr.bf16.mxu0 0
        %1990 = vmatpush1.bf16.msra.mxu0 0
        %1991 = vmatprep.subr.bf16.mxu0 0
        %1992 = vmatpush1.bf16.msra.mxu0 0
        %1993 = vmatprep.subr.bf16.mxu0 0
        %1994 = vmatpush1.bf16.msra.mxu0 0
        %1995 = vmatprep.subr.bf16.mxu0 0
        %1996 = vmatpush1.bf16.msra.mxu0 0
        %1997 = vmatprep.subr.bf16.mxu0 0
        %1998 = vmatpush1.bf16.msra.mxu0 0
        %1999 = vmatprep.mubr.bf16.mxu0 0
        %2000 = vmatmul.mubr.bf16.gmra.mrb[0].mxu0 %v1953
        %v2001 = vpop.f32.mrb[0].mxu0
        %v2002 = vadd.f32 0.0, %v2001
        %v2003 = vpop.f32.mrb[0].mxu0
        %v2004 = vadd.f32 0.0, %v2003
        %v2005 = vpop.f32.mrb[0].mxu0
        %v2006 = vadd.f32 0.0, %v2005
        %v2007 = vpop.f32.mrb[0].mxu0
        %v2008 = vadd.f32 0.0, %v2007
        %2009 = vdwg.mxu0
        %2010 = vmatprep.subr.bf16.mxu0 %v1965
        %2011 = vmatpush1.bf16.msra.mxu0 %v1962
        %2012 = vmatprep.subr.bf16.mxu0 0
        %2013 = vmatpush1.bf16.msra.mxu0 0
        %2014 = vmatprep.subr.bf16.mxu0 0
        %2015 = vmatpush1.bf16.msra.mxu0 0
        %2016 = vmatprep.subr.bf16.mxu0 0
        %2017 = vmatpush1.bf16.msra.mxu0 0
        %2018 = vmatprep.subr.bf16.mxu0 0
        %2019 = vmatpush1.bf16.msra.mxu0 0
        %2020 = vmatprep.subr.bf16.mxu0 0
        %2021 = vmatpush1.bf16.msra.mxu0 0
        %2022 = vmatprep.subr.bf16.mxu0 0
        %2023 = vmatpush1.bf16.msra.mxu0 0
        %2024 = vmatprep.subr.bf16.mxu0 0
        %2025 = vmatpush1.bf16.msra.mxu0 0
        %2026 = vmatprep.subr.bf16.mxu0 0
        %2027 = vmatpush1.bf16.msra.mxu0 0
        %2028 = vmatprep.subr.bf16.mxu0 0
        %2029 = vmatpush1.bf16.msra.mxu0 0
        %2030 = vmatprep.subr.bf16.mxu0 0
        %2031 = vmatpush1.bf16.msra.mxu0 0
        %2032 = vmatprep.subr.bf16.mxu0 0
        %2033 = vmatpush1.bf16.msra.mxu0 0
        %2034 = vmatprep.subr.bf16.mxu0 0
        %2035 = vmatpush1.bf16.msra.mxu0 0
        %2036 = vmatprep.subr.bf16.mxu0 0
        %2037 = vmatpush1.bf16.msra.mxu0 0
        %2038 = vmatprep.subr.bf16.mxu0 0
        %2039 = vmatpush1.bf16.msra.mxu0 0
        %2040 = vmatprep.subr.bf16.mxu0 0
        %2041 = vmatpush1.bf16.msra.mxu0 0
        %2042 = vmatprep.mubr.bf16.mxu0 0
        %2043 = vmatmul.mubr.bf16.gmra.mrb[0].mxu0 %v1953
        %v2044 = vpop.f32.mrb[0].mxu0
        %v2045 = vadd.f32 0.0, %v2044
        %v2046 = vpop.f32.mrb[0].mxu0
        %v2047 = vadd.f32 0.0, %v2046
        %v2048 = vpop.f32.mrb[0].mxu0
        %v2049 = vadd.f32 0.0, %v2048
        %v2050 = vpop.f32.mrb[0].mxu0
        %v2051 = vadd.f32 0.0, %v2050
        %2052 = vdwg.mxu0
        %v2053 = vadd.f32 %v1925, %v2002
        %v2054 = vadd.f32 %v1926, %v2004
        %v2055 = vadd.f32 %v1927, %v2045
        %v2056 = vadd.f32 %v1928, %v2047
        %v2057 = vadd.f32 %v1929, %v2006
        %v2058 = vadd.f32 %v1930, %v2008
        %v2059 = vadd.f32 %v1931, %v2049
        %v2060 = vadd.f32 %v1932, %v2051
        %v2061 = vld [vmem:[%s3 + $0x48] sm:$0xf]
        %v2062 = vld [vmem:[%s3 + $0x4c] sm:$0xf]
        %v2065 = vunpack.c.l.b16 %v2061
        %v2066 = vunpack.c.l.b16 %v2062
        %v2067 = vpack.c.b16 %v2066, %v2065
        %2068 = vrot.lane.b32.xlu0 %v926, 64
        %v2069 = vpop.permute.xlu0 %2068
        %2070 = vrot.lane.b32.xlu0 %v927, 64
        %v2071 = vpop.permute.xlu0 %2070
        %2072 = vrot.lane.b32.xlu0 %v928, 64
        %v2073 = vpop.permute.xlu0 %2072
        %2074 = vrot.lane.b32.xlu0 %v929, 64
        %v2075 = vpop.permute.xlu0 %2074
        %vm2076 = vcmask 523264
        %v2077 = vsel %vm2076, %v2069, %v2071
        %v2078 = vsel %vm2076, %v2071, %v2073
        %v2079 = vsel %vm2076, %v2073, %v2075
        %v2081 = vsel %vm956, %v2067, 0
        %v2084 = vsel %vm960, %v2077, 0
        %v2087 = vsel %vm960, %v2078, 0
        %v2090 = vsel %vm960, %v2079, 0
        %v2093 = vsel %vm960, %v2075, 0
        %2095 = vmatprep.subr.bf16.mxu0 %v2087
        %2096 = vmatpush1.bf16.msra.mxu0 %v2084
        %2097 = vmatprep.subr.bf16.mxu0 0
        %2098 = vmatpush1.bf16.msra.mxu0 0
        %2099 = vmatprep.subr.bf16.mxu0 0
        %2100 = vmatpush1.bf16.msra.mxu0 0
        %2101 = vmatprep.subr.bf16.mxu0 0
        %2102 = vmatpush1.bf16.msra.mxu0 0
        %2103 = vmatprep.subr.bf16.mxu0 0
        %2104 = vmatpush1.bf16.msra.mxu0 0
        %2105 = vmatprep.subr.bf16.mxu0 0
        %2106 = vmatpush1.bf16.msra.mxu0 0
        %2107 = vmatprep.subr.bf16.mxu0 0
        %2108 = vmatpush1.bf16.msra.mxu0 0
        %2109 = vmatprep.subr.bf16.mxu0 0
        %2110 = vmatpush1.bf16.msra.mxu0 0
        %2111 = vmatprep.subr.bf16.mxu0 0
        %2112 = vmatpush1.bf16.msra.mxu0 0
        %2113 = vmatprep.subr.bf16.mxu0 0
        %2114 = vmatpush1.bf16.msra.mxu0 0
        %2115 = vmatprep.subr.bf16.mxu0 0
        %2116 = vmatpush1.bf16.msra.mxu0 0
        %2117 = vmatprep.subr.bf16.mxu0 0
        %2118 = vmatpush1.bf16.msra.mxu0 0
        %2119 = vmatprep.subr.bf16.mxu0 0
        %2120 = vmatpush1.bf16.msra.mxu0 0
        %2121 = vmatprep.subr.bf16.mxu0 0
        %2122 = vmatpush1.bf16.msra.mxu0 0
        %2123 = vmatprep.subr.bf16.mxu0 0
        %2124 = vmatpush1.bf16.msra.mxu0 0
        %2125 = vmatprep.subr.bf16.mxu0 0
        %2126 = vmatpush1.bf16.msra.mxu0 0
        %2127 = vmatprep.mubr.bf16.mxu0 0
        %2128 = vmatmul.mubr.bf16.gmra.mrb[0].mxu0 %v2081
        %v2129 = vpop.f32.mrb[0].mxu0
        %v2130 = vadd.f32 0.0, %v2129
        %v2131 = vpop.f32.mrb[0].mxu0
        %v2132 = vadd.f32 0.0, %v2131
        %v2133 = vpop.f32.mrb[0].mxu0
        %v2134 = vadd.f32 0.0, %v2133
        %v2135 = vpop.f32.mrb[0].mxu0
        %v2136 = vadd.f32 0.0, %v2135
        %2137 = vdwg.mxu0
        %2138 = vmatprep.subr.bf16.mxu0 %v2093
        %2139 = vmatpush1.bf16.msra.mxu0 %v2090
        %2140 = vmatprep.subr.bf16.mxu0 0
        %2141 = vmatpush1.bf16.msra.mxu0 0
        %2142 = vmatprep.subr.bf16.mxu0 0
        %2143 = vmatpush1.bf16.msra.mxu0 0
        %2144 = vmatprep.subr.bf16.mxu0 0
        %2145 = vmatpush1.bf16.msra.mxu0 0
        %2146 = vmatprep.subr.bf16.mxu0 0
        %2147 = vmatpush1.bf16.msra.mxu0 0
        %2148 = vmatprep.subr.bf16.mxu0 0
        %2149 = vmatpush1.bf16.msra.mxu0 0
        %2150 = vmatprep.subr.bf16.mxu0 0
        %2151 = vmatpush1.bf16.msra.mxu0 0
        %2152 = vmatprep.subr.bf16.mxu0 0
        %2153 = vmatpush1.bf16.msra.mxu0 0
        %2154 = vmatprep.subr.bf16.mxu0 0
        %2155 = vmatpush1.bf16.msra.mxu0 0
        %2156 = vmatprep.subr.bf16.mxu0 0
        %2157 = vmatpush1.bf16.msra.mxu0 0
        %2158 = vmatprep.subr.bf16.mxu0 0
        %2159 = vmatpush1.bf16.msra.mxu0 0
        %2160 = vmatprep.subr.bf16.mxu0 0
        %2161 = vmatpush1.bf16.msra.mxu0 0
        %2162 = vmatprep.subr.bf16.mxu0 0
        %2163 = vmatpush1.bf16.msra.mxu0 0
        %2164 = vmatprep.subr.bf16.mxu0 0
        %2165 = vmatpush1.bf16.msra.mxu0 0
        %2166 = vmatprep.subr.bf16.mxu0 0
        %2167 = vmatpush1.bf16.msra.mxu0 0
        %2168 = vmatprep.subr.bf16.mxu0 0
        %2169 = vmatpush1.bf16.msra.mxu0 0
        %2170 = vmatprep.mubr.bf16.mxu0 0
        %2171 = vmatmul.mubr.bf16.gmra.mrb[0].mxu0 %v2081
        %v2172 = vpop.f32.mrb[0].mxu0
        %v2173 = vadd.f32 0.0, %v2172
        %v2174 = vpop.f32.mrb[0].mxu0
        %v2175 = vadd.f32 0.0, %v2174
        %v2176 = vpop.f32.mrb[0].mxu0
        %v2177 = vadd.f32 0.0, %v2176
        %v2178 = vpop.f32.mrb[0].mxu0
        %v2179 = vadd.f32 0.0, %v2178
        %2180 = vdwg.mxu0
        %v2181 = vadd.f32 %v2053, %v2130
        %v2182 = vadd.f32 %v2054, %v2132
        %v2183 = vadd.f32 %v2055, %v2173
        %v2184 = vadd.f32 %v2056, %v2175
        %v2185 = vadd.f32 %v2057, %v2134
        %v2186 = vadd.f32 %v2058, %v2136
        %v2187 = vadd.f32 %v2059, %v2177
        %v2188 = vadd.f32 %v2060, %v2179
        %v2189 = vld [vmem:[%s3 + $0x50] sm:$0xf]
        %v2190 = vld [vmem:[%s3 + $0x54] sm:$0xf]
        %v2193 = vunpack.c.l.b16 %v2189
        %v2194 = vunpack.c.l.b16 %v2190
        %v2195 = vpack.c.b16 %v2194, %v2193
        %2197 = vrot.lane.b32.xlu0 %v926, 16
        %v2198 = vpop.permute.xlu0 %2197
        %2199 = vrot.lane.b32.xlu0 %v927, 16
        %v2200 = vpop.permute.xlu0 %2199
        %2201 = vrot.lane.b32.xlu0 %v928, 16
        %v2202 = vpop.permute.xlu0 %2201
        %2203 = vrot.lane.b32.xlu0 %v929, 16
        %v2204 = vpop.permute.xlu0 %2203
        %2205 = vrot.lane.b32.xlu0 %v930, 16
        %v2206 = vpop.permute.xlu0 %2205
        %vm2207 = vcmask 130048
        %v2208 = vsel %vm2207, %v2198, %v2200
        %v2209 = vsel %vm2207, %v2200, %v2202
        %v2210 = vsel %vm2207, %v2202, %v2204
        %v2211 = vsel %vm2207, %v2204, %v2206
        %v2213 = vsel %vm956, %v2195, 0
        %v2216 = vsel %vm960, %v2208, 0
        %v2219 = vsel %vm960, %v2209, 0
        %v2222 = vsel %vm960, %v2210, 0
        %v2225 = vsel %vm960, %v2211, 0
        %2227 = vmatprep.subr.bf16.mxu0 %v2219
        %2228 = vmatpush1.bf16.msra.mxu0 %v2216
        %2229 = vmatprep.subr.bf16.mxu0 0
        %2230 = vmatpush1.bf16.msra.mxu0 0
        %2231 = vmatprep.subr.bf16.mxu0 0
        %2232 = vmatpush1.bf16.msra.mxu0 0
        %2233 = vmatprep.subr.bf16.mxu0 0
        %2234 = vmatpush1.bf16.msra.mxu0 0
        %2235 = vmatprep.subr.bf16.mxu0 0
        %2236 = vmatpush1.bf16.msra.mxu0 0
        %2237 = vmatprep.subr.bf16.mxu0 0
        %2238 = vmatpush1.bf16.msra.mxu0 0
        %2239 = vmatprep.subr.bf16.mxu0 0
        %2240 = vmatpush1.bf16.msra.mxu0 0
        %2241 = vmatprep.subr.bf16.mxu0 0
        %2242 = vmatpush1.bf16.msra.mxu0 0
        %2243 = vmatprep.subr.bf16.mxu0 0
        %2244 = vmatpush1.bf16.msra.mxu0 0
        %2245 = vmatprep.subr.bf16.mxu0 0
        %2246 = vmatpush1.bf16.msra.mxu0 0
        %2247 = vmatprep.subr.bf16.mxu0 0
        %2248 = vmatpush1.bf16.msra.mxu0 0
        %2249 = vmatprep.subr.bf16.mxu0 0
        %2250 = vmatpush1.bf16.msra.mxu0 0
        %2251 = vmatprep.subr.bf16.mxu0 0
        %2252 = vmatpush1.bf16.msra.mxu0 0
        %2253 = vmatprep.subr.bf16.mxu0 0
        %2254 = vmatpush1.bf16.msra.mxu0 0
        %2255 = vmatprep.subr.bf16.mxu0 0
        %2256 = vmatpush1.bf16.msra.mxu0 0
        %2257 = vmatprep.subr.bf16.mxu0 0
        %2258 = vmatpush1.bf16.msra.mxu0 0
        %2259 = vmatprep.mubr.bf16.mxu0 0
        %2260 = vmatmul.mubr.bf16.gmra.mrb[0].mxu0 %v2213
        %v2261 = vpop.f32.mrb[0].mxu0
        %v2262 = vadd.f32 0.0, %v2261
        %v2263 = vpop.f32.mrb[0].mxu0
        %v2264 = vadd.f32 0.0, %v2263
        %v2265 = vpop.f32.mrb[0].mxu0
        %v2266 = vadd.f32 0.0, %v2265
        %v2267 = vpop.f32.mrb[0].mxu0
        %v2268 = vadd.f32 0.0, %v2267
        %2269 = vdwg.mxu0
        %2270 = vmatprep.subr.bf16.mxu0 %v2225
        %2271 = vmatpush1.bf16.msra.mxu0 %v2222
        %2272 = vmatprep.subr.bf16.mxu0 0
        %2273 = vmatpush1.bf16.msra.mxu0 0
        %2274 = vmatprep.subr.bf16.mxu0 0
        %2275 = vmatpush1.bf16.msra.mxu0 0
        %2276 = vmatprep.subr.bf16.mxu0 0
        %2277 = vmatpush1.bf16.msra.mxu0 0
        %2278 = vmatprep.subr.bf16.mxu0 0
        %2279 = vmatpush1.bf16.msra.mxu0 0
        %2280 = vmatprep.subr.bf16.mxu0 0
        %2281 = vmatpush1.bf16.msra.mxu0 0
        %2282 = vmatprep.subr.bf16.mxu0 0
        %2283 = vmatpush1.bf16.msra.mxu0 0
        %2284 = vmatprep.subr.bf16.mxu0 0
        %2285 = vmatpush1.bf16.msra.mxu0 0
        %2286 = vmatprep.subr.bf16.mxu0 0
        %2287 = vmatpush1.bf16.msra.mxu0 0
        %2288 = vmatprep.subr.bf16.mxu0 0
        %2289 = vmatpush1.bf16.msra.mxu0 0
        %2290 = vmatprep.subr.bf16.mxu0 0
        %2291 = vmatpush1.bf16.msra.mxu0 0
        %2292 = vmatprep.subr.bf16.mxu0 0
        %2293 = vmatpush1.bf16.msra.mxu0 0
        %2294 = vmatprep.subr.bf16.mxu0 0
        %2295 = vmatpush1.bf16.msra.mxu0 0
        %2296 = vmatprep.subr.bf16.mxu0 0
        %2297 = vmatpush1.bf16.msra.mxu0 0
        %2298 = vmatprep.subr.bf16.mxu0 0
        %2299 = vmatpush1.bf16.msra.mxu0 0
        %2300 = vmatprep.subr.bf16.mxu0 0
        %2301 = vmatpush1.bf16.msra.mxu0 0
        %2302 = vmatprep.mubr.bf16.mxu0 0
        %2303 = vmatmul.mubr.bf16.gmra.mrb[0].mxu0 %v2213
        %v2304 = vpop.f32.mrb[0].mxu0
        %v2305 = vadd.f32 0.0, %v2304
        %v2306 = vpop.f32.mrb[0].mxu0
        %v2307 = vadd.f32 0.0, %v2306
        %v2308 = vpop.f32.mrb[0].mxu0
        %v2309 = vadd.f32 0.0, %v2308
        %v2310 = vpop.f32.mrb[0].mxu0
        %v2311 = vadd.f32 0.0, %v2310
        %2312 = vdwg.mxu0
        %v2313 = vadd.f32 %v2181, %v2262
        %v2314 = vadd.f32 %v2182, %v2264
        %v2315 = vadd.f32 %v2183, %v2305
        %v2316 = vadd.f32 %v2184, %v2307
        %v2317 = vadd.f32 %v2185, %v2266
        %v2318 = vadd.f32 %v2186, %v2268
        %v2319 = vadd.f32 %v2187, %v2309
        %v2320 = vadd.f32 %v2188, %v2311
        %v2321 = vld [vmem:[%s3 + $0x58] sm:$0xf]
        %v2322 = vld [vmem:[%s3 + $0x5c] sm:$0xf]
        %v2325 = vunpack.c.l.b16 %v2321
        %v2326 = vunpack.c.l.b16 %v2322
        %v2327 = vpack.c.b16 %v2326, %v2325
        %2328 = vrot.lane.b32.xlu0 %v926, 14
        %v2329 = vpop.permute.xlu0 %2328
        %2330 = vrot.lane.b32.xlu0 %v927, 14
        %v2331 = vpop.permute.xlu0 %2330
        %2332 = vrot.lane.b32.xlu0 %v928, 14
        %v2333 = vpop.permute.xlu0 %2332
        %2334 = vrot.lane.b32.xlu0 %v929, 14
        %v2335 = vpop.permute.xlu0 %2334
        %2336 = vrot.lane.b32.xlu0 %v930, 14
        %v2337 = vpop.permute.xlu0 %2336
        %vm2338 = vcmask 113664
        %v2339 = vsel %vm2338, %v2329, %v2331
        %v2340 = vsel %vm2338, %v2331, %v2333
        %v2341 = vsel %vm2338, %v2333, %v2335
        %v2342 = vsel %vm2338, %v2335, %v2337
        %v2344 = vsel %vm956, %v2327, 0
        %v2347 = vsel %vm960, %v2339, 0
        %v2350 = vsel %vm960, %v2340, 0
        %v2353 = vsel %vm960, %v2341, 0
        %v2356 = vsel %vm960, %v2342, 0
        %2358 = vmatprep.subr.bf16.mxu0 %v2350
        %2359 = vmatpush1.bf16.msra.mxu0 %v2347
        %2360 = vmatprep.subr.bf16.mxu0 0
        %2361 = vmatpush1.bf16.msra.mxu0 0
        %2362 = vmatprep.subr.bf16.mxu0 0
        %2363 = vmatpush1.bf16.msra.mxu0 0
        %2364 = vmatprep.subr.bf16.mxu0 0
        %2365 = vmatpush1.bf16.msra.mxu0 0
        %2366 = vmatprep.subr.bf16.mxu0 0
        %2367 = vmatpush1.bf16.msra.mxu0 0
        %2368 = vmatprep.subr.bf16.mxu0 0
        %2369 = vmatpush1.bf16.msra.mxu0 0
        %2370 = vmatprep.subr.bf16.mxu0 0
        %2371 = vmatpush1.bf16.msra.mxu0 0
        %2372 = vmatprep.subr.bf16.mxu0 0
        %2373 = vmatpush1.bf16.msra.mxu0 0
        %2374 = vmatprep.subr.bf16.mxu0 0
        %2375 = vmatpush1.bf16.msra.mxu0 0
        %2376 = vmatprep.subr.bf16.mxu0 0
        %2377 = vmatpush1.bf16.msra.mxu0 0
        %2378 = vmatprep.subr.bf16.mxu0 0
        %2379 = vmatpush1.bf16.msra.mxu0 0
        %2380 = vmatprep.subr.bf16.mxu0 0
        %2381 = vmatpush1.bf16.msra.mxu0 0
        %2382 = vmatprep.subr.bf16.mxu0 0
        %2383 = vmatpush1.bf16.msra.mxu0 0
        %2384 = vmatprep.subr.bf16.mxu0 0
        %2385 = vmatpush1.bf16.msra.mxu0 0
        %2386 = vmatprep.subr.bf16.mxu0 0
        %2387 = vmatpush1.bf16.msra.mxu0 0
        %2388 = vmatprep.subr.bf16.mxu0 0
        %2389 = vmatpush1.bf16.msra.mxu0 0
        %2390 = vmatprep.mubr.bf16.mxu0 0
        %2391 = vmatmul.mubr.bf16.gmra.mrb[0].mxu0 %v2344
        %v2392 = vpop.f32.mrb[0].mxu0
        %v2393 = vadd.f32 0.0, %v2392
        %v2394 = vpop.f32.mrb[0].mxu0
        %v2395 = vadd.f32 0.0, %v2394
        %v2396 = vpop.f32.mrb[0].mxu0
        %v2397 = vadd.f32 0.0, %v2396
        %v2398 = vpop.f32.mrb[0].mxu0
        %v2399 = vadd.f32 0.0, %v2398
        %2400 = vdwg.mxu0
        %2401 = vmatprep.subr.bf16.mxu0 %v2356
        %2402 = vmatpush1.bf16.msra.mxu0 %v2353
        %2403 = vmatprep.subr.bf16.mxu0 0
        %2404 = vmatpush1.bf16.msra.mxu0 0
        %2405 = vmatprep.subr.bf16.mxu0 0
        %2406 = vmatpush1.bf16.msra.mxu0 0
        %2407 = vmatprep.subr.bf16.mxu0 0
        %2408 = vmatpush1.bf16.msra.mxu0 0
        %2409 = vmatprep.subr.bf16.mxu0 0
        %2410 = vmatpush1.bf16.msra.mxu0 0
        %2411 = vmatprep.subr.bf16.mxu0 0
        %2412 = vmatpush1.bf16.msra.mxu0 0
        %2413 = vmatprep.subr.bf16.mxu0 0
        %2414 = vmatpush1.bf16.msra.mxu0 0
        %2415 = vmatprep.subr.bf16.mxu0 0
        %2416 = vmatpush1.bf16.msra.mxu0 0
        %2417 = vmatprep.subr.bf16.mxu0 0
        %2418 = vmatpush1.bf16.msra.mxu0 0
        %2419 = vmatprep.subr.bf16.mxu0 0
        %2420 = vmatpush1.bf16.msra.mxu0 0
        %2421 = vmatprep.subr.bf16.mxu0 0
        %2422 = vmatpush1.bf16.msra.mxu0 0
        %2423 = vmatprep.subr.bf16.mxu0 0
        %2424 = vmatpush1.bf16.msra.mxu0 0
        %2425 = vmatprep.subr.bf16.mxu0 0
        %2426 = vmatpush1.bf16.msra.mxu0 0
        %2427 = vmatprep.subr.bf16.mxu0 0
        %2428 = vmatpush1.bf16.msra.mxu0 0
        %2429 = vmatprep.subr.bf16.mxu0 0
        %2430 = vmatpush1.bf16.msra.mxu0 0
        %2431 = vmatprep.subr.bf16.mxu0 0
        %2432 = vmatpush1.bf16.msra.mxu0 0
        %2433 = vmatprep.mubr.bf16.mxu0 0
        %2434 = vmatmul.mubr.bf16.gmra.mrb[0].mxu0 %v2344
        %v2435 = vpop.f32.mrb[0].mxu0
        %v2436 = vadd.f32 0.0, %v2435
        %v2437 = vpop.f32.mrb[0].mxu0
        %v2438 = vadd.f32 0.0, %v2437
        %v2439 = vpop.f32.mrb[0].mxu0
        %v2440 = vadd.f32 0.0, %v2439
        %v2441 = vpop.f32.mrb[0].mxu0
        %v2442 = vadd.f32 0.0, %v2441
        %2443 = vdwg.mxu0
        %v2444 = vadd.f32 %v2313, %v2393
        %v2445 = vadd.f32 %v2314, %v2395
        %v2446 = vadd.f32 %v2315, %v2436
        %v2447 = vadd.f32 %v2316, %v2438
        %v2448 = vadd.f32 %v2317, %v2397
        %v2449 = vadd.f32 %v2318, %v2399
        %v2450 = vadd.f32 %v2319, %v2440
        %v2451 = vadd.f32 %v2320, %v2442
        %v2452 = vld [vmem:[%s3 + $0x60] sm:$0xf]
        %v2453 = vld [vmem:[%s3 + $0x64] sm:$0xf]
        %v2456 = vunpack.c.l.b16 %v2452
        %v2457 = vunpack.c.l.b16 %v2453
        %v2458 = vpack.c.b16 %v2457, %v2456
        %2459 = vrot.lane.b32.xlu0 %v926, 12
        %v2460 = vpop.permute.xlu0 %2459
        %2461 = vrot.lane.b32.xlu0 %v927, 12
        %v2462 = vpop.permute.xlu0 %2461
        %2463 = vrot.lane.b32.xlu0 %v928, 12
        %v2464 = vpop.permute.xlu0 %2463
        %2465 = vrot.lane.b32.xlu0 %v929, 12
        %v2466 = vpop.permute.xlu0 %2465
        %2467 = vrot.lane.b32.xlu0 %v930, 12
        %v2468 = vpop.permute.xlu0 %2467
        %vm2469 = vcmask 97280
        %v2470 = vsel %vm2469, %v2460, %v2462
        %v2471 = vsel %vm2469, %v2462, %v2464
        %v2472 = vsel %vm2469, %v2464, %v2466
        %v2473 = vsel %vm2469, %v2466, %v2468
        %v2475 = vsel %vm956, %v2458, 0
        %v2478 = vsel %vm960, %v2470, 0
        %v2481 = vsel %vm960, %v2471, 0
        %v2484 = vsel %vm960, %v2472, 0
        %v2487 = vsel %vm960, %v2473, 0
        %2489 = vmatprep.subr.bf16.mxu0 %v2481
        %2490 = vmatpush1.bf16.msra.mxu0 %v2478
        %2491 = vmatprep.subr.bf16.mxu0 0
        %2492 = vmatpush1.bf16.msra.mxu0 0
        %2493 = vmatprep.subr.bf16.mxu0 0
        %2494 = vmatpush1.bf16.msra.mxu0 0
        %2495 = vmatprep.subr.bf16.mxu0 0
        %2496 = vmatpush1.bf16.msra.mxu0 0
        %2497 = vmatprep.subr.bf16.mxu0 0
        %2498 = vmatpush1.bf16.msra.mxu0 0
        %2499 = vmatprep.subr.bf16.mxu0 0
        %2500 = vmatpush1.bf16.msra.mxu0 0
        %2501 = vmatprep.subr.bf16.mxu0 0
        %2502 = vmatpush1.bf16.msra.mxu0 0
        %2503 = vmatprep.subr.bf16.mxu0 0
        %2504 = vmatpush1.bf16.msra.mxu0 0
        %2505 = vmatprep.subr.bf16.mxu0 0
        %2506 = vmatpush1.bf16.msra.mxu0 0
        %2507 = vmatprep.subr.bf16.mxu0 0
        %2508 = vmatpush1.bf16.msra.mxu0 0
        %2509 = vmatprep.subr.bf16.mxu0 0
        %2510 = vmatpush1.bf16.msra.mxu0 0
        %2511 = vmatprep.subr.bf16.mxu0 0
        %2512 = vmatpush1.bf16.msra.mxu0 0
        %2513 = vmatprep.subr.bf16.mxu0 0
        %2514 = vmatpush1.bf16.msra.mxu0 0
        %2515 = vmatprep.subr.bf16.mxu0 0
        %2516 = vmatpush1.bf16.msra.mxu0 0
        %2517 = vmatprep.subr.bf16.mxu0 0
        %2518 = vmatpush1.bf16.msra.mxu0 0
        %2519 = vmatprep.subr.bf16.mxu0 0
        %2520 = vmatpush1.bf16.msra.mxu0 0
        %2521 = vmatprep.mubr.bf16.mxu0 0
        %2522 = vmatmul.mubr.bf16.gmra.mrb[0].mxu0 %v2475
        %v2523 = vpop.f32.mrb[0].mxu0
        %v2524 = vadd.f32 0.0, %v2523
        %v2525 = vpop.f32.mrb[0].mxu0
        %v2526 = vadd.f32 0.0, %v2525
        %v2527 = vpop.f32.mrb[0].mxu0
        %v2528 = vadd.f32 0.0, %v2527
        %v2529 = vpop.f32.mrb[0].mxu0
        %v2530 = vadd.f32 0.0, %v2529
        %2531 = vdwg.mxu0
        %2532 = vmatprep.subr.bf16.mxu0 %v2487
        %2533 = vmatpush1.bf16.msra.mxu0 %v2484
        %2534 = vmatprep.subr.bf16.mxu0 0
        %2535 = vmatpush1.bf16.msra.mxu0 0
        %2536 = vmatprep.subr.bf16.mxu0 0
        %2537 = vmatpush1.bf16.msra.mxu0 0
        %2538 = vmatprep.subr.bf16.mxu0 0
        %2539 = vmatpush1.bf16.msra.mxu0 0
        %2540 = vmatprep.subr.bf16.mxu0 0
        %2541 = vmatpush1.bf16.msra.mxu0 0
        %2542 = vmatprep.subr.bf16.mxu0 0
        %2543 = vmatpush1.bf16.msra.mxu0 0
        %2544 = vmatprep.subr.bf16.mxu0 0
        %2545 = vmatpush1.bf16.msra.mxu0 0
        %2546 = vmatprep.subr.bf16.mxu0 0
        %2547 = vmatpush1.bf16.msra.mxu0 0
        %2548 = vmatprep.subr.bf16.mxu0 0
        %2549 = vmatpush1.bf16.msra.mxu0 0
        %2550 = vmatprep.subr.bf16.mxu0 0
        %2551 = vmatpush1.bf16.msra.mxu0 0
        %2552 = vmatprep.subr.bf16.mxu0 0
        %2553 = vmatpush1.bf16.msra.mxu0 0
        %2554 = vmatprep.subr.bf16.mxu0 0
        %2555 = vmatpush1.bf16.msra.mxu0 0
        %2556 = vmatprep.subr.bf16.mxu0 0
        %2557 = vmatpush1.bf16.msra.mxu0 0
        %2558 = vmatprep.subr.bf16.mxu0 0
        %2559 = vmatpush1.bf16.msra.mxu0 0
        %2560 = vmatprep.subr.bf16.mxu0 0
        %2561 = vmatpush1.bf16.msra.mxu0 0
        %2562 = vmatprep.subr.bf16.mxu0 0
        %2563 = vmatpush1.bf16.msra.mxu0 0
        %2564 = vmatprep.mubr.bf16.mxu0 0
        %2565 = vmatmul.mubr.bf16.gmra.mrb[0].mxu0 %v2475
        %v2566 = vpop.f32.mrb[0].mxu0
        %v2567 = vadd.f32 0.0, %v2566
        %v2568 = vpop.f32.mrb[0].mxu0
        %v2569 = vadd.f32 0.0, %v2568
        %v2570 = vpop.f32.mrb[0].mxu0
        %v2571 = vadd.f32 0.0, %v2570
        %v2572 = vpop.f32.mrb[0].mxu0
        %v2573 = vadd.f32 0.0, %v2572
        %2574 = vdwg.mxu0
        %v2575 = vadd.f32 %v2444, %v2524
        %v2576 = vadd.f32 %v2445, %v2526
        %v2577 = vadd.f32 %v2446, %v2567
        %v2578 = vadd.f32 %v2447, %v2569
        %v2579 = vadd.f32 %v2448, %v2528
        %v2580 = vadd.f32 %v2449, %v2530
        %v2581 = vadd.f32 %v2450, %v2571
        %v2582 = vadd.f32 %v2451, %v2573
        %v2583 = vld [vmem:[%s3 + $0x68] sm:$0xf]
        %v2584 = vld [vmem:[%s3 + $0x6c] sm:$0xf]
        %v2587 = vunpack.c.l.b16 %v2583
        %v2588 = vunpack.c.l.b16 %v2584
        %v2589 = vpack.c.b16 %v2588, %v2587
        %2590 = vrot.lane.b32.xlu0 %v926, 10
        %v2591 = vpop.permute.xlu0 %2590
        %2592 = vrot.lane.b32.xlu0 %v927, 10
        %v2593 = vpop.permute.xlu0 %2592
        %2594 = vrot.lane.b32.xlu0 %v928, 10
        %v2595 = vpop.permute.xlu0 %2594
        %2596 = vrot.lane.b32.xlu0 %v929, 10
        %v2597 = vpop.permute.xlu0 %2596
        %2598 = vrot.lane.b32.xlu0 %v930, 10
        %v2599 = vpop.permute.xlu0 %2598
        %vm2600 = vcmask 80896
        %v2601 = vsel %vm2600, %v2591, %v2593
        %v2602 = vsel %vm2600, %v2593, %v2595
        %v2603 = vsel %vm2600, %v2595, %v2597
        %v2604 = vsel %vm2600, %v2597, %v2599
        %v2606 = vsel %vm956, %v2589, 0
        %v2609 = vsel %vm960, %v2601, 0
        %v2612 = vsel %vm960, %v2602, 0
        %v2615 = vsel %vm960, %v2603, 0
        %v2618 = vsel %vm960, %v2604, 0
        %2620 = vmatprep.subr.bf16.mxu0 %v2612
        %2621 = vmatpush1.bf16.msra.mxu0 %v2609
        %2622 = vmatprep.subr.bf16.mxu0 0
        %2623 = vmatpush1.bf16.msra.mxu0 0
        %2624 = vmatprep.subr.bf16.mxu0 0
        %2625 = vmatpush1.bf16.msra.mxu0 0
        %2626 = vmatprep.subr.bf16.mxu0 0
        %2627 = vmatpush1.bf16.msra.mxu0 0
        %2628 = vmatprep.subr.bf16.mxu0 0
        %2629 = vmatpush1.bf16.msra.mxu0 0
        %2630 = vmatprep.subr.bf16.mxu0 0
        %2631 = vmatpush1.bf16.msra.mxu0 0
        %2632 = vmatprep.subr.bf16.mxu0 0
        %2633 = vmatpush1.bf16.msra.mxu0 0
        %2634 = vmatprep.subr.bf16.mxu0 0
        %2635 = vmatpush1.bf16.msra.mxu0 0
        %2636 = vmatprep.subr.bf16.mxu0 0
        %2637 = vmatpush1.bf16.msra.mxu0 0
        %2638 = vmatprep.subr.bf16.mxu0 0
        %2639 = vmatpush1.bf16.msra.mxu0 0
        %2640 = vmatprep.subr.bf16.mxu0 0
        %2641 = vmatpush1.bf16.msra.mxu0 0
        %2642 = vmatprep.subr.bf16.mxu0 0
        %2643 = vmatpush1.bf16.msra.mxu0 0
        %2644 = vmatprep.subr.bf16.mxu0 0
        %2645 = vmatpush1.bf16.msra.mxu0 0
        %2646 = vmatprep.subr.bf16.mxu0 0
        %2647 = vmatpush1.bf16.msra.mxu0 0
        %2648 = vmatprep.subr.bf16.mxu0 0
        %2649 = vmatpush1.bf16.msra.mxu0 0
        %2650 = vmatprep.subr.bf16.mxu0 0
        %2651 = vmatpush1.bf16.msra.mxu0 0
        %2652 = vmatprep.mubr.bf16.mxu0 0
        %2653 = vmatmul.mubr.bf16.gmra.mrb[0].mxu0 %v2606
        %v2654 = vpop.f32.mrb[0].mxu0
        %v2655 = vadd.f32 0.0, %v2654
        %v2656 = vpop.f32.mrb[0].mxu0
        %v2657 = vadd.f32 0.0, %v2656
        %v2658 = vpop.f32.mrb[0].mxu0
        %v2659 = vadd.f32 0.0, %v2658
        %v2660 = vpop.f32.mrb[0].mxu0
        %v2661 = vadd.f32 0.0, %v2660
        %2662 = vdwg.mxu0
        %2663 = vmatprep.subr.bf16.mxu0 %v2618
        %2664 = vmatpush1.bf16.msra.mxu0 %v2615
        %2665 = vmatprep.subr.bf16.mxu0 0
        %2666 = vmatpush1.bf16.msra.mxu0 0
        %2667 = vmatprep.subr.bf16.mxu0 0
        %2668 = vmatpush1.bf16.msra.mxu0 0
        %2669 = vmatprep.subr.bf16.mxu0 0
        %2670 = vmatpush1.bf16.msra.mxu0 0
        %2671 = vmatprep.subr.bf16.mxu0 0
        %2672 = vmatpush1.bf16.msra.mxu0 0
        %2673 = vmatprep.subr.bf16.mxu0 0
        %2674 = vmatpush1.bf16.msra.mxu0 0
        %2675 = vmatprep.subr.bf16.mxu0 0
        %2676 = vmatpush1.bf16.msra.mxu0 0
        %2677 = vmatprep.subr.bf16.mxu0 0
        %2678 = vmatpush1.bf16.msra.mxu0 0
        %2679 = vmatprep.subr.bf16.mxu0 0
        %2680 = vmatpush1.bf16.msra.mxu0 0
        %2681 = vmatprep.subr.bf16.mxu0 0
        %2682 = vmatpush1.bf16.msra.mxu0 0
        %2683 = vmatprep.subr.bf16.mxu0 0
        %2684 = vmatpush1.bf16.msra.mxu0 0
        %2685 = vmatprep.subr.bf16.mxu0 0
        %2686 = vmatpush1.bf16.msra.mxu0 0
        %2687 = vmatprep.subr.bf16.mxu0 0
        %2688 = vmatpush1.bf16.msra.mxu0 0
        %2689 = vmatprep.subr.bf16.mxu0 0
        %2690 = vmatpush1.bf16.msra.mxu0 0
        %2691 = vmatprep.subr.bf16.mxu0 0
        %2692 = vmatpush1.bf16.msra.mxu0 0
        %2693 = vmatprep.subr.bf16.mxu0 0
        %2694 = vmatpush1.bf16.msra.mxu0 0
        %2695 = vmatprep.mubr.bf16.mxu0 0
        %2696 = vmatmul.mubr.bf16.gmra.mrb[0].mxu0 %v2606
        %v2697 = vpop.f32.mrb[0].mxu0
        %v2698 = vadd.f32 0.0, %v2697
        %v2699 = vpop.f32.mrb[0].mxu0
        %v2700 = vadd.f32 0.0, %v2699
        %v2701 = vpop.f32.mrb[0].mxu0
        %v2702 = vadd.f32 0.0, %v2701
        %v2703 = vpop.f32.mrb[0].mxu0
        %v2704 = vadd.f32 0.0, %v2703
        %2705 = vdwg.mxu0
        %v2706 = vadd.f32 %v2575, %v2655
        %v2707 = vadd.f32 %v2576, %v2657
        %v2708 = vadd.f32 %v2577, %v2698
        %v2709 = vadd.f32 %v2578, %v2700
        %v2710 = vadd.f32 %v2579, %v2659
        %v2711 = vadd.f32 %v2580, %v2661
        %v2712 = vadd.f32 %v2581, %v2702
        %v2713 = vadd.f32 %v2582, %v2704
        %v2714 = vld [vmem:[%s3 + $0x70] sm:$0xf]
        %v2715 = vld [vmem:[%s3 + $0x74] sm:$0xf]
        %v2718 = vunpack.c.l.b16 %v2714
        %v2719 = vunpack.c.l.b16 %v2715
        %v2720 = vpack.c.b16 %v2719, %v2718
        %2721 = vrot.lane.b32.xlu0 %v926, 8
        %v2722 = vpop.permute.xlu0 %2721
        %2723 = vrot.lane.b32.xlu0 %v927, 8
        %v2724 = vpop.permute.xlu0 %2723
        %2725 = vrot.lane.b32.xlu0 %v928, 8
        %v2726 = vpop.permute.xlu0 %2725
        %2727 = vrot.lane.b32.xlu0 %v929, 8
        %v2728 = vpop.permute.xlu0 %2727
        %2729 = vrot.lane.b32.xlu0 %v930, 8
        %v2730 = vpop.permute.xlu0 %2729
        %vm2731 = vcmask 64512
        %v2732 = vsel %vm2731, %v2722, %v2724
        %v2733 = vsel %vm2731, %v2724, %v2726
        %v2734 = vsel %vm2731, %v2726, %v2728
        %v2735 = vsel %vm2731, %v2728, %v2730
        %v2737 = vsel %vm956, %v2720, 0
        %v2740 = vsel %vm960, %v2732, 0
        %v2743 = vsel %vm960, %v2733, 0
        %v2746 = vsel %vm960, %v2734, 0
        %v2749 = vsel %vm960, %v2735, 0
        %2751 = vmatprep.subr.bf16.mxu0 %v2743
        %2752 = vmatpush1.bf16.msra.mxu0 %v2740
        %2753 = vmatprep.subr.bf16.mxu0 0
        %2754 = vmatpush1.bf16.msra.mxu0 0
        %2755 = vmatprep.subr.bf16.mxu0 0
        %2756 = vmatpush1.bf16.msra.mxu0 0
        %2757 = vmatprep.subr.bf16.mxu0 0
        %2758 = vmatpush1.bf16.msra.mxu0 0
        %2759 = vmatprep.subr.bf16.mxu0 0
        %2760 = vmatpush1.bf16.msra.mxu0 0
        %2761 = vmatprep.subr.bf16.mxu0 0
        %2762 = vmatpush1.bf16.msra.mxu0 0
        %2763 = vmatprep.subr.bf16.mxu0 0
        %2764 = vmatpush1.bf16.msra.mxu0 0
        %2765 = vmatprep.subr.bf16.mxu0 0
        %2766 = vmatpush1.bf16.msra.mxu0 0
        %2767 = vmatprep.subr.bf16.mxu0 0
        %2768 = vmatpush1.bf16.msra.mxu0 0
        %2769 = vmatprep.subr.bf16.mxu0 0
        %2770 = vmatpush1.bf16.msra.mxu0 0
        %2771 = vmatprep.subr.bf16.mxu0 0
        %2772 = vmatpush1.bf16.msra.mxu0 0
        %2773 = vmatprep.subr.bf16.mxu0 0
        %2774 = vmatpush1.bf16.msra.mxu0 0
        %2775 = vmatprep.subr.bf16.mxu0 0
        %2776 = vmatpush1.bf16.msra.mxu0 0
        %2777 = vmatprep.subr.bf16.mxu0 0
        %2778 = vmatpush1.bf16.msra.mxu0 0
        %2779 = vmatprep.subr.bf16.mxu0 0
        %2780 = vmatpush1.bf16.msra.mxu0 0
        %2781 = vmatprep.subr.bf16.mxu0 0
        %2782 = vmatpush1.bf16.msra.mxu0 0
        %2783 = vmatprep.mubr.bf16.mxu0 0
        %2784 = vmatmul.mubr.bf16.gmra.mrb[0].mxu0 %v2737
        %v2785 = vpop.f32.mrb[0].mxu0
        %v2786 = vadd.f32 0.0, %v2785
        %v2787 = vpop.f32.mrb[0].mxu0
        %v2788 = vadd.f32 0.0, %v2787
        %v2789 = vpop.f32.mrb[0].mxu0
        %v2790 = vadd.f32 0.0, %v2789
        %v2791 = vpop.f32.mrb[0].mxu0
        %v2792 = vadd.f32 0.0, %v2791
        %2793 = vdwg.mxu0
        %2794 = vmatprep.subr.bf16.mxu0 %v2749
        %2795 = vmatpush1.bf16.msra.mxu0 %v2746
        %2796 = vmatprep.subr.bf16.mxu0 0
        %2797 = vmatpush1.bf16.msra.mxu0 0
        %2798 = vmatprep.subr.bf16.mxu0 0
        %2799 = vmatpush1.bf16.msra.mxu0 0
        %2800 = vmatprep.subr.bf16.mxu0 0
        %2801 = vmatpush1.bf16.msra.mxu0 0
        %2802 = vmatprep.subr.bf16.mxu0 0
        %2803 = vmatpush1.bf16.msra.mxu0 0
        %2804 = vmatprep.subr.bf16.mxu0 0
        %2805 = vmatpush1.bf16.msra.mxu0 0
        %2806 = vmatprep.subr.bf16.mxu0 0
        %2807 = vmatpush1.bf16.msra.mxu0 0
        %2808 = vmatprep.subr.bf16.mxu0 0
        %2809 = vmatpush1.bf16.msra.mxu0 0
        %2810 = vmatprep.subr.bf16.mxu0 0
        %2811 = vmatpush1.bf16.msra.mxu0 0
        %2812 = vmatprep.subr.bf16.mxu0 0
        %2813 = vmatpush1.bf16.msra.mxu0 0
        %2814 = vmatprep.subr.bf16.mxu0 0
        %2815 = vmatpush1.bf16.msra.mxu0 0
        %2816 = vmatprep.subr.bf16.mxu0 0
        %2817 = vmatpush1.bf16.msra.mxu0 0
        %2818 = vmatprep.subr.bf16.mxu0 0
        %2819 = vmatpush1.bf16.msra.mxu0 0
        %2820 = vmatprep.subr.bf16.mxu0 0
        %2821 = vmatpush1.bf16.msra.mxu0 0
        %2822 = vmatprep.subr.bf16.mxu0 0
        %2823 = vmatpush1.bf16.msra.mxu0 0
        %2824 = vmatprep.subr.bf16.mxu0 0
        %2825 = vmatpush1.bf16.msra.mxu0 0
        %2826 = vmatprep.mubr.bf16.mxu0 0
        %2827 = vmatmul.mubr.bf16.gmra.mrb[0].mxu0 %v2737
        %v2828 = vpop.f32.mrb[0].mxu0
        %v2829 = vadd.f32 0.0, %v2828
        %v2830 = vpop.f32.mrb[0].mxu0
        %v2831 = vadd.f32 0.0, %v2830
        %v2832 = vpop.f32.mrb[0].mxu0
        %v2833 = vadd.f32 0.0, %v2832
        %v2834 = vpop.f32.mrb[0].mxu0
        %v2835 = vadd.f32 0.0, %v2834
        %2836 = vdwg.mxu0
        %v2837 = vadd.f32 %v2706, %v2786
        %v2838 = vadd.f32 %v2707, %v2788
        %v2839 = vadd.f32 %v2708, %v2829
        %v2840 = vadd.f32 %v2709, %v2831
        %v2841 = vadd.f32 %v2710, %v2790
        %v2842 = vadd.f32 %v2711, %v2792
        %v2843 = vadd.f32 %v2712, %v2833
        %v2844 = vadd.f32 %v2713, %v2835
        %v2845 = vld [vmem:[%s3 + $0x78] sm:$0xf]
        %v2846 = vld [vmem:[%s3 + $0x7c] sm:$0xf]
        %v2849 = vunpack.c.l.b16 %v2845
        %v2850 = vunpack.c.l.b16 %v2846
        %v2851 = vpack.c.b16 %v2850, %v2849
        %2852 = vrot.lane.b32.xlu0 %v927, 88
        %v2853 = vpop.permute.xlu0 %2852
        %2854 = vrot.lane.b32.xlu0 %v928, 88
        %v2855 = vpop.permute.xlu0 %2854
        %2856 = vrot.lane.b32.xlu0 %v929, 88
        %v2857 = vpop.permute.xlu0 %2856
        %2858 = vrot.lane.b32.xlu0 %v930, 88
        %v2859 = vpop.permute.xlu0 %2858
        %vm2860 = vcmask 719872
        %v2861 = vsel %vm2860, %v2853, %v2855
        %v2862 = vsel %vm2860, %v2855, %v2857
        %v2863 = vsel %vm2860, %v2857, %v2859
        %v2865 = vsel %vm956, %v2851, 0
        %v2868 = vsel %vm960, %v2861, 0
        %v2871 = vsel %vm960, %v2862, 0
        %v2874 = vsel %vm960, %v2863, 0
        %v2877 = vsel %vm960, %v2859, 0
        %2879 = vmatprep.subr.bf16.mxu0 %v2871
        %2880 = vmatpush1.bf16.msra.mxu0 %v2868
        %2881 = vmatprep.subr.bf16.mxu0 0
        %2882 = vmatpush1.bf16.msra.mxu0 0
        %2883 = vmatprep.subr.bf16.mxu0 0
        %2884 = vmatpush1.bf16.msra.mxu0 0
        %2885 = vmatprep.subr.bf16.mxu0 0
        %2886 = vmatpush1.bf16.msra.mxu0 0
        %2887 = vmatprep.subr.bf16.mxu0 0
        %2888 = vmatpush1.bf16.msra.mxu0 0
        %2889 = vmatprep.subr.bf16.mxu0 0
        %2890 = vmatpush1.bf16.msra.mxu0 0
        %2891 = vmatprep.subr.bf16.mxu0 0
        %2892 = vmatpush1.bf16.msra.mxu0 0
        %2893 = vmatprep.subr.bf16.mxu0 0
        %2894 = vmatpush1.bf16.msra.mxu0 0
        %2895 = vmatprep.subr.bf16.mxu0 0
        %2896 = vmatpush1.bf16.msra.mxu0 0
        %2897 = vmatprep.subr.bf16.mxu0 0
        %2898 = vmatpush1.bf16.msra.mxu0 0
        %2899 = vmatprep.subr.bf16.mxu0 0
        %2900 = vmatpush1.bf16.msra.mxu0 0
        %2901 = vmatprep.subr.bf16.mxu0 0
        %2902 = vmatpush1.bf16.msra.mxu0 0
        %2903 = vmatprep.subr.bf16.mxu0 0
        %2904 = vmatpush1.bf16.msra.mxu0 0
        %2905 = vmatprep.subr.bf16.mxu0 0
        %2906 = vmatpush1.bf16.msra.mxu0 0
        %2907 = vmatprep.subr.bf16.mxu0 0
        %2908 = vmatpush1.bf16.msra.mxu0 0
        %2909 = vmatprep.subr.bf16.mxu0 0
        %2910 = vmatpush1.bf16.msra.mxu0 0
        %2911 = vmatprep.mubr.bf16.mxu0 0
        %2912 = vmatmul.mubr.bf16.gmra.mrb[0].mxu0 %v2865
        %v2913 = vpop.f32.mrb[0].mxu0
        %v2914 = vadd.f32 0.0, %v2913
        %v2915 = vpop.f32.mrb[0].mxu0
        %v2916 = vadd.f32 0.0, %v2915
        %v2917 = vpop.f32.mrb[0].mxu0
        %v2918 = vadd.f32 0.0, %v2917
        %v2919 = vpop.f32.mrb[0].mxu0
        %v2920 = vadd.f32 0.0, %v2919
        %2921 = vdwg.mxu0
        %2922 = vmatprep.subr.bf16.mxu0 %v2877
        %2923 = vmatpush1.bf16.msra.mxu0 %v2874
        %2924 = vmatprep.subr.bf16.mxu0 0
        %2925 = vmatpush1.bf16.msra.mxu0 0
        %2926 = vmatprep.subr.bf16.mxu0 0
        %2927 = vmatpush1.bf16.msra.mxu0 0
        %2928 = vmatprep.subr.bf16.mxu0 0
        %2929 = vmatpush1.bf16.msra.mxu0 0
        %2930 = vmatprep.subr.bf16.mxu0 0
        %2931 = vmatpush1.bf16.msra.mxu0 0
        %2932 = vmatprep.subr.bf16.mxu0 0
        %2933 = vmatpush1.bf16.msra.mxu0 0
        %2934 = vmatprep.subr.bf16.mxu0 0
        %2935 = vmatpush1.bf16.msra.mxu0 0
        %2936 = vmatprep.subr.bf16.mxu0 0
        %2937 = vmatpush1.bf16.msra.mxu0 0
        %2938 = vmatprep.subr.bf16.mxu0 0
        %2939 = vmatpush1.bf16.msra.mxu0 0
        %2940 = vmatprep.subr.bf16.mxu0 0
        %2941 = vmatpush1.bf16.msra.mxu0 0
        %2942 = vmatprep.subr.bf16.mxu0 0
        %2943 = vmatpush1.bf16.msra.mxu0 0
        %2944 = vmatprep.subr.bf16.mxu0 0
        %2945 = vmatpush1.bf16.msra.mxu0 0
        %2946 = vmatprep.subr.bf16.mxu0 0
        %2947 = vmatpush1.bf16.msra.mxu0 0
        %2948 = vmatprep.subr.bf16.mxu0 0
        %2949 = vmatpush1.bf16.msra.mxu0 0
        %2950 = vmatprep.subr.bf16.mxu0 0
        %2951 = vmatpush1.bf16.msra.mxu0 0
        %2952 = vmatprep.subr.bf16.mxu0 0
        %2953 = vmatpush1.bf16.msra.mxu0 0
        %2954 = vmatprep.mubr.bf16.mxu0 0
        %2955 = vmatmul.mubr.bf16.gmra.mrb[0].mxu0 %v2865
        %v2956 = vpop.f32.mrb[0].mxu0
        %v2957 = vadd.f32 0.0, %v2956
        %v2958 = vpop.f32.mrb[0].mxu0
        %v2959 = vadd.f32 0.0, %v2958
        %v2960 = vpop.f32.mrb[0].mxu0
        %v2961 = vadd.f32 0.0, %v2960
        %v2962 = vpop.f32.mrb[0].mxu0
        %v2963 = vadd.f32 0.0, %v2962
        %2964 = vdwg.mxu0
        %v2965 = vadd.f32 %v2837, %v2914
        %v2966 = vadd.f32 %v2838, %v2916
        %v2967 = vadd.f32 %v2839, %v2957
        %v2968 = vadd.f32 %v2840, %v2959
        %v2969 = vadd.f32 %v2841, %v2918
        %v2970 = vadd.f32 %v2842, %v2920
        %v2971 = vadd.f32 %v2843, %v2961
        %v2972 = vadd.f32 %v2844, %v2963
        %v2973 = vld [vmem:[%s3 + $0x80] sm:$0xf]
        %v2974 = vld [vmem:[%s3 + $0x84] sm:$0xf]
        %v2977 = vunpack.c.l.b16 %v2973
        %v2978 = vunpack.c.l.b16 %v2974
        %v2979 = vpack.c.b16 %v2978, %v2977
        %2980 = vrot.lane.b32.xlu0 %v927, 86
        %v2981 = vpop.permute.xlu0 %2980
        %2982 = vrot.lane.b32.xlu0 %v928, 86
        %v2983 = vpop.permute.xlu0 %2982
        %2984 = vrot.lane.b32.xlu0 %v929, 86
        %v2985 = vpop.permute.xlu0 %2984
        %2986 = vrot.lane.b32.xlu0 %v930, 86
        %v2987 = vpop.permute.xlu0 %2986
        %vm2988 = vcmask 703488
        %v2989 = vsel %vm2988, %v2981, %v2983
        %v2990 = vsel %vm2988, %v2983, %v2985
        %v2991 = vsel %vm2988, %v2985, %v2987
        %v2993 = vsel %vm956, %v2979, 0
        %v2996 = vsel %vm960, %v2989, 0
        %v2999 = vsel %vm960, %v2990, 0
        %v3002 = vsel %vm960, %v2991, 0
        %v3005 = vsel %vm960, %v2987, 0
        %3007 = vmatprep.subr.bf16.mxu0 %v2999
        %3008 = vmatpush1.bf16.msra.mxu0 %v2996
        %3009 = vmatprep.subr.bf16.mxu0 0
        %3010 = vmatpush1.bf16.msra.mxu0 0
        %3011 = vmatprep.subr.bf16.mxu0 0
        %3012 = vmatpush1.bf16.msra.mxu0 0
        %3013 = vmatprep.subr.bf16.mxu0 0
        %3014 = vmatpush1.bf16.msra.mxu0 0
        %3015 = vmatprep.subr.bf16.mxu0 0
        %3016 = vmatpush1.bf16.msra.mxu0 0
        %3017 = vmatprep.subr.bf16.mxu0 0
        %3018 = vmatpush1.bf16.msra.mxu0 0
        %3019 = vmatprep.subr.bf16.mxu0 0
        %3020 = vmatpush1.bf16.msra.mxu0 0
        %3021 = vmatprep.subr.bf16.mxu0 0
        %3022 = vmatpush1.bf16.msra.mxu0 0
        %3023 = vmatprep.subr.bf16.mxu0 0
        %3024 = vmatpush1.bf16.msra.mxu0 0
        %3025 = vmatprep.subr.bf16.mxu0 0
        %3026 = vmatpush1.bf16.msra.mxu0 0
        %3027 = vmatprep.subr.bf16.mxu0 0
        %3028 = vmatpush1.bf16.msra.mxu0 0
        %3029 = vmatprep.subr.bf16.mxu0 0
        %3030 = vmatpush1.bf16.msra.mxu0 0
        %3031 = vmatprep.subr.bf16.mxu0 0
        %3032 = vmatpush1.bf16.msra.mxu0 0
        %3033 = vmatprep.subr.bf16.mxu0 0
        %3034 = vmatpush1.bf16.msra.mxu0 0
        %3035 = vmatprep.subr.bf16.mxu0 0
        %3036 = vmatpush1.bf16.msra.mxu0 0
        %3037 = vmatprep.subr.bf16.mxu0 0
        %3038 = vmatpush1.bf16.msra.mxu0 0
        %3039 = vmatprep.mubr.bf16.mxu0 0
        %3040 = vmatmul.mubr.bf16.gmra.mrb[0].mxu0 %v2993
        %v3041 = vpop.f32.mrb[0].mxu0
        %v3042 = vadd.f32 0.0, %v3041
        %v3043 = vpop.f32.mrb[0].mxu0
        %v3044 = vadd.f32 0.0, %v3043
        %v3045 = vpop.f32.mrb[0].mxu0
        %v3046 = vadd.f32 0.0, %v3045
        %v3047 = vpop.f32.mrb[0].mxu0
        %v3048 = vadd.f32 0.0, %v3047
        %3049 = vdwg.mxu0
        %3050 = vmatprep.subr.bf16.mxu0 %v3005
        %3051 = vmatpush1.bf16.msra.mxu0 %v3002
        %3052 = vmatprep.subr.bf16.mxu0 0
        %3053 = vmatpush1.bf16.msra.mxu0 0
        %3054 = vmatprep.subr.bf16.mxu0 0
        %3055 = vmatpush1.bf16.msra.mxu0 0
        %3056 = vmatprep.subr.bf16.mxu0 0
        %3057 = vmatpush1.bf16.msra.mxu0 0
        %3058 = vmatprep.subr.bf16.mxu0 0
        %3059 = vmatpush1.bf16.msra.mxu0 0
        %3060 = vmatprep.subr.bf16.mxu0 0
        %3061 = vmatpush1.bf16.msra.mxu0 0
        %3062 = vmatprep.subr.bf16.mxu0 0
        %3063 = vmatpush1.bf16.msra.mxu0 0
        %3064 = vmatprep.subr.bf16.mxu0 0
        %3065 = vmatpush1.bf16.msra.mxu0 0
        %3066 = vmatprep.subr.bf16.mxu0 0
        %3067 = vmatpush1.bf16.msra.mxu0 0
        %3068 = vmatprep.subr.bf16.mxu0 0
        %3069 = vmatpush1.bf16.msra.mxu0 0
        %3070 = vmatprep.subr.bf16.mxu0 0
        %3071 = vmatpush1.bf16.msra.mxu0 0
        %3072 = vmatprep.subr.bf16.mxu0 0
        %3073 = vmatpush1.bf16.msra.mxu0 0
        %3074 = vmatprep.subr.bf16.mxu0 0
        %3075 = vmatpush1.bf16.msra.mxu0 0
        %3076 = vmatprep.subr.bf16.mxu0 0
        %3077 = vmatpush1.bf16.msra.mxu0 0
        %3078 = vmatprep.subr.bf16.mxu0 0
        %3079 = vmatpush1.bf16.msra.mxu0 0
        %3080 = vmatprep.subr.bf16.mxu0 0
        %3081 = vmatpush1.bf16.msra.mxu0 0
        %3082 = vmatprep.mubr.bf16.mxu0 0
        %3083 = vmatmul.mubr.bf16.gmra.mrb[0].mxu0 %v2993
        %v3084 = vpop.f32.mrb[0].mxu0
        %v3085 = vadd.f32 0.0, %v3084
        %v3086 = vpop.f32.mrb[0].mxu0
        %v3087 = vadd.f32 0.0, %v3086
        %v3088 = vpop.f32.mrb[0].mxu0
        %v3089 = vadd.f32 0.0, %v3088
        %v3090 = vpop.f32.mrb[0].mxu0
        %v3091 = vadd.f32 0.0, %v3090
        %3092 = vdwg.mxu0
        %v3093 = vadd.f32 %v2965, %v3042
        %v3094 = vadd.f32 %v2966, %v3044
        %v3095 = vadd.f32 %v2967, %v3085
        %v3096 = vadd.f32 %v2968, %v3087
        %v3097 = vadd.f32 %v2969, %v3046
        %v3098 = vadd.f32 %v2970, %v3048
        %v3099 = vadd.f32 %v2971, %v3089
        %v3100 = vadd.f32 %v2972, %v3091
        %v3101 = vld [vmem:[%s3 + $0x88] sm:$0xf]
        %v3102 = vld [vmem:[%s3 + $0x8c] sm:$0xf]
        %v3105 = vunpack.c.l.b16 %v3101
        %v3106 = vunpack.c.l.b16 %v3102
        %v3107 = vpack.c.b16 %v3106, %v3105
        %3108 = vrot.lane.b32.xlu0 %v927, 84
        %v3109 = vpop.permute.xlu0 %3108
        %3110 = vrot.lane.b32.xlu0 %v928, 84
        %v3111 = vpop.permute.xlu0 %3110
        %3112 = vrot.lane.b32.xlu0 %v929, 84
        %v3113 = vpop.permute.xlu0 %3112
        %3114 = vrot.lane.b32.xlu0 %v930, 84
        %v3115 = vpop.permute.xlu0 %3114
        %vm3116 = vcmask 687104
        %v3117 = vsel %vm3116, %v3109, %v3111
        %v3118 = vsel %vm3116, %v3111, %v3113
        %v3119 = vsel %vm3116, %v3113, %v3115
        %v3121 = vsel %vm956, %v3107, 0
        %v3124 = vsel %vm960, %v3117, 0
        %v3127 = vsel %vm960, %v3118, 0
        %v3130 = vsel %vm960, %v3119, 0
        %v3133 = vsel %vm960, %v3115, 0
        %3135 = vmatprep.subr.bf16.mxu0 %v3127
        %3136 = vmatpush1.bf16.msra.mxu0 %v3124
        %3137 = vmatprep.subr.bf16.mxu0 0
        %3138 = vmatpush1.bf16.msra.mxu0 0
        %3139 = vmatprep.subr.bf16.mxu0 0
        %3140 = vmatpush1.bf16.msra.mxu0 0
        %3141 = vmatprep.subr.bf16.mxu0 0
        %3142 = vmatpush1.bf16.msra.mxu0 0
        %3143 = vmatprep.subr.bf16.mxu0 0
        %3144 = vmatpush1.bf16.msra.mxu0 0
        %3145 = vmatprep.subr.bf16.mxu0 0
        %3146 = vmatpush1.bf16.msra.mxu0 0
        %3147 = vmatprep.subr.bf16.mxu0 0
        %3148 = vmatpush1.bf16.msra.mxu0 0
        %3149 = vmatprep.subr.bf16.mxu0 0
        %3150 = vmatpush1.bf16.msra.mxu0 0
        %3151 = vmatprep.subr.bf16.mxu0 0
        %3152 = vmatpush1.bf16.msra.mxu0 0
        %3153 = vmatprep.subr.bf16.mxu0 0
        %3154 = vmatpush1.bf16.msra.mxu0 0
        %3155 = vmatprep.subr.bf16.mxu0 0
        %3156 = vmatpush1.bf16.msra.mxu0 0
        %3157 = vmatprep.subr.bf16.mxu0 0
        %3158 = vmatpush1.bf16.msra.mxu0 0
        %3159 = vmatprep.subr.bf16.mxu0 0
        %3160 = vmatpush1.bf16.msra.mxu0 0
        %3161 = vmatprep.subr.bf16.mxu0 0
        %3162 = vmatpush1.bf16.msra.mxu0 0
        %3163 = vmatprep.subr.bf16.mxu0 0
        %3164 = vmatpush1.bf16.msra.mxu0 0
        %3165 = vmatprep.subr.bf16.mxu0 0
        %3166 = vmatpush1.bf16.msra.mxu0 0
        %3167 = vmatprep.mubr.bf16.mxu0 0
        %3168 = vmatmul.mubr.bf16.gmra.mrb[0].mxu0 %v3121
        %v3169 = vpop.f32.mrb[0].mxu0
        %v3170 = vadd.f32 0.0, %v3169
        %v3171 = vpop.f32.mrb[0].mxu0
        %v3172 = vadd.f32 0.0, %v3171
        %v3173 = vpop.f32.mrb[0].mxu0
        %v3174 = vadd.f32 0.0, %v3173
        %v3175 = vpop.f32.mrb[0].mxu0
        %v3176 = vadd.f32 0.0, %v3175
        %3177 = vdwg.mxu0
        %3178 = vmatprep.subr.bf16.mxu0 %v3133
        %3179 = vmatpush1.bf16.msra.mxu0 %v3130
        %3180 = vmatprep.subr.bf16.mxu0 0
        %3181 = vmatpush1.bf16.msra.mxu0 0
        %3182 = vmatprep.subr.bf16.mxu0 0
        %3183 = vmatpush1.bf16.msra.mxu0 0
        %3184 = vmatprep.subr.bf16.mxu0 0
        %3185 = vmatpush1.bf16.msra.mxu0 0
        %3186 = vmatprep.subr.bf16.mxu0 0
        %3187 = vmatpush1.bf16.msra.mxu0 0
        %3188 = vmatprep.subr.bf16.mxu0 0
        %3189 = vmatpush1.bf16.msra.mxu0 0
        %3190 = vmatprep.subr.bf16.mxu0 0
        %3191 = vmatpush1.bf16.msra.mxu0 0
        %3192 = vmatprep.subr.bf16.mxu0 0
        %3193 = vmatpush1.bf16.msra.mxu0 0
        %3194 = vmatprep.subr.bf16.mxu0 0
        %3195 = vmatpush1.bf16.msra.mxu0 0
        %3196 = vmatprep.subr.bf16.mxu0 0
        %3197 = vmatpush1.bf16.msra.mxu0 0
        %3198 = vmatprep.subr.bf16.mxu0 0
        %3199 = vmatpush1.bf16.msra.mxu0 0
        %3200 = vmatprep.subr.bf16.mxu0 0
        %3201 = vmatpush1.bf16.msra.mxu0 0
        %3202 = vmatprep.subr.bf16.mxu0 0
        %3203 = vmatpush1.bf16.msra.mxu0 0
        %3204 = vmatprep.subr.bf16.mxu0 0
        %3205 = vmatpush1.bf16.msra.mxu0 0
        %3206 = vmatprep.subr.bf16.mxu0 0
        %3207 = vmatpush1.bf16.msra.mxu0 0
        %3208 = vmatprep.subr.bf16.mxu0 0
        %3209 = vmatpush1.bf16.msra.mxu0 0
        %3210 = vmatprep.mubr.bf16.mxu0 0
        %3211 = vmatmul.mubr.bf16.gmra.mrb[0].mxu0 %v3121
        %v3212 = vpop.f32.mrb[0].mxu0
        %v3213 = vadd.f32 0.0, %v3212
        %v3214 = vpop.f32.mrb[0].mxu0
        %v3215 = vadd.f32 0.0, %v3214
        %v3216 = vpop.f32.mrb[0].mxu0
        %v3217 = vadd.f32 0.0, %v3216
        %v3218 = vpop.f32.mrb[0].mxu0
        %v3219 = vadd.f32 0.0, %v3218
        %3220 = vdwg.mxu0
        %v3221 = vadd.f32 %v3093, %v3170
        %v3222 = vadd.f32 %v3094, %v3172
        %v3223 = vadd.f32 %v3095, %v3213
        %v3224 = vadd.f32 %v3096, %v3215
        %v3225 = vadd.f32 %v3097, %v3174
        %v3226 = vadd.f32 %v3098, %v3176
        %v3227 = vadd.f32 %v3099, %v3217
        %v3228 = vadd.f32 %v3100, %v3219
        %v3229 = vld [vmem:[%s3 + $0x90] sm:$0xf]
        %v3230 = vld [vmem:[%s3 + $0x94] sm:$0xf]
        %v3233 = vunpack.c.l.b16 %v3229
        %v3234 = vunpack.c.l.b16 %v3230
        %v3235 = vpack.c.b16 %v3234, %v3233
        %3236 = vrot.lane.b32.xlu0 %v927, 82
        %v3237 = vpop.permute.xlu0 %3236
        %3238 = vrot.lane.b32.xlu0 %v928, 82
        %v3239 = vpop.permute.xlu0 %3238
        %3240 = vrot.lane.b32.xlu0 %v929, 82
        %v3241 = vpop.permute.xlu0 %3240
        %3242 = vrot.lane.b32.xlu0 %v930, 82
        %v3243 = vpop.permute.xlu0 %3242
        %vm3244 = vcmask 670720
        %v3245 = vsel %vm3244, %v3237, %v3239
        %v3246 = vsel %vm3244, %v3239, %v3241
        %v3247 = vsel %vm3244, %v3241, %v3243
        %v3249 = vsel %vm956, %v3235, 0
        %v3252 = vsel %vm960, %v3245, 0
        %v3255 = vsel %vm960, %v3246, 0
        %v3258 = vsel %vm960, %v3247, 0
        %v3261 = vsel %vm960, %v3243, 0
        %3263 = vmatprep.subr.bf16.mxu0 %v3255
        %3264 = vmatpush1.bf16.msra.mxu0 %v3252
        %3265 = vmatprep.subr.bf16.mxu0 0
        %3266 = vmatpush1.bf16.msra.mxu0 0
        %3267 = vmatprep.subr.bf16.mxu0 0
        %3268 = vmatpush1.bf16.msra.mxu0 0
        %3269 = vmatprep.subr.bf16.mxu0 0
        %3270 = vmatpush1.bf16.msra.mxu0 0
        %3271 = vmatprep.subr.bf16.mxu0 0
        %3272 = vmatpush1.bf16.msra.mxu0 0
        %3273 = vmatprep.subr.bf16.mxu0 0
        %3274 = vmatpush1.bf16.msra.mxu0 0
        %3275 = vmatprep.subr.bf16.mxu0 0
        %3276 = vmatpush1.bf16.msra.mxu0 0
        %3277 = vmatprep.subr.bf16.mxu0 0
        %3278 = vmatpush1.bf16.msra.mxu0 0
        %3279 = vmatprep.subr.bf16.mxu0 0
        %3280 = vmatpush1.bf16.msra.mxu0 0
        %3281 = vmatprep.subr.bf16.mxu0 0
        %3282 = vmatpush1.bf16.msra.mxu0 0
        %3283 = vmatprep.subr.bf16.mxu0 0
        %3284 = vmatpush1.bf16.msra.mxu0 0
        %3285 = vmatprep.subr.bf16.mxu0 0
        %3286 = vmatpush1.bf16.msra.mxu0 0
        %3287 = vmatprep.subr.bf16.mxu0 0
        %3288 = vmatpush1.bf16.msra.mxu0 0
        %3289 = vmatprep.subr.bf16.mxu0 0
        %3290 = vmatpush1.bf16.msra.mxu0 0
        %3291 = vmatprep.subr.bf16.mxu0 0
        %3292 = vmatpush1.bf16.msra.mxu0 0
        %3293 = vmatprep.subr.bf16.mxu0 0
        %3294 = vmatpush1.bf16.msra.mxu0 0
        %3295 = vmatprep.mubr.bf16.mxu0 0
        %3296 = vmatmul.mubr.bf16.gmra.mrb[0].mxu0 %v3249
        %v3297 = vpop.f32.mrb[0].mxu0
        %v3298 = vadd.f32 0.0, %v3297
        %v3299 = vpop.f32.mrb[0].mxu0
        %v3300 = vadd.f32 0.0, %v3299
        %v3301 = vpop.f32.mrb[0].mxu0
        %v3302 = vadd.f32 0.0, %v3301
        %v3303 = vpop.f32.mrb[0].mxu0
        %v3304 = vadd.f32 0.0, %v3303
        %3305 = vdwg.mxu0
        %3306 = vmatprep.subr.bf16.mxu0 %v3261
        %3307 = vmatpush1.bf16.msra.mxu0 %v3258
        %3308 = vmatprep.subr.bf16.mxu0 0
        %3309 = vmatpush1.bf16.msra.mxu0 0
        %3310 = vmatprep.subr.bf16.mxu0 0
        %3311 = vmatpush1.bf16.msra.mxu0 0
        %3312 = vmatprep.subr.bf16.mxu0 0
        %3313 = vmatpush1.bf16.msra.mxu0 0
        %3314 = vmatprep.subr.bf16.mxu0 0
        %3315 = vmatpush1.bf16.msra.mxu0 0
        %3316 = vmatprep.subr.bf16.mxu0 0
        %3317 = vmatpush1.bf16.msra.mxu0 0
        %3318 = vmatprep.subr.bf16.mxu0 0
        %3319 = vmatpush1.bf16.msra.mxu0 0
        %3320 = vmatprep.subr.bf16.mxu0 0
        %3321 = vmatpush1.bf16.msra.mxu0 0
        %3322 = vmatprep.subr.bf16.mxu0 0
        %3323 = vmatpush1.bf16.msra.mxu0 0
        %3324 = vmatprep.subr.bf16.mxu0 0
        %3325 = vmatpush1.bf16.msra.mxu0 0
        %3326 = vmatprep.subr.bf16.mxu0 0
        %3327 = vmatpush1.bf16.msra.mxu0 0
        %3328 = vmatprep.subr.bf16.mxu0 0
        %3329 = vmatpush1.bf16.msra.mxu0 0
        %3330 = vmatprep.subr.bf16.mxu0 0
        %3331 = vmatpush1.bf16.msra.mxu0 0
        %3332 = vmatprep.subr.bf16.mxu0 0
        %3333 = vmatpush1.bf16.msra.mxu0 0
        %3334 = vmatprep.subr.bf16.mxu0 0
        %3335 = vmatpush1.bf16.msra.mxu0 0
        %3336 = vmatprep.subr.bf16.mxu0 0
        %3337 = vmatpush1.bf16.msra.mxu0 0
        %3338 = vmatprep.mubr.bf16.mxu0 0
        %3339 = vmatmul.mubr.bf16.gmra.mrb[0].mxu0 %v3249
        %v3340 = vpop.f32.mrb[0].mxu0
        %v3341 = vadd.f32 0.0, %v3340
        %v3342 = vpop.f32.mrb[0].mxu0
        %v3343 = vadd.f32 0.0, %v3342
        %v3344 = vpop.f32.mrb[0].mxu0
        %v3345 = vadd.f32 0.0, %v3344
        %v3346 = vpop.f32.mrb[0].mxu0
        %v3347 = vadd.f32 0.0, %v3346
        %3348 = vdwg.mxu0
        %v3349 = vadd.f32 %v3221, %v3298
        %v3350 = vadd.f32 %v3222, %v3300
        %v3351 = vadd.f32 %v3223, %v3341
        %v3352 = vadd.f32 %v3224, %v3343
        %v3353 = vadd.f32 %v3225, %v3302
        %v3354 = vadd.f32 %v3226, %v3304
        %v3355 = vadd.f32 %v3227, %v3345
        %v3356 = vadd.f32 %v3228, %v3347
        %v3357 = vld [vmem:[%s3 + $0x98] sm:$0xf]
        %v3358 = vld [vmem:[%s3 + $0x9c] sm:$0xf]
        %v3361 = vunpack.c.l.b16 %v3357
        %v3362 = vunpack.c.l.b16 %v3358
        %v3363 = vpack.c.b16 %v3362, %v3361
        %3364 = vrot.lane.b32.xlu0 %v927, 80
        %v3365 = vpop.permute.xlu0 %3364
        %3366 = vrot.lane.b32.xlu0 %v928, 80
        %v3367 = vpop.permute.xlu0 %3366
        %3368 = vrot.lane.b32.xlu0 %v929, 80
        %v3369 = vpop.permute.xlu0 %3368
        %3370 = vrot.lane.b32.xlu0 %v930, 80
        %v3371 = vpop.permute.xlu0 %3370
        %vm3372 = vcmask 654336
        %v3373 = vsel %vm3372, %v3365, %v3367
        %v3374 = vsel %vm3372, %v3367, %v3369
        %v3375 = vsel %vm3372, %v3369, %v3371
        %v3377 = vsel %vm956, %v3363, 0
        %v3380 = vsel %vm960, %v3373, 0
        %v3383 = vsel %vm960, %v3374, 0
        %v3386 = vsel %vm960, %v3375, 0
        %v3389 = vsel %vm960, %v3371, 0
        %3391 = vmatprep.subr.bf16.mxu0 %v3383
        %3392 = vmatpush1.bf16.msra.mxu0 %v3380
        %3393 = vmatprep.subr.bf16.mxu0 0
        %3394 = vmatpush1.bf16.msra.mxu0 0
        %3395 = vmatprep.subr.bf16.mxu0 0
        %3396 = vmatpush1.bf16.msra.mxu0 0
        %3397 = vmatprep.subr.bf16.mxu0 0
        %3398 = vmatpush1.bf16.msra.mxu0 0
        %3399 = vmatprep.subr.bf16.mxu0 0
        %3400 = vmatpush1.bf16.msra.mxu0 0
        %3401 = vmatprep.subr.bf16.mxu0 0
        %3402 = vmatpush1.bf16.msra.mxu0 0
        %3403 = vmatprep.subr.bf16.mxu0 0
        %3404 = vmatpush1.bf16.msra.mxu0 0
        %3405 = vmatprep.subr.bf16.mxu0 0
        %3406 = vmatpush1.bf16.msra.mxu0 0
        %3407 = vmatprep.subr.bf16.mxu0 0
        %3408 = vmatpush1.bf16.msra.mxu0 0
        %3409 = vmatprep.subr.bf16.mxu0 0
        %3410 = vmatpush1.bf16.msra.mxu0 0
        %3411 = vmatprep.subr.bf16.mxu0 0
        %3412 = vmatpush1.bf16.msra.mxu0 0
        %3413 = vmatprep.subr.bf16.mxu0 0
        %3414 = vmatpush1.bf16.msra.mxu0 0
        %3415 = vmatprep.subr.bf16.mxu0 0
        %3416 = vmatpush1.bf16.msra.mxu0 0
        %3417 = vmatprep.subr.bf16.mxu0 0
        %3418 = vmatpush1.bf16.msra.mxu0 0
        %3419 = vmatprep.subr.bf16.mxu0 0
        %3420 = vmatpush1.bf16.msra.mxu0 0
        %3421 = vmatprep.subr.bf16.mxu0 0
        %3422 = vmatpush1.bf16.msra.mxu0 0
        %3423 = vmatprep.mubr.bf16.mxu0 0
        %3424 = vmatmul.mubr.bf16.gmra.mrb[0].mxu0 %v3377
        %v3425 = vpop.f32.mrb[0].mxu0
        %v3426 = vadd.f32 0.0, %v3425
        %v3427 = vpop.f32.mrb[0].mxu0
        %v3428 = vadd.f32 0.0, %v3427
        %v3429 = vpop.f32.mrb[0].mxu0
        %v3430 = vadd.f32 0.0, %v3429
        %v3431 = vpop.f32.mrb[0].mxu0
        %v3432 = vadd.f32 0.0, %v3431
        %3433 = vdwg.mxu0
        %3434 = vmatprep.subr.bf16.mxu0 %v3389
        %3435 = vmatpush1.bf16.msra.mxu0 %v3386
        %3436 = vmatprep.subr.bf16.mxu0 0
        %3437 = vmatpush1.bf16.msra.mxu0 0
        %3438 = vmatprep.subr.bf16.mxu0 0
        %3439 = vmatpush1.bf16.msra.mxu0 0
        %3440 = vmatprep.subr.bf16.mxu0 0
        %3441 = vmatpush1.bf16.msra.mxu0 0
        %3442 = vmatprep.subr.bf16.mxu0 0
        %3443 = vmatpush1.bf16.msra.mxu0 0
        %3444 = vmatprep.subr.bf16.mxu0 0
        %3445 = vmatpush1.bf16.msra.mxu0 0
        %3446 = vmatprep.subr.bf16.mxu0 0
        %3447 = vmatpush1.bf16.msra.mxu0 0
        %3448 = vmatprep.subr.bf16.mxu0 0
        %3449 = vmatpush1.bf16.msra.mxu0 0
        %3450 = vmatprep.subr.bf16.mxu0 0
        %3451 = vmatpush1.bf16.msra.mxu0 0
        %3452 = vmatprep.subr.bf16.mxu0 0
        %3453 = vmatpush1.bf16.msra.mxu0 0
        %3454 = vmatprep.subr.bf16.mxu0 0
        %3455 = vmatpush1.bf16.msra.mxu0 0
        %3456 = vmatprep.subr.bf16.mxu0 0
        %3457 = vmatpush1.bf16.msra.mxu0 0
        %3458 = vmatprep.subr.bf16.mxu0 0
        %3459 = vmatpush1.bf16.msra.mxu0 0
        %3460 = vmatprep.subr.bf16.mxu0 0
        %3461 = vmatpush1.bf16.msra.mxu0 0
        %3462 = vmatprep.subr.bf16.mxu0 0
        %3463 = vmatpush1.bf16.msra.mxu0 0
        %3464 = vmatprep.subr.bf16.mxu0 0
        %3465 = vmatpush1.bf16.msra.mxu0 0
        %3466 = vmatprep.mubr.bf16.mxu0 0
        %3467 = vmatmul.mubr.bf16.gmra.mrb[0].mxu0 %v3377
        %v3468 = vpop.f32.mrb[0].mxu0
        %v3469 = vadd.f32 0.0, %v3468
        %v3470 = vpop.f32.mrb[0].mxu0
        %v3471 = vadd.f32 0.0, %v3470
        %v3472 = vpop.f32.mrb[0].mxu0
        %v3473 = vadd.f32 0.0, %v3472
        %v3474 = vpop.f32.mrb[0].mxu0
        %v3475 = vadd.f32 0.0, %v3474
        %3476 = vdwg.mxu0
        %v3477 = vadd.f32 %v3349, %v3426
        %v3478 = vadd.f32 %v3350, %v3428
        %v3479 = vadd.f32 %v3351, %v3469
        %v3480 = vadd.f32 %v3352, %v3471
        %v3481 = vadd.f32 %v3353, %v3430
        %v3482 = vadd.f32 %v3354, %v3432
        %v3483 = vadd.f32 %v3355, %v3473
        %v3484 = vadd.f32 %v3356, %v3475
        %v3485 = vld [vmem:[%s3 + $0xa0] sm:$0xf]
        %v3486 = vld [vmem:[%s3 + $0xa4] sm:$0xf]
        %v3489 = vunpack.c.l.b16 %v3485
        %v3490 = vunpack.c.l.b16 %v3486
        %v3491 = vpack.c.b16 %v3490, %v3489
        %3492 = vrot.lane.b32.xlu0 %v927, 32
        %v3493 = vpop.permute.xlu0 %3492
        %3494 = vrot.lane.b32.xlu0 %v928, 32
        %v3495 = vpop.permute.xlu0 %3494
        %3496 = vrot.lane.b32.xlu0 %v929, 32
        %v3497 = vpop.permute.xlu0 %3496
        %3498 = vrot.lane.b32.xlu0 %v930, 32
        %v3499 = vpop.permute.xlu0 %3498
        %vm3500 = vcmask 261120
        %v3501 = vsel %vm3500, %v3493, %v3495
        %v3502 = vsel %vm3500, %v3495, %v3497
        %v3503 = vsel %vm3500, %v3497, %v3499
        %v3505 = vsel %vm956, %v3491, 0
        %v3508 = vsel %vm960, %v3501, 0
        %v3511 = vsel %vm960, %v3502, 0
        %v3514 = vsel %vm960, %v3503, 0
        %v3517 = vsel %vm960, %v3499, 0
        %3519 = vmatprep.subr.bf16.mxu0 %v3511
        %3520 = vmatpush1.bf16.msra.mxu0 %v3508
        %3521 = vmatprep.subr.bf16.mxu0 0
        %3522 = vmatpush1.bf16.msra.mxu0 0
        %3523 = vmatprep.subr.bf16.mxu0 0
        %3524 = vmatpush1.bf16.msra.mxu0 0
        %3525 = vmatprep.subr.bf16.mxu0 0
        %3526 = vmatpush1.bf16.msra.mxu0 0
        %3527 = vmatprep.subr.bf16.mxu0 0
        %3528 = vmatpush1.bf16.msra.mxu0 0
        %3529 = vmatprep.subr.bf16.mxu0 0
        %3530 = vmatpush1.bf16.msra.mxu0 0
        %3531 = vmatprep.subr.bf16.mxu0 0
        %3532 = vmatpush1.bf16.msra.mxu0 0
        %3533 = vmatprep.subr.bf16.mxu0 0
        %3534 = vmatpush1.bf16.msra.mxu0 0
        %3535 = vmatprep.subr.bf16.mxu0 0
        %3536 = vmatpush1.bf16.msra.mxu0 0
        %3537 = vmatprep.subr.bf16.mxu0 0
        %3538 = vmatpush1.bf16.msra.mxu0 0
        %3539 = vmatprep.subr.bf16.mxu0 0
        %3540 = vmatpush1.bf16.msra.mxu0 0
        %3541 = vmatprep.subr.bf16.mxu0 0
        %3542 = vmatpush1.bf16.msra.mxu0 0
        %3543 = vmatprep.subr.bf16.mxu0 0
        %3544 = vmatpush1.bf16.msra.mxu0 0
        %3545 = vmatprep.subr.bf16.mxu0 0
        %3546 = vmatpush1.bf16.msra.mxu0 0
        %3547 = vmatprep.subr.bf16.mxu0 0
        %3548 = vmatpush1.bf16.msra.mxu0 0
        %3549 = vmatprep.subr.bf16.mxu0 0
        %3550 = vmatpush1.bf16.msra.mxu0 0
        %3551 = vmatprep.mubr.bf16.mxu0 0
        %3552 = vmatmul.mubr.bf16.gmra.mrb[0].mxu0 %v3505
        %v3553 = vpop.f32.mrb[0].mxu0
        %v3554 = vadd.f32 0.0, %v3553
        %v3555 = vpop.f32.mrb[0].mxu0
        %v3556 = vadd.f32 0.0, %v3555
        %v3557 = vpop.f32.mrb[0].mxu0
        %v3558 = vadd.f32 0.0, %v3557
        %v3559 = vpop.f32.mrb[0].mxu0
        %v3560 = vadd.f32 0.0, %v3559
        %3561 = vdwg.mxu0
        %3562 = vmatprep.subr.bf16.mxu0 %v3517
        %3563 = vmatpush1.bf16.msra.mxu0 %v3514
        %3564 = vmatprep.subr.bf16.mxu0 0
        %3565 = vmatpush1.bf16.msra.mxu0 0
        %3566 = vmatprep.subr.bf16.mxu0 0
        %3567 = vmatpush1.bf16.msra.mxu0 0
        %3568 = vmatprep.subr.bf16.mxu0 0
        %3569 = vmatpush1.bf16.msra.mxu0 0
        %3570 = vmatprep.subr.bf16.mxu0 0
        %3571 = vmatpush1.bf16.msra.mxu0 0
        %3572 = vmatprep.subr.bf16.mxu0 0
        %3573 = vmatpush1.bf16.msra.mxu0 0
        %3574 = vmatprep.subr.bf16.mxu0 0
        %3575 = vmatpush1.bf16.msra.mxu0 0
        %3576 = vmatprep.subr.bf16.mxu0 0
        %3577 = vmatpush1.bf16.msra.mxu0 0
        %3578 = vmatprep.subr.bf16.mxu0 0
        %3579 = vmatpush1.bf16.msra.mxu0 0
        %3580 = vmatprep.subr.bf16.mxu0 0
        %3581 = vmatpush1.bf16.msra.mxu0 0
        %3582 = vmatprep.subr.bf16.mxu0 0
        %3583 = vmatpush1.bf16.msra.mxu0 0
        %3584 = vmatprep.subr.bf16.mxu0 0
        %3585 = vmatpush1.bf16.msra.mxu0 0
        %3586 = vmatprep.subr.bf16.mxu0 0
        %3587 = vmatpush1.bf16.msra.mxu0 0
        %3588 = vmatprep.subr.bf16.mxu0 0
        %3589 = vmatpush1.bf16.msra.mxu0 0
        %3590 = vmatprep.subr.bf16.mxu0 0
        %3591 = vmatpush1.bf16.msra.mxu0 0
        %3592 = vmatprep.subr.bf16.mxu0 0
        %3593 = vmatpush1.bf16.msra.mxu0 0
        %3594 = vmatprep.mubr.bf16.mxu0 0
        %3595 = vmatmul.mubr.bf16.gmra.mrb[0].mxu0 %v3505
        %v3596 = vpop.f32.mrb[0].mxu0
        %v3597 = vadd.f32 0.0, %v3596
        %v3598 = vpop.f32.mrb[0].mxu0
        %v3599 = vadd.f32 0.0, %v3598
        %v3600 = vpop.f32.mrb[0].mxu0
        %v3601 = vadd.f32 0.0, %v3600
        %v3602 = vpop.f32.mrb[0].mxu0
        %v3603 = vadd.f32 0.0, %v3602
        %3604 = vdwg.mxu0
        %v3605 = vadd.f32 %v3477, %v3554
        %v3606 = vadd.f32 %v3478, %v3556
        %v3607 = vadd.f32 %v3479, %v3597
        %v3608 = vadd.f32 %v3480, %v3599
        %v3609 = vadd.f32 %v3481, %v3558
        %v3610 = vadd.f32 %v3482, %v3560
        %v3611 = vadd.f32 %v3483, %v3601
        %v3612 = vadd.f32 %v3484, %v3603
        %v3613 = vld [vmem:[%s3 + $0xa8] sm:$0xf]
        %v3614 = vld [vmem:[%s3 + $0xac] sm:$0xf]
        %v3617 = vunpack.c.l.b16 %v3613
        %v3618 = vunpack.c.l.b16 %v3614
        %v3619 = vpack.c.b16 %v3618, %v3617
        %3620 = vrot.lane.b32.xlu0 %v927, 30
        %v3621 = vpop.permute.xlu0 %3620
        %3622 = vrot.lane.b32.xlu0 %v928, 30
        %v3623 = vpop.permute.xlu0 %3622
        %3624 = vrot.lane.b32.xlu0 %v929, 30
        %v3625 = vpop.permute.xlu0 %3624
        %3626 = vrot.lane.b32.xlu0 %v930, 30
        %v3627 = vpop.permute.xlu0 %3626
        %vm3628 = vcmask 244736
        %v3629 = vsel %vm3628, %v3621, %v3623
        %v3630 = vsel %vm3628, %v3623, %v3625
        %v3631 = vsel %vm3628, %v3625, %v3627
        %v3633 = vsel %vm956, %v3619, 0
        %v3636 = vsel %vm960, %v3629, 0
        %v3639 = vsel %vm960, %v3630, 0
        %v3642 = vsel %vm960, %v3631, 0
        %v3645 = vsel %vm960, %v3627, 0
        %3647 = vmatprep.subr.bf16.mxu0 %v3639
        %3648 = vmatpush1.bf16.msra.mxu0 %v3636
        %3649 = vmatprep.subr.bf16.mxu0 0
        %3650 = vmatpush1.bf16.msra.mxu0 0
        %3651 = vmatprep.subr.bf16.mxu0 0
        %3652 = vmatpush1.bf16.msra.mxu0 0
        %3653 = vmatprep.subr.bf16.mxu0 0
        %3654 = vmatpush1.bf16.msra.mxu0 0
        %3655 = vmatprep.subr.bf16.mxu0 0
        %3656 = vmatpush1.bf16.msra.mxu0 0
        %3657 = vmatprep.subr.bf16.mxu0 0
        %3658 = vmatpush1.bf16.msra.mxu0 0
        %3659 = vmatprep.subr.bf16.mxu0 0
        %3660 = vmatpush1.bf16.msra.mxu0 0
        %3661 = vmatprep.subr.bf16.mxu0 0
        %3662 = vmatpush1.bf16.msra.mxu0 0
        %3663 = vmatprep.subr.bf16.mxu0 0
        %3664 = vmatpush1.bf16.msra.mxu0 0
        %3665 = vmatprep.subr.bf16.mxu0 0
        %3666 = vmatpush1.bf16.msra.mxu0 0
        %3667 = vmatprep.subr.bf16.mxu0 0
        %3668 = vmatpush1.bf16.msra.mxu0 0
        %3669 = vmatprep.subr.bf16.mxu0 0
        %3670 = vmatpush1.bf16.msra.mxu0 0
        %3671 = vmatprep.subr.bf16.mxu0 0
        %3672 = vmatpush1.bf16.msra.mxu0 0
        %3673 = vmatprep.subr.bf16.mxu0 0
        %3674 = vmatpush1.bf16.msra.mxu0 0
        %3675 = vmatprep.subr.bf16.mxu0 0
        %3676 = vmatpush1.bf16.msra.mxu0 0
        %3677 = vmatprep.subr.bf16.mxu0 0
        %3678 = vmatpush1.bf16.msra.mxu0 0
        %3679 = vmatprep.mubr.bf16.mxu0 0
        %3680 = vmatmul.mubr.bf16.gmra.mrb[0].mxu0 %v3633
        %v3681 = vpop.f32.mrb[0].mxu0
        %v3682 = vadd.f32 0.0, %v3681
        %v3683 = vpop.f32.mrb[0].mxu0
        %v3684 = vadd.f32 0.0, %v3683
        %v3685 = vpop.f32.mrb[0].mxu0
        %v3686 = vadd.f32 0.0, %v3685
        %v3687 = vpop.f32.mrb[0].mxu0
        %v3688 = vadd.f32 0.0, %v3687
        %3689 = vdwg.mxu0
        %3690 = vmatprep.subr.bf16.mxu0 %v3645
        %3691 = vmatpush1.bf16.msra.mxu0 %v3642
        %3692 = vmatprep.subr.bf16.mxu0 0
        %3693 = vmatpush1.bf16.msra.mxu0 0
        %3694 = vmatprep.subr.bf16.mxu0 0
        %3695 = vmatpush1.bf16.msra.mxu0 0
        %3696 = vmatprep.subr.bf16.mxu0 0
        %3697 = vmatpush1.bf16.msra.mxu0 0
        %3698 = vmatprep.subr.bf16.mxu0 0
        %3699 = vmatpush1.bf16.msra.mxu0 0
        %3700 = vmatprep.subr.bf16.mxu0 0
        %3701 = vmatpush1.bf16.msra.mxu0 0
        %3702 = vmatprep.subr.bf16.mxu0 0
        %3703 = vmatpush1.bf16.msra.mxu0 0
        %3704 = vmatprep.subr.bf16.mxu0 0
        %3705 = vmatpush1.bf16.msra.mxu0 0
        %3706 = vmatprep.subr.bf16.mxu0 0
        %3707 = vmatpush1.bf16.msra.mxu0 0
        %3708 = vmatprep.subr.bf16.mxu0 0
        %3709 = vmatpush1.bf16.msra.mxu0 0
        %3710 = vmatprep.subr.bf16.mxu0 0
        %3711 = vmatpush1.bf16.msra.mxu0 0
        %3712 = vmatprep.subr.bf16.mxu0 0
        %3713 = vmatpush1.bf16.msra.mxu0 0
        %3714 = vmatprep.subr.bf16.mxu0 0
        %3715 = vmatpush1.bf16.msra.mxu0 0
        %3716 = vmatprep.subr.bf16.mxu0 0
        %3717 = vmatpush1.bf16.msra.mxu0 0
        %3718 = vmatprep.subr.bf16.mxu0 0
        %3719 = vmatpush1.bf16.msra.mxu0 0
        %3720 = vmatprep.subr.bf16.mxu0 0
        %3721 = vmatpush1.bf16.msra.mxu0 0
        %3722 = vmatprep.mubr.bf16.mxu0 0
        %3723 = vmatmul.mubr.bf16.gmra.mrb[0].mxu0 %v3633
        %v3724 = vpop.f32.mrb[0].mxu0
        %v3725 = vadd.f32 0.0, %v3724
        %v3726 = vpop.f32.mrb[0].mxu0
        %v3727 = vadd.f32 0.0, %v3726
        %v3728 = vpop.f32.mrb[0].mxu0
        %v3729 = vadd.f32 0.0, %v3728
        %v3730 = vpop.f32.mrb[0].mxu0
        %v3731 = vadd.f32 0.0, %v3730
        %3732 = vdwg.mxu0
        %v3733 = vadd.f32 %v3605, %v3682
        %v3734 = vadd.f32 %v3606, %v3684
        %v3735 = vadd.f32 %v3607, %v3725
        %v3736 = vadd.f32 %v3608, %v3727
        %v3737 = vadd.f32 %v3609, %v3686
        %v3738 = vadd.f32 %v3610, %v3688
        %v3739 = vadd.f32 %v3611, %v3729
        %v3740 = vadd.f32 %v3612, %v3731
        %v3741 = vld [vmem:[%s3 + $0xb0] sm:$0xf]
        %v3742 = vld [vmem:[%s3 + $0xb4] sm:$0xf]
        %v3745 = vunpack.c.l.b16 %v3741
        %v3746 = vunpack.c.l.b16 %v3742
        %v3747 = vpack.c.b16 %v3746, %v3745
        %3748 = vrot.lane.b32.xlu0 %v927, 28
        %v3749 = vpop.permute.xlu0 %3748
        %3750 = vrot.lane.b32.xlu0 %v928, 28
        %v3751 = vpop.permute.xlu0 %3750
        %3752 = vrot.lane.b32.xlu0 %v929, 28
        %v3753 = vpop.permute.xlu0 %3752
        %3754 = vrot.lane.b32.xlu0 %v930, 28
        %v3755 = vpop.permute.xlu0 %3754
        %vm3756 = vcmask 228352
        %v3757 = vsel %vm3756, %v3749, %v3751
        %v3758 = vsel %vm3756, %v3751, %v3753
        %v3759 = vsel %vm3756, %v3753, %v3755
        %v3761 = vsel %vm956, %v3747, 0
        %v3764 = vsel %vm960, %v3757, 0
        %v3767 = vsel %vm960, %v3758, 0
        %v3770 = vsel %vm960, %v3759, 0
        %v3773 = vsel %vm960, %v3755, 0
        %3775 = vmatprep.subr.bf16.mxu0 %v3767
        %3776 = vmatpush1.bf16.msra.mxu0 %v3764
        %3777 = vmatprep.subr.bf16.mxu0 0
        %3778 = vmatpush1.bf16.msra.mxu0 0
        %3779 = vmatprep.subr.bf16.mxu0 0
        %3780 = vmatpush1.bf16.msra.mxu0 0
        %3781 = vmatprep.subr.bf16.mxu0 0
        %3782 = vmatpush1.bf16.msra.mxu0 0
        %3783 = vmatprep.subr.bf16.mxu0 0
        %3784 = vmatpush1.bf16.msra.mxu0 0
        %3785 = vmatprep.subr.bf16.mxu0 0
        %3786 = vmatpush1.bf16.msra.mxu0 0
        %3787 = vmatprep.subr.bf16.mxu0 0
        %3788 = vmatpush1.bf16.msra.mxu0 0
        %3789 = vmatprep.subr.bf16.mxu0 0
        %3790 = vmatpush1.bf16.msra.mxu0 0
        %3791 = vmatprep.subr.bf16.mxu0 0
        %3792 = vmatpush1.bf16.msra.mxu0 0
        %3793 = vmatprep.subr.bf16.mxu0 0
        %3794 = vmatpush1.bf16.msra.mxu0 0
        %3795 = vmatprep.subr.bf16.mxu0 0
        %3796 = vmatpush1.bf16.msra.mxu0 0
        %3797 = vmatprep.subr.bf16.mxu0 0
        %3798 = vmatpush1.bf16.msra.mxu0 0
        %3799 = vmatprep.subr.bf16.mxu0 0
        %3800 = vmatpush1.bf16.msra.mxu0 0
        %3801 = vmatprep.subr.bf16.mxu0 0
        %3802 = vmatpush1.bf16.msra.mxu0 0
        %3803 = vmatprep.subr.bf16.mxu0 0
        %3804 = vmatpush1.bf16.msra.mxu0 0
        %3805 = vmatprep.subr.bf16.mxu0 0
        %3806 = vmatpush1.bf16.msra.mxu0 0
        %3807 = vmatprep.mubr.bf16.mxu0 0
        %3808 = vmatmul.mubr.bf16.gmra.mrb[0].mxu0 %v3761
        %v3809 = vpop.f32.mrb[0].mxu0
        %v3810 = vadd.f32 0.0, %v3809
        %v3811 = vpop.f32.mrb[0].mxu0
        %v3812 = vadd.f32 0.0, %v3811
        %v3813 = vpop.f32.mrb[0].mxu0
        %v3814 = vadd.f32 0.0, %v3813
        %v3815 = vpop.f32.mrb[0].mxu0
        %v3816 = vadd.f32 0.0, %v3815
        %3817 = vdwg.mxu0
        %3818 = vmatprep.subr.bf16.mxu0 %v3773
        %3819 = vmatpush1.bf16.msra.mxu0 %v3770
        %3820 = vmatprep.subr.bf16.mxu0 0
        %3821 = vmatpush1.bf16.msra.mxu0 0
        %3822 = vmatprep.subr.bf16.mxu0 0
        %3823 = vmatpush1.bf16.msra.mxu0 0
        %3824 = vmatprep.subr.bf16.mxu0 0
        %3825 = vmatpush1.bf16.msra.mxu0 0
        %3826 = vmatprep.subr.bf16.mxu0 0
        %3827 = vmatpush1.bf16.msra.mxu0 0
        %3828 = vmatprep.subr.bf16.mxu0 0
        %3829 = vmatpush1.bf16.msra.mxu0 0
        %3830 = vmatprep.subr.bf16.mxu0 0
        %3831 = vmatpush1.bf16.msra.mxu0 0
        %3832 = vmatprep.subr.bf16.mxu0 0
        %3833 = vmatpush1.bf16.msra.mxu0 0
        %3834 = vmatprep.subr.bf16.mxu0 0
        %3835 = vmatpush1.bf16.msra.mxu0 0
        %3836 = vmatprep.subr.bf16.mxu0 0
        %3837 = vmatpush1.bf16.msra.mxu0 0
        %3838 = vmatprep.subr.bf16.mxu0 0
        %3839 = vmatpush1.bf16.msra.mxu0 0
        %3840 = vmatprep.subr.bf16.mxu0 0
        %3841 = vmatpush1.bf16.msra.mxu0 0
        %3842 = vmatprep.subr.bf16.mxu0 0
        %3843 = vmatpush1.bf16.msra.mxu0 0
        %3844 = vmatprep.subr.bf16.mxu0 0
        %3845 = vmatpush1.bf16.msra.mxu0 0
        %3846 = vmatprep.subr.bf16.mxu0 0
        %3847 = vmatpush1.bf16.msra.mxu0 0
        %3848 = vmatprep.subr.bf16.mxu0 0
        %3849 = vmatpush1.bf16.msra.mxu0 0
        %3850 = vmatprep.mubr.bf16.mxu0 0
        %3851 = vmatmul.mubr.bf16.gmra.mrb[0].mxu0 %v3761
        %v3852 = vpop.f32.mrb[0].mxu0
        %v3853 = vadd.f32 0.0, %v3852
        %v3854 = vpop.f32.mrb[0].mxu0
        %v3855 = vadd.f32 0.0, %v3854
        %v3856 = vpop.f32.mrb[0].mxu0
        %v3857 = vadd.f32 0.0, %v3856
        %v3858 = vpop.f32.mrb[0].mxu0
        %v3859 = vadd.f32 0.0, %v3858
        %3860 = vdwg.mxu0
        %v3861 = vadd.f32 %v3733, %v3810
        %v3862 = vadd.f32 %v3734, %v3812
        %v3863 = vadd.f32 %v3735, %v3853
        %v3864 = vadd.f32 %v3736, %v3855
        %v3865 = vadd.f32 %v3737, %v3814
        %v3866 = vadd.f32 %v3738, %v3816
        %v3867 = vadd.f32 %v3739, %v3857
        %v3868 = vadd.f32 %v3740, %v3859
        %v3869 = vld [vmem:[%s3 + $0xb8] sm:$0xf]
        %v3870 = vld [vmem:[%s3 + $0xbc] sm:$0xf]
        %v3873 = vunpack.c.l.b16 %v3869
        %v3874 = vunpack.c.l.b16 %v3870
        %v3875 = vpack.c.b16 %v3874, %v3873
        %3876 = vrot.lane.b32.xlu0 %v927, 26
        %v3877 = vpop.permute.xlu0 %3876
        %3878 = vrot.lane.b32.xlu0 %v928, 26
        %v3879 = vpop.permute.xlu0 %3878
        %3880 = vrot.lane.b32.xlu0 %v929, 26
        %v3881 = vpop.permute.xlu0 %3880
        %3882 = vrot.lane.b32.xlu0 %v930, 26
        %v3883 = vpop.permute.xlu0 %3882
        %vm3884 = vcmask 211968
        %v3885 = vsel %vm3884, %v3877, %v3879
        %v3886 = vsel %vm3884, %v3879, %v3881
        %v3887 = vsel %vm3884, %v3881, %v3883
        %v3889 = vsel %vm956, %v3875, 0
        %v3892 = vsel %vm960, %v3885, 0
        %v3895 = vsel %vm960, %v3886, 0
        %v3898 = vsel %vm960, %v3887, 0
        %v3901 = vsel %vm960, %v3883, 0
        %3903 = vmatprep.subr.bf16.mxu0 %v3895
        %3904 = vmatpush1.bf16.msra.mxu0 %v3892
        %3905 = vmatprep.subr.bf16.mxu0 0
        %3906 = vmatpush1.bf16.msra.mxu0 0
        %3907 = vmatprep.subr.bf16.mxu0 0
        %3908 = vmatpush1.bf16.msra.mxu0 0
        %3909 = vmatprep.subr.bf16.mxu0 0
        %3910 = vmatpush1.bf16.msra.mxu0 0
        %3911 = vmatprep.subr.bf16.mxu0 0
        %3912 = vmatpush1.bf16.msra.mxu0 0
        %3913 = vmatprep.subr.bf16.mxu0 0
        %3914 = vmatpush1.bf16.msra.mxu0 0
        %3915 = vmatprep.subr.bf16.mxu0 0
        %3916 = vmatpush1.bf16.msra.mxu0 0
        %3917 = vmatprep.subr.bf16.mxu0 0
        %3918 = vmatpush1.bf16.msra.mxu0 0
        %3919 = vmatprep.subr.bf16.mxu0 0
        %3920 = vmatpush1.bf16.msra.mxu0 0
        %3921 = vmatprep.subr.bf16.mxu0 0
        %3922 = vmatpush1.bf16.msra.mxu0 0
        %3923 = vmatprep.subr.bf16.mxu0 0
        %3924 = vmatpush1.bf16.msra.mxu0 0
        %3925 = vmatprep.subr.bf16.mxu0 0
        %3926 = vmatpush1.bf16.msra.mxu0 0
        %3927 = vmatprep.subr.bf16.mxu0 0
        %3928 = vmatpush1.bf16.msra.mxu0 0
        %3929 = vmatprep.subr.bf16.mxu0 0
        %3930 = vmatpush1.bf16.msra.mxu0 0
        %3931 = vmatprep.subr.bf16.mxu0 0
        %3932 = vmatpush1.bf16.msra.mxu0 0
        %3933 = vmatprep.subr.bf16.mxu0 0
        %3934 = vmatpush1.bf16.msra.mxu0 0
        %3935 = vmatprep.mubr.bf16.mxu0 0
        %3936 = vmatmul.mubr.bf16.gmra.mrb[0].mxu0 %v3889
        %v3937 = vpop.f32.mrb[0].mxu0
        %v3938 = vadd.f32 0.0, %v3937
        %v3939 = vpop.f32.mrb[0].mxu0
        %v3940 = vadd.f32 0.0, %v3939
        %v3941 = vpop.f32.mrb[0].mxu0
        %v3942 = vadd.f32 0.0, %v3941
        %v3943 = vpop.f32.mrb[0].mxu0
        %v3944 = vadd.f32 0.0, %v3943
        %3945 = vdwg.mxu0
        %3946 = vmatprep.subr.bf16.mxu0 %v3901
        %3947 = vmatpush1.bf16.msra.mxu0 %v3898
        %3948 = vmatprep.subr.bf16.mxu0 0
        %3949 = vmatpush1.bf16.msra.mxu0 0
        %3950 = vmatprep.subr.bf16.mxu0 0
        %3951 = vmatpush1.bf16.msra.mxu0 0
        %3952 = vmatprep.subr.bf16.mxu0 0
        %3953 = vmatpush1.bf16.msra.mxu0 0
        %3954 = vmatprep.subr.bf16.mxu0 0
        %3955 = vmatpush1.bf16.msra.mxu0 0
        %3956 = vmatprep.subr.bf16.mxu0 0
        %3957 = vmatpush1.bf16.msra.mxu0 0
        %3958 = vmatprep.subr.bf16.mxu0 0
        %3959 = vmatpush1.bf16.msra.mxu0 0
        %3960 = vmatprep.subr.bf16.mxu0 0
        %3961 = vmatpush1.bf16.msra.mxu0 0
        %3962 = vmatprep.subr.bf16.mxu0 0
        %3963 = vmatpush1.bf16.msra.mxu0 0
        %3964 = vmatprep.subr.bf16.mxu0 0
        %3965 = vmatpush1.bf16.msra.mxu0 0
        %3966 = vmatprep.subr.bf16.mxu0 0
        %3967 = vmatpush1.bf16.msra.mxu0 0
        %3968 = vmatprep.subr.bf16.mxu0 0
        %3969 = vmatpush1.bf16.msra.mxu0 0
        %3970 = vmatprep.subr.bf16.mxu0 0
        %3971 = vmatpush1.bf16.msra.mxu0 0
        %3972 = vmatprep.subr.bf16.mxu0 0
        %3973 = vmatpush1.bf16.msra.mxu0 0
        %3974 = vmatprep.subr.bf16.mxu0 0
        %3975 = vmatpush1.bf16.msra.mxu0 0
        %3976 = vmatprep.subr.bf16.mxu0 0
        %3977 = vmatpush1.bf16.msra.mxu0 0
        %3978 = vmatprep.mubr.bf16.mxu0 0
        %3979 = vmatmul.mubr.bf16.gmra.mrb[0].mxu0 %v3889
        %v3980 = vpop.f32.mrb[0].mxu0
        %v3981 = vadd.f32 0.0, %v3980
        %v3982 = vpop.f32.mrb[0].mxu0
        %v3983 = vadd.f32 0.0, %v3982
        %v3984 = vpop.f32.mrb[0].mxu0
        %v3985 = vadd.f32 0.0, %v3984
        %v3986 = vpop.f32.mrb[0].mxu0
        %v3987 = vadd.f32 0.0, %v3986
        %3988 = vdwg.mxu0
        %v3989 = vadd.f32 %v3861, %v3938
        %v3990 = vadd.f32 %v3862, %v3940
        %v3991 = vadd.f32 %v3863, %v3981
        %v3992 = vadd.f32 %v3864, %v3983
        %v3993 = vadd.f32 %v3865, %v3942
        %v3994 = vadd.f32 %v3866, %v3944
        %v3995 = vadd.f32 %v3867, %v3985
        %v3996 = vadd.f32 %v3868, %v3987
        %v3997 = vld [vmem:[%s3 + $0xc0] sm:$0xf]
        %v3998 = vld [vmem:[%s3 + $0xc4] sm:$0xf]
        %v4001 = vunpack.c.l.b16 %v3997
        %v4002 = vunpack.c.l.b16 %v3998
        %v4003 = vpack.c.b16 %v4002, %v4001
        %4004 = vrot.lane.b32.xlu0 %v927, 24
        %v4005 = vpop.permute.xlu0 %4004
        %4006 = vrot.lane.b32.xlu0 %v928, 24
        %v4007 = vpop.permute.xlu0 %4006
        %4008 = vrot.lane.b32.xlu0 %v929, 24
        %v4009 = vpop.permute.xlu0 %4008
        %4010 = vrot.lane.b32.xlu0 %v930, 24
        %v4011 = vpop.permute.xlu0 %4010
        %vm4012 = vcmask 195584
        %v4013 = vsel %vm4012, %v4005, %v4007
        %v4014 = vsel %vm4012, %v4007, %v4009
        %v4015 = vsel %vm4012, %v4009, %v4011
        %v4017 = vsel %vm956, %v4003, 0
        %v4020 = vsel %vm960, %v4013, 0
        %v4023 = vsel %vm960, %v4014, 0
        %v4026 = vsel %vm960, %v4015, 0
        %v4029 = vsel %vm960, %v4011, 0
        %4031 = vmatprep.subr.bf16.mxu0 %v4023
        %4032 = vmatpush1.bf16.msra.mxu0 %v4020
        %4033 = vmatprep.subr.bf16.mxu0 0
        %4034 = vmatpush1.bf16.msra.mxu0 0
        %4035 = vmatprep.subr.bf16.mxu0 0
        %4036 = vmatpush1.bf16.msra.mxu0 0
        %4037 = vmatprep.subr.bf16.mxu0 0
        %4038 = vmatpush1.bf16.msra.mxu0 0
        %4039 = vmatprep.subr.bf16.mxu0 0
        %4040 = vmatpush1.bf16.msra.mxu0 0
        %4041 = vmatprep.subr.bf16.mxu0 0
        %4042 = vmatpush1.bf16.msra.mxu0 0
        %4043 = vmatprep.subr.bf16.mxu0 0
        %4044 = vmatpush1.bf16.msra.mxu0 0
        %4045 = vmatprep.subr.bf16.mxu0 0
        %4046 = vmatpush1.bf16.msra.mxu0 0
        %4047 = vmatprep.subr.bf16.mxu0 0
        %4048 = vmatpush1.bf16.msra.mxu0 0
        %4049 = vmatprep.subr.bf16.mxu0 0
        %4050 = vmatpush1.bf16.msra.mxu0 0
        %4051 = vmatprep.subr.bf16.mxu0 0
        %4052 = vmatpush1.bf16.msra.mxu0 0
        %4053 = vmatprep.subr.bf16.mxu0 0
        %4054 = vmatpush1.bf16.msra.mxu0 0
        %4055 = vmatprep.subr.bf16.mxu0 0
        %4056 = vmatpush1.bf16.msra.mxu0 0
        %4057 = vmatprep.subr.bf16.mxu0 0
        %4058 = vmatpush1.bf16.msra.mxu0 0
        %4059 = vmatprep.subr.bf16.mxu0 0
        %4060 = vmatpush1.bf16.msra.mxu0 0
        %4061 = vmatprep.subr.bf16.mxu0 0
        %4062 = vmatpush1.bf16.msra.mxu0 0
        %4063 = vmatprep.mubr.bf16.mxu0 0
        %4064 = vmatmul.mubr.bf16.gmra.mrb[0].mxu0 %v4017
        %v4065 = vpop.f32.mrb[0].mxu0
        %v4066 = vadd.f32 0.0, %v4065
        %v4067 = vpop.f32.mrb[0].mxu0
        %v4068 = vadd.f32 0.0, %v4067
        %v4069 = vpop.f32.mrb[0].mxu0
        %v4070 = vadd.f32 0.0, %v4069
        %v4071 = vpop.f32.mrb[0].mxu0
        %v4072 = vadd.f32 0.0, %v4071
        %4073 = vdwg.mxu0
        %4074 = vmatprep.subr.bf16.mxu0 %v4029
        %4075 = vmatpush1.bf16.msra.mxu0 %v4026
        %4076 = vmatprep.subr.bf16.mxu0 0
        %4077 = vmatpush1.bf16.msra.mxu0 0
        %4078 = vmatprep.subr.bf16.mxu0 0
        %4079 = vmatpush1.bf16.msra.mxu0 0
        %4080 = vmatprep.subr.bf16.mxu0 0
        %4081 = vmatpush1.bf16.msra.mxu0 0
        %4082 = vmatprep.subr.bf16.mxu0 0
        %4083 = vmatpush1.bf16.msra.mxu0 0
        %4084 = vmatprep.subr.bf16.mxu0 0
        %4085 = vmatpush1.bf16.msra.mxu0 0
        %4086 = vmatprep.subr.bf16.mxu0 0
        %4087 = vmatpush1.bf16.msra.mxu0 0
        %4088 = vmatprep.subr.bf16.mxu0 0
        %4089 = vmatpush1.bf16.msra.mxu0 0
        %4090 = vmatprep.subr.bf16.mxu0 0
        %4091 = vmatpush1.bf16.msra.mxu0 0
        %4092 = vmatprep.subr.bf16.mxu0 0
        %4093 = vmatpush1.bf16.msra.mxu0 0
        %4094 = vmatprep.subr.bf16.mxu0 0
        %4095 = vmatpush1.bf16.msra.mxu0 0
        %4096 = vmatprep.subr.bf16.mxu0 0
        %4097 = vmatpush1.bf16.msra.mxu0 0
        %4098 = vmatprep.subr.bf16.mxu0 0
        %4099 = vmatpush1.bf16.msra.mxu0 0
        %4100 = vmatprep.subr.bf16.mxu0 0
        %4101 = vmatpush1.bf16.msra.mxu0 0
        %4102 = vmatprep.subr.bf16.mxu0 0
        %4103 = vmatpush1.bf16.msra.mxu0 0
        %4104 = vmatprep.subr.bf16.mxu0 0
        %4105 = vmatpush1.bf16.msra.mxu0 0
        %4106 = vmatprep.mubr.bf16.mxu0 0
        %4107 = vmatmul.mubr.bf16.gmra.mrb[0].mxu0 %v4017
        %v4108 = vpop.f32.mrb[0].mxu0
        %v4109 = vadd.f32 0.0, %v4108
        %v4110 = vpop.f32.mrb[0].mxu0
        %v4111 = vadd.f32 0.0, %v4110
        %v4112 = vpop.f32.mrb[0].mxu0
        %v4113 = vadd.f32 0.0, %v4112
        %v4114 = vpop.f32.mrb[0].mxu0
        %v4115 = vadd.f32 0.0, %v4114
        %4116 = vdwg.mxu0
        %v4117 = vadd.f32 %v3989, %v4066
        %v4118 = vadd.f32 %v3990, %v4068
        %v4119 = vadd.f32 %v3991, %v4109
        %v4120 = vadd.f32 %v3992, %v4111
        %v4121 = vadd.f32 %v3993, %v4070
        %v4122 = vadd.f32 %v3994, %v4072
        %v4123 = vadd.f32 %v3995, %v4113
        %v4124 = vadd.f32 %v3996, %v4115
        %v4125 = vpack.c.bf16 %v4121, %v4117
        %v4126 = vpack.c.bf16 %v4122, %v4118
        %v4127 = vpack.c.bf16 %v4123, %v4119
        %v4128 = vpack.c.bf16 %v4124, %v4120
        %v4129 = vld [vmem:[%s5] sm:$0xf]
        %v4130 = vld [vmem:[%s5 + $0x4] sm:$0xf]
        %v4131 = vld [vmem:[%s5 + $0x8] sm:$0xf]
        %v4132 = vld [vmem:[%s5 + $0xc] sm:$0xf]
        %v4133 = vld [vmem:[%s5 + $0x10] sm:$0xf]
        %v4134 = vld [vmem:[%s5 + $0x14] sm:$0xf]
        %v4135 = vld [vmem:[%s5 + $0x18] sm:$0xf]
        %v4136 = vld [vmem:[%s5 + $0x1c] sm:$0xf]
        %v4137 = vld [vmem:[%s5 + $0x20] sm:$0xf]
        %v4138 = vld [vmem:[%s5 + $0x24] sm:$0xf]
        %v4139 = vld [vmem:[%s5 + $0x28] sm:$0xf]
        %v4140 = vld [vmem:[%s5 + $0x2c] sm:$0xf]
        %v4141 = vld [vmem:[%s5 + $0x30] sm:$0xf]
        %v4142 = vld [vmem:[%s5 + $0x34] sm:$0xf]
        %v4143 = vld [vmem:[%s5 + $0x38] sm:$0xf]
        %v4144 = vld [vmem:[%s5 + $0x3c] sm:$0xf]
        %v4145 = vld [vmem:[%s5 + $0x40] sm:$0xf]
        %v4146 = vld [vmem:[%s5 + $0x44] sm:$0xf]
        %v4147 = vld [vmem:[%s5 + $0x48] sm:$0xf]
        %v4148 = vld [vmem:[%s5 + $0x4c] sm:$0xf]
        %v4149 = vld [vmem:[%s5 + $0x50] sm:$0xf]
        %v4150 = vld [vmem:[%s5 + $0x54] sm:$0xf]
        %v4151 = vld [vmem:[%s5 + $0x58] sm:$0xf]
        %v4152 = vld [vmem:[%s5 + $0x5c] sm:$0xf]
        %v4153 = vld [vmem:[%s5 + $0x60] sm:$0xf]
        %v4154 = vld [vmem:[%s5 + $0x64] sm:$0xf]
        %v4155 = vld [vmem:[%s5 + $0x68] sm:$0xf]
        %v4156 = vld [vmem:[%s5 + $0x6c] sm:$0xf]
        %v4157 = vld [vmem:[%s5 + $0x70] sm:$0xf]
        %v4158 = vld [vmem:[%s5 + $0x74] sm:$0xf]
        %v4159 = vld [vmem:[%s5 + $0x78] sm:$0xf]
        %v4160 = vld [vmem:[%s5 + $0x7c] sm:$0xf]
        %v4161 = vld [vmem:[%s5 + $0x80] sm:$0xf]
        %v4162 = vld [vmem:[%s5 + $0x84] sm:$0xf]
        %v4163 = vld [vmem:[%s5 + $0x88] sm:$0xf]
        %v4164 = vld [vmem:[%s5 + $0x8c] sm:$0xf]
        %v4165 = vld [vmem:[%s5 + $0x90] sm:$0xf]
        %v4166 = vld [vmem:[%s5 + $0x94] sm:$0xf]
        %v4167 = vld [vmem:[%s5 + $0x98] sm:$0xf]
        %v4168 = vld [vmem:[%s5 + $0x9c] sm:$0xf]
        %v4169 = vld [vmem:[%s5 + $0xa0] sm:$0xf]
        %v4170 = vld [vmem:[%s5 + $0xa4] sm:$0xf]
        %v4171 = vld [vmem:[%s5 + $0xa8] sm:$0xf]
        %v4172 = vld [vmem:[%s5 + $0xac] sm:$0xf]
        %v4173 = vld [vmem:[%s5 + $0xb0] sm:$0xf]
        %v4174 = vld [vmem:[%s5 + $0xb4] sm:$0xf]
        %v4175 = vld [vmem:[%s5 + $0xb8] sm:$0xf]
        %v4176 = vld [vmem:[%s5 + $0xbc] sm:$0xf]
        %v4177 = vld [vmem:[%s5 + $0xc0] sm:$0xf]
        %v4178 = vld [vmem:[%s5 + $0xc4] sm:$0xf]
        %v4179 = vld [vmem:[%s5 + $0xc8] sm:$0xf]
        %v4180 = vld [vmem:[%s4] sm:$0xff]
        %v4181 = vld [vmem:[%s4 + $0x8] sm:$0xff]
        %4183 = vset.pattern.permute.xlu0 0
        %4184 = vperm.xlu0 %4183, %v4180
        %v4185 = vpop.permute.xlu0 %4184
        %4188 = vset.pattern.permute.xlu0 0
        %4189 = vperm.xlu0 %4188, %v4181
        %v4190 = vpop.permute.xlu0 %4189
        %v4243 = vunpack.c.l.b16 %v4129
        %v4244 = vunpack.c.l.b16 %v4130
        %v4245 = vunpack.c.l.b16 %v4131
        %v4246 = vunpack.c.l.b16 %v4132
        %v4247 = vunpack.c.l.b16 %v4133
        %v4248 = vunpack.c.l.b16 %v4134
        %v4249 = vunpack.c.l.b16 %v4135
        %v4250 = vunpack.c.l.b16 %v4136
        %v4251 = vunpack.c.l.b16 %v4137
        %v4252 = vunpack.c.l.b16 %v4138
        %v4253 = vunpack.c.l.b16 %v4139
        %v4254 = vunpack.c.l.b16 %v4140
        %v4255 = vunpack.c.l.b16 %v4141
        %v4256 = vunpack.c.l.b16 %v4142
        %v4257 = vunpack.c.l.b16 %v4143
        %v4258 = vunpack.c.l.b16 %v4144
        %v4259 = vunpack.c.l.b16 %v4145
        %v4260 = vunpack.c.l.b16 %v4146
        %v4261 = vunpack.c.l.b16 %v4147
        %v4262 = vunpack.c.l.b16 %v4148
        %v4263 = vunpack.c.l.b16 %v4149
        %v4264 = vunpack.c.l.b16 %v4150
        %v4265 = vunpack.c.l.b16 %v4151
        %v4266 = vunpack.c.l.b16 %v4152
        %v4267 = vunpack.c.l.b16 %v4153
        %v4268 = vunpack.c.l.b16 %v4154
        %v4269 = vunpack.c.l.b16 %v4155
        %v4270 = vunpack.c.l.b16 %v4156
        %v4271 = vunpack.c.l.b16 %v4157
        %v4272 = vunpack.c.l.b16 %v4158
        %v4273 = vunpack.c.l.b16 %v4159
        %v4274 = vunpack.c.l.b16 %v4160
        %v4275 = vunpack.c.l.b16 %v4161
        %v4276 = vunpack.c.l.b16 %v4162
        %v4277 = vunpack.c.l.b16 %v4163
        %v4278 = vunpack.c.l.b16 %v4164
        %v4279 = vunpack.c.l.b16 %v4165
        %v4280 = vunpack.c.l.b16 %v4166
        %v4281 = vunpack.c.l.b16 %v4167
        %v4282 = vunpack.c.l.b16 %v4168
        %v4283 = vunpack.c.l.b16 %v4169
        %v4284 = vunpack.c.l.b16 %v4170
        %v4285 = vunpack.c.l.b16 %v4171
        %v4286 = vunpack.c.l.b16 %v4172
        %v4287 = vunpack.c.l.b16 %v4173
        %v4288 = vunpack.c.l.b16 %v4174
        %v4289 = vunpack.c.l.b16 %v4175
        %v4290 = vunpack.c.l.b16 %v4176
        %v4291 = vunpack.c.l.b16 %v4177
        %v4292 = vunpack.c.l.b16 %v4178
        %v4293 = vunpack.c.l.b16 %v4179
        %v4294 = vpack.c.b16 %v4244, %v4243
        %v4295 = vpack.c.b16 %v4246, %v4245
        %v4296 = vpack.c.b16 %v4248, %v4247
        %v4297 = vpack.c.b16 %v4250, %v4249
        %v4298 = vpack.c.b16 %v4252, %v4251
        %v4299 = vpack.c.b16 %v4254, %v4253
        %v4300 = vpack.c.b16 %v4256, %v4255
        %v4301 = vpack.c.b16 %v4258, %v4257
        %v4302 = vpack.c.b16 %v4260, %v4259
        %v4303 = vpack.c.b16 %v4262, %v4261
        %v4304 = vpack.c.b16 %v4264, %v4263
        %v4305 = vpack.c.b16 %v4266, %v4265
        %v4306 = vpack.c.b16 %v4268, %v4267
        %v4307 = vpack.c.b16 %v4270, %v4269
        %v4308 = vpack.c.b16 %v4272, %v4271
        %v4309 = vpack.c.b16 %v4274, %v4273
        %v4310 = vpack.c.b16 %v4276, %v4275
        %v4311 = vpack.c.b16 %v4278, %v4277
        %v4312 = vpack.c.b16 %v4280, %v4279
        %v4313 = vpack.c.b16 %v4282, %v4281
        %v4314 = vpack.c.b16 %v4284, %v4283
        %v4315 = vpack.c.b16 %v4286, %v4285
        %v4316 = vpack.c.b16 %v4288, %v4287
        %v4317 = vpack.c.b16 %v4290, %v4289
        %v4318 = vpack.c.b16 %v4292, %v4291
        %v4319 = vpack.c.b16 %v4293, %v4293
        %vm4345 = vcmask 195584
        %v4347 = vsel %vm4345, %v4128, 0
        %v4350 = vsel %vm707, %v4319, 0
        %4352 = vmatprep.subr.bf16.mxu0 0
        %4353 = vmatpush1.bf16.msra.mxu0 %v4294
        %4354 = vmatprep.subr.bf16.mxu0 0
        %4355 = vmatpush1.bf16.msra.mxu0 %v4295
        %4356 = vmatprep.subr.bf16.mxu0 0
        %4357 = vmatpush1.bf16.msra.mxu0 %v4296
        %4358 = vmatprep.subr.bf16.mxu0 0
        %4359 = vmatpush1.bf16.msra.mxu0 %v4297
        %4360 = vmatprep.subr.bf16.mxu0 0
        %4361 = vmatpush1.bf16.msra.mxu0 %v4298
        %4362 = vmatprep.subr.bf16.mxu0 0
        %4363 = vmatpush1.bf16.msra.mxu0 %v4299
        %4364 = vmatprep.subr.bf16.mxu0 0
        %4365 = vmatpush1.bf16.msra.mxu0 %v4300
        %4366 = vmatprep.subr.bf16.mxu0 0
        %4367 = vmatpush1.bf16.msra.mxu0 %v4301
        %4368 = vmatprep.subr.bf16.mxu0 0
        %4369 = vmatpush1.bf16.msra.mxu0 %v4302
        %4370 = vmatprep.subr.bf16.mxu0 0
        %4371 = vmatpush1.bf16.msra.mxu0 %v4303
        %4372 = vmatprep.subr.bf16.mxu0 0
        %4373 = vmatpush1.bf16.msra.mxu0 %v4304
        %4374 = vmatprep.subr.bf16.mxu0 0
        %4375 = vmatpush1.bf16.msra.mxu0 %v4305
        %4376 = vmatprep.subr.bf16.mxu0 0
        %4377 = vmatpush1.bf16.msra.mxu0 %v4306
        %4378 = vmatprep.subr.bf16.mxu0 0
        %4379 = vmatpush1.bf16.msra.mxu0 %v4307
        %4380 = vmatprep.subr.bf16.mxu0 0
        %4381 = vmatpush1.bf16.msra.mxu0 %v4308
        %4382 = vmatprep.subr.bf16.mxu0 0
        %4383 = vmatpush1.bf16.msra.mxu0 %v4309
        %4384 = vmatprep.mubr.bf16.mxu0 %v4126
        %4385 = vmatmul.mubr.bf16.gmra.mrb[0].mxu0 %v4125
        %v4386 = vpop.f32.mrb[0].mxu0
        %v4387 = vadd.f32 %v4185, %v4386
        %v4388 = vpop.f32.mrb[0].mxu0
        %v4389 = vpop.f32.mrb[0].mxu0
        %v4390 = vadd.f32 %v4190, %v4389
        %v4391 = vpop.f32.mrb[0].mxu0
        %4392 = vdwg.mxu0
        %4393 = vmatprep.subr.bf16.mxu0 0
        %4394 = vmatpush1.bf16.msra.mxu0 %v4310
        %4395 = vmatprep.subr.bf16.mxu0 0
        %4396 = vmatpush1.bf16.msra.mxu0 %v4311
        %4397 = vmatprep.subr.bf16.mxu0 0
        %4398 = vmatpush1.bf16.msra.mxu0 %v4312
        %4399 = vmatprep.subr.bf16.mxu0 0
        %4400 = vmatpush1.bf16.msra.mxu0 %v4313
        %4401 = vmatprep.subr.bf16.mxu0 0
        %4402 = vmatpush1.bf16.msra.mxu0 %v4314
        %4403 = vmatprep.subr.bf16.mxu0 0
        %4404 = vmatpush1.bf16.msra.mxu0 %v4315
        %4405 = vmatprep.subr.bf16.mxu0 0
        %4406 = vmatpush1.bf16.msra.mxu0 %v4316
        %4407 = vmatprep.subr.bf16.mxu0 0
        %4408 = vmatpush1.bf16.msra.mxu0 %v4317
        %4409 = vmatprep.subr.bf16.mxu0 0
        %4410 = vmatpush1.bf16.msra.mxu0 %v4318
        %4411 = vmatprep.subr.bf16.mxu0 0
        %4412 = vmatpush1.bf16.msra.mxu0 %v4350
        %4413 = vmatprep.subr.bf16.mxu0 0
        %4414 = vmatpush1.bf16.msra.mxu0 0
        %4415 = vmatprep.subr.bf16.mxu0 0
        %4416 = vmatpush1.bf16.msra.mxu0 0
        %4417 = vmatprep.subr.bf16.mxu0 0
        %4418 = vmatpush1.bf16.msra.mxu0 0
        %4419 = vmatprep.subr.bf16.mxu0 0
        %4420 = vmatpush1.bf16.msra.mxu0 0
        %4421 = vmatprep.subr.bf16.mxu0 0
        %4422 = vmatpush1.bf16.msra.mxu0 0
        %4423 = vmatprep.subr.bf16.mxu0 0
        %4424 = vmatpush1.bf16.msra.mxu0 0
        %4425 = vmatprep.mubr.bf16.mxu0 %v4347
        %4426 = vmatmul.mubr.bf16.gmra.mrb[0].mxu0 %v4127
        %v4427 = vpop.f32.mrb[0].mxu0
        %v4428 = vadd.f32 %v4387, %v4427
        %v4429 = vpop.f32.mrb[0].mxu0
        %v4430 = vpop.f32.mrb[0].mxu0
        %v4431 = vadd.f32 %v4390, %v4430
        %v4432 = vpop.f32.mrb[0].mxu0
        %4433 = vdwg.mxu0
        %v4434 = vmax.f32 %v4428, 0.0
        %v4435 = vmax.f32 %v4431, 0.0
        %4438 = vrot.lane.b32.xlu0 %v4434, 127
        %v4439 = vpop.permute.xlu0 %4438
        %4440 = vrot.lane.b32.xlu0 %v4435, 127
        %v4441 = vpop.permute.xlu0 %4440
        %v4444 = vmax.f32 %v4434, %v4439
        %v4445 = vmax.f32 %v4435, %v4441
        %4448 = vrot.lane.b32.xlu0 %v4444, 120
        %v4449 = vpop.permute.xlu0 %4448
        %4450 = vrot.lane.b32.xlu0 %v4445, 120
        %v4451 = vpop.permute.xlu0 %4450
        %v4454 = vmax.f32 %v4444, %v4449
        %v4455 = vmax.f32 %v4445, %v4451
        %v4456 = vpack.c.bf16 %v4455, %v4454
        %v4457 = vld [vmem:[%s6] sm:$0xf]
        %v4458 = vld [vmem:[%s6 + $0x4] sm:$0xf]
        %v4459 = vld [vmem:[%s6 + $0x8] sm:$0xf]
        %v4460 = vld [vmem:[%s6 + $0xc] sm:$0xf]
        %v4461 = vld [vmem:[%s6 + $0x10] sm:$0xf]
        %v4462 = vld [vmem:[%s6 + $0x14] sm:$0xf]
        %v4463 = vld [vmem:[%s6 + $0x18] sm:$0xf]
        %v4471 = vunpack.c.l.b16 %v4457
        %v4472 = vunpack.c.l.b16 %v4458
        %v4473 = vunpack.c.l.b16 %v4459
        %v4474 = vunpack.c.l.b16 %v4460
        %v4475 = vunpack.c.l.b16 %v4461
        %v4476 = vunpack.c.l.b16 %v4462
        %v4477 = vunpack.c.l.b16 %v4463
        %v4478 = vpack.c.b16 %v4472, %v4471
        %v4479 = vpack.c.b16 %v4474, %v4473
        %v4480 = vpack.c.b16 %v4476, %v4475
        %v4481 = vpack.c.b16 %v4477, %v4477
        %vm4485 = vcmask 449536
        %v4487 = vsel %vm4485, %v4456, 0
        %v4489 = vsel %vm960, 4294967295, 65535
        %v4490 = vsel %vm707, %v4489, 0
        %v4492 = vand.u32 %v4481, %v4490
        %4494 = vmatprep.subr.bf16.mxu0 0
        %4495 = vmatpush1.bf16.msra.mxu0 %v4478
        %4496 = vmatprep.subr.bf16.mxu0 0
        %4497 = vmatpush1.bf16.msra.mxu0 %v4479
        %4498 = vmatprep.subr.bf16.mxu0 0
        %4499 = vmatpush1.bf16.msra.mxu0 %v4480
        %4500 = vmatprep.subr.bf16.mxu0 0
        %4501 = vmatpush1.bf16.msra.mxu0 %v4492
        %4502 = vmatprep.subr.bf16.mxu0 0
        %4503 = vmatpush1.bf16.msra.mxu0 0
        %4504 = vmatprep.subr.bf16.mxu0 0
        %4505 = vmatpush1.bf16.msra.mxu0 0
        %4506 = vmatprep.subr.bf16.mxu0 0
        %4507 = vmatpush1.bf16.msra.mxu0 0
        %4508 = vmatprep.subr.bf16.mxu0 0
        %4509 = vmatpush1.bf16.msra.mxu0 0
        %4510 = vmatprep.subr.bf16.mxu0 0
        %4511 = vmatpush1.bf16.msra.mxu0 0
        %4512 = vmatprep.subr.bf16.mxu0 0
        %4513 = vmatpush1.bf16.msra.mxu0 0
        %4514 = vmatprep.subr.bf16.mxu0 0
        %4515 = vmatpush1.bf16.msra.mxu0 0
        %4516 = vmatprep.subr.bf16.mxu0 0
        %4517 = vmatpush1.bf16.msra.mxu0 0
        %4518 = vmatprep.subr.bf16.mxu0 0
        %4519 = vmatpush1.bf16.msra.mxu0 0
        %4520 = vmatprep.subr.bf16.mxu0 0
        %4521 = vmatpush1.bf16.msra.mxu0 0
        %4522 = vmatprep.subr.bf16.mxu0 0
        %4523 = vmatpush1.bf16.msra.mxu0 0
        %4524 = vmatprep.subr.bf16.mxu0 0
        %4525 = vmatpush1.bf16.msra.mxu0 0
        %4526 = vmatprep.mubr.bf16.mxu0 0
        %4527 = vmatmul.mubr.bf16.gmra.mrb[0].mxu0 %v4487
        %v4528 = vpop.f32.mrb[0].mxu0
        %v4529 = vadd.f32 0.0, %v4528
        %v4530 = vpop.f32.mrb[0].mxu0
        %v4531 = vpop.f32.mrb[0].mxu0
        %v4532 = vadd.f32 0.0, %v4531
        %v4533 = vpop.f32.mrb[0].mxu0
        %4534 = vdwg.mxu0
        %vm4535 = vcmp.lt.s32.totalorder %v437, 16
        %vm4536 = vmand %vm438, %vm4535
        %4537 = vst.msk [vmem:[#allocation3] sm:$0x1] %vm4536, %v4529
        %v4540 = vunpack.c.l.s4 1966171168
        %v4541 = vunpack.c.0.s8 %v4540
        %v4542 = vlaneseq
        %v4543 = vshrl.u32 %v4542, 7
        %v4544 = vsub.s32 %v4541, %v4543
        %v4545 = vrot.slane %v4529, %v4544
        %v4546 = vcombine.high %v4545, %v4545
        %v4548 = vunpack.c.l.s4 1966171168
        %v4549 = vunpack.c.0.s8 %v4548
        %v4550 = vlaneseq
        %v4551 = vshrl.u32 %v4550, 7
        %v4552 = vsub.s32 %v4549, %v4551
        %v4553 = vrot.slane %v4545, %v4552
        %v4555 = vunpack.c.l.s4 1966171168
        %v4556 = vunpack.c.0.s8 %v4555
        %v4557 = vlaneseq
        %v4558 = vshrl.u32 %v4557, 7
        %v4559 = vsub.s32 %v4556, %v4558
        %v4560 = vrot.slane %v4546, %v4559
        %4561 = vrot.lane.b32.xlu0 %v4560, 16
        %v4562 = vpop.permute.xlu0 %4561
        %vm4564 = vcmp.ge.s32.totalorder %v437, 16
        %vm4565 = vcmp.lt.s32.totalorder %v437, 32
        %vm4566 = vmand %vm4564, %vm4565
        %4567 = vst.msk [vmem:[#allocation3] sm:$0x1] %vm4566, %v4562
        %v4568 = vcombine.high %v4553, %v4553
        %4569 = vrot.lane.b32.xlu0 %v4568, 32
        %v4570 = vpop.permute.xlu0 %4569
        %vm4572 = vcmp.ge.s32.totalorder %v437, 32
        %vm4573 = vcmp.lt.s32.totalorder %v437, 48
        %vm4574 = vmand %vm4572, %vm4573
        %4575 = vst.msk [vmem:[#allocation3] sm:$0x1] %vm4574, %v4570
        %v4576 = vcombine.high %v4560, %v4560
        %4577 = vrot.lane.b32.xlu0 %v4576, 48
        %v4578 = vpop.permute.xlu0 %4577
        %vm4580 = vcmp.ge.s32.totalorder %v437, 48
        %vm4581 = vcmp.lt.s32.totalorder %v437, 64
        %vm4582 = vmand %vm4580, %vm4581
        %4583 = vst.msk [vmem:[#allocation3] sm:$0x1] %vm4582, %v4578
        %v4584 = vcombine.high %v4529, %v4529
        %v4586 = vunpack.c.l.s4 1966171168
        %v4587 = vunpack.c.0.s8 %v4586
        %v4588 = vlaneseq
        %v4589 = vshrl.u32 %v4588, 7
        %v4590 = vsub.s32 %v4587, %v4589
        %v4591 = vrot.slane %v4584, %v4590
        %v4593 = vunpack.c.l.s4 1966171168
        %v4594 = vunpack.c.0.s8 %v4593
        %v4595 = vlaneseq
        %v4596 = vshrl.u32 %v4595, 7
        %v4597 = vsub.s32 %v4594, %v4596
        %v4598 = vrot.slane %v4591, %v4597
        %4599 = vrot.lane.b32.xlu0 %v4598, 64
        %v4600 = vpop.permute.xlu0 %4599
        %vm4602 = vcmp.ge.s32.totalorder %v437, 64
        %vm4603 = vcmp.lt.s32.totalorder %v437, 80
        %vm4604 = vmand %vm4602, %vm4603
        %4605 = vst.msk [vmem:[#allocation3] sm:$0x1] %vm4604, %v4600
        %v4606 = vcombine.high %v4591, %v4591
        %v4608 = vunpack.c.l.s4 1966171168
        %v4609 = vunpack.c.0.s8 %v4608
        %v4610 = vlaneseq
        %v4611 = vshrl.u32 %v4610, 7
        %v4612 = vsub.s32 %v4609, %v4611
        %v4613 = vrot.slane %v4606, %v4612
        %4614 = vrot.lane.b32.xlu0 %v4613, 80
        %v4615 = vpop.permute.xlu0 %4614
        %vm4617 = vcmp.ge.s32.totalorder %v437, 80
        %vm4618 = vcmp.lt.s32.totalorder %v437, 96
        %vm4619 = vmand %vm4617, %vm4618
        %4620 = vst.msk [vmem:[#allocation3] sm:$0x1] %vm4619, %v4615
        %v4621 = vcombine.high %v4598, %v4598
        %4622 = vrot.lane.b32.xlu0 %v4621, 96
        %v4623 = vpop.permute.xlu0 %4622
        %vm4625 = vcmp.ge.s32.totalorder %v437, 96
        %vm4626 = vcmp.lt.s32.totalorder %v437, 112
        %vm4627 = vmand %vm4625, %vm4626
        %4628 = vst.msk [vmem:[#allocation3] sm:$0x1] %vm4627, %v4623
        %v4629 = vcombine.high %v4613, %v4613
        %4630 = vrot.lane.b32.xlu0 %v4629, 112
        %v4631 = vpop.permute.xlu0 %4630
        %vm4633 = vcmp.ge.s32.totalorder %v437, 112
        %vm4634 = vcmp.lt.s32.totalorder %v437, 128
        %vm4635 = vmand %vm4633, %vm4634
        %4636 = vst.msk [vmem:[#allocation3] sm:$0x1] %vm4635, %v4631
        %4637 = vst.msk [vmem:[#allocation3 + $0x1] sm:$0x1] %vm4536, %v4532
        %v4640 = vunpack.c.l.s4 1966171168
        %v4641 = vunpack.c.0.s8 %v4640
        %v4642 = vlaneseq
        %v4643 = vshrl.u32 %v4642, 7
        %v4644 = vsub.s32 %v4641, %v4643
        %v4645 = vrot.slane %v4532, %v4644
        %v4646 = vcombine.high %v4645, %v4645
        %v4648 = vunpack.c.l.s4 1966171168
        %v4649 = vunpack.c.0.s8 %v4648
        %v4650 = vlaneseq
        %v4651 = vshrl.u32 %v4650, 7
        %v4652 = vsub.s32 %v4649, %v4651
        %v4653 = vrot.slane %v4645, %v4652
        %v4655 = vunpack.c.l.s4 1966171168
        %v4656 = vunpack.c.0.s8 %v4655
        %v4657 = vlaneseq
        %v4658 = vshrl.u32 %v4657, 7
        %v4659 = vsub.s32 %v4656, %v4658
        %v4660 = vrot.slane %v4646, %v4659
        %4661 = vrot.lane.b32.xlu0 %v4660, 16
        %v4662 = vpop.permute.xlu0 %4661
        %4664 = vst.msk [vmem:[#allocation3 + $0x1] sm:$0x1] %vm4566, %v4662
        %v4665 = vcombine.high %v4653, %v4653
        %4666 = vrot.lane.b32.xlu0 %v4665, 32
        %v4667 = vpop.permute.xlu0 %4666
        %4669 = vst.msk [vmem:[#allocation3 + $0x1] sm:$0x1] %vm4574, %v4667
        %v4670 = vcombine.high %v4660, %v4660
        %4671 = vrot.lane.b32.xlu0 %v4670, 48
        %v4672 = vpop.permute.xlu0 %4671
        %4674 = vst.msk [vmem:[#allocation3 + $0x1] sm:$0x1] %vm4582, %v4672
        %v4675 = vcombine.high %v4532, %v4532
        %v4677 = vunpack.c.l.s4 1966171168
        %v4678 = vunpack.c.0.s8 %v4677
        %v4679 = vlaneseq
        %v4680 = vshrl.u32 %v4679, 7
        %v4681 = vsub.s32 %v4678, %v4680
        %v4682 = vrot.slane %v4675, %v4681
        %v4684 = vunpack.c.l.s4 1966171168
        %v4685 = vunpack.c.0.s8 %v4684
        %v4686 = vlaneseq
        %v4687 = vshrl.u32 %v4686, 7
        %v4688 = vsub.s32 %v4685, %v4687
        %v4689 = vrot.slane %v4682, %v4688
        %4690 = vrot.lane.b32.xlu0 %v4689, 64
        %v4691 = vpop.permute.xlu0 %4690
        %4693 = vst.msk [vmem:[#allocation3 + $0x1] sm:$0x1] %vm4604, %v4691
        %v4694 = vcombine.high %v4682, %v4682
        %v4696 = vunpack.c.l.s4 1966171168
        %v4697 = vunpack.c.0.s8 %v4696
        %v4698 = vlaneseq
        %v4699 = vshrl.u32 %v4698, 7
        %v4700 = vsub.s32 %v4697, %v4699
        %v4701 = vrot.slane %v4694, %v4700
        %4702 = vrot.lane.b32.xlu0 %v4701, 80
        %v4703 = vpop.permute.xlu0 %4702
        %4705 = vst.msk [vmem:[#allocation3 + $0x1] sm:$0x1] %vm4619, %v4703
        %v4706 = vcombine.high %v4689, %v4689
        %4707 = vrot.lane.b32.xlu0 %v4706, 96
        %v4708 = vpop.permute.xlu0 %4707
        %4710 = vst.msk [vmem:[#allocation3 + $0x1] sm:$0x1] %vm4627, %v4708
        %v4711 = vcombine.high %v4701, %v4701
        %4712 = vrot.lane.b32.xlu0 %v4711, 112
        %v4713 = vpop.permute.xlu0 %4712
        %4715 = vst.msk [vmem:[#allocation3 + $0x1] sm:$0x1] %vm4635, %v4713
        %v4716 = vld [vmem:[#allocation3] sm:$0x3]
        %v4718 = vlaneseq
        %v4719 = vshrl.u32 %v4718, 7
        %v4720 = vsub.s32 0, %v4719
        %v4721 = vrot.slane %v4716, %v4720
        %v4722 = vlaneseq
        %v4723 = vshrl.u32 %v4722, 7
        %v4724 = vsub.s32 1, %v4723
        %v4725 = vrot.slane %v4716, %v4724
        %v4728 = vpack.c.bf16 %v4721, %v4721
        %v4729 = vpack.c.bf16 %v4725, %v4725
        %v4730 = vld [vmem:[%s7] sm:$0xf]
        %v4731 = vld [vmem:[%s7 + $0x4] sm:$0xf]
        %v4732 = vld [vmem:[%s7 + $0x8] sm:$0xf]
        %v4733 = vld [vmem:[%s7 + $0xc] sm:$0xf]
        %v4734 = vld [vmem:[%s7 + $0x10] sm:$0xf]
        %v4735 = vld [vmem:[%s7 + $0x14] sm:$0xf]
        %v4736 = vld [vmem:[%s7 + $0x18] sm:$0xf]
        %v4737 = vld [vmem:[%s7 + $0x1c] sm:$0xf]
        %v4738 = vld [vmem:[%s7 + $0x20] sm:$0xf]
        %v4739 = vld [vmem:[%s7 + $0x24] sm:$0xf]
        %v4740 = vld [vmem:[%s7 + $0x28] sm:$0xf]
        %v4741 = vld [vmem:[%s7 + $0x2c] sm:$0xf]
        %v4742 = vld [vmem:[%s7 + $0x30] sm:$0xf]
        %v4743 = vld [vmem:[%s7 + $0x34] sm:$0xf]
        %v4744 = vld [vmem:[%s7 + $0x38] sm:$0xf]
        %v4745 = vld [vmem:[%s7 + $0x3c] sm:$0xf]
        %v4746 = vld [vmem:[%s7 + $0x40] sm:$0xf]
        %v4747 = vld [vmem:[%s7 + $0x44] sm:$0xf]
        %v4748 = vld [vmem:[%s7 + $0x48] sm:$0xf]
        %v4749 = vld [vmem:[%s7 + $0x4c] sm:$0xf]
        %v4750 = vld [vmem:[%s7 + $0x50] sm:$0xf]
        %v4751 = vld [vmem:[%s7 + $0x54] sm:$0xf]
        %v4752 = vld [vmem:[%s7 + $0x58] sm:$0xf]
        %v4753 = vld [vmem:[%s7 + $0x5c] sm:$0xf]
        %v4754 = vld [vmem:[%s7 + $0x60] sm:$0xf]
        %v4755 = vld [vmem:[%s7 + $0x64] sm:$0xf]
        %v4756 = vld [vmem:[%s7 + $0x68] sm:$0xf]
        %v4757 = vld [vmem:[%s7 + $0x6c] sm:$0xf]
        %v4758 = vld [vmem:[%s7 + $0x70] sm:$0xf]
        %v4759 = vld [vmem:[%s7 + $0x74] sm:$0xf]
        %v4760 = vld [vmem:[%s7 + $0x78] sm:$0xf]
        %v4761 = vld [vmem:[%s7 + $0x7c] sm:$0xf]
        %v4762 = vld [vmem:[%s8] sm:$0x1]
        %v4795 = vunpack.c.l.b16 %v4730
        %v4796 = vunpack.c.l.b16 %v4731
        %v4797 = vunpack.c.l.b16 %v4732
        %v4798 = vunpack.c.l.b16 %v4733
        %v4799 = vunpack.c.l.b16 %v4734
        %v4800 = vunpack.c.l.b16 %v4735
        %v4801 = vunpack.c.l.b16 %v4736
        %v4802 = vunpack.c.l.b16 %v4737
        %v4803 = vunpack.c.l.b16 %v4738
        %v4804 = vunpack.c.l.b16 %v4739
        %v4805 = vunpack.c.l.b16 %v4740
        %v4806 = vunpack.c.l.b16 %v4741
        %v4807 = vunpack.c.l.b16 %v4742
        %v4808 = vunpack.c.l.b16 %v4743
        %v4809 = vunpack.c.l.b16 %v4744
        %v4810 = vunpack.c.l.b16 %v4745
        %v4811 = vunpack.c.l.b16 %v4746
        %v4812 = vunpack.c.l.b16 %v4747
        %v4813 = vunpack.c.l.b16 %v4748
        %v4814 = vunpack.c.l.b16 %v4749
        %v4815 = vunpack.c.l.b16 %v4750
        %v4816 = vunpack.c.l.b16 %v4751
        %v4817 = vunpack.c.l.b16 %v4752
        %v4818 = vunpack.c.l.b16 %v4753
        %v4819 = vunpack.c.l.b16 %v4754
        %v4820 = vunpack.c.l.b16 %v4755
        %v4821 = vunpack.c.l.b16 %v4756
        %v4822 = vunpack.c.l.b16 %v4757
        %v4823 = vunpack.c.l.b16 %v4758
        %v4824 = vunpack.c.l.b16 %v4759
        %v4825 = vunpack.c.l.b16 %v4760
        %v4826 = vunpack.c.l.b16 %v4761
        %v4827 = vpack.c.b16 %v4796, %v4795
        %v4828 = vpack.c.b16 %v4798, %v4797
        %v4829 = vpack.c.b16 %v4800, %v4799
        %v4830 = vpack.c.b16 %v4802, %v4801
        %v4831 = vpack.c.b16 %v4804, %v4803
        %v4832 = vpack.c.b16 %v4806, %v4805
        %v4833 = vpack.c.b16 %v4808, %v4807
        %v4834 = vpack.c.b16 %v4810, %v4809
        %v4835 = vpack.c.b16 %v4812, %v4811
        %v4836 = vpack.c.b16 %v4814, %v4813
        %v4837 = vpack.c.b16 %v4816, %v4815
        %v4838 = vpack.c.b16 %v4818, %v4817
        %v4839 = vpack.c.b16 %v4820, %v4819
        %v4840 = vpack.c.b16 %v4822, %v4821
        %v4841 = vpack.c.b16 %v4824, %v4823
        %v4842 = vpack.c.b16 %v4826, %v4825
        %4859 = vmatprep.subr.bf16.mxu0 0
        %4860 = vmatpush1.bf16.msra.mxu0 %v4827
        %4861 = vmatprep.subr.bf16.mxu0 0
        %4862 = vmatpush1.bf16.msra.mxu0 %v4828
        %4863 = vmatprep.subr.bf16.mxu0 0
        %4864 = vmatpush1.bf16.msra.mxu0 %v4829
        %4865 = vmatprep.subr.bf16.mxu0 0
        %4866 = vmatpush1.bf16.msra.mxu0 %v4830
        %4867 = vmatprep.subr.bf16.mxu0 0
        %4868 = vmatpush1.bf16.msra.mxu0 %v4831
        %4869 = vmatprep.subr.bf16.mxu0 0
        %4870 = vmatpush1.bf16.msra.mxu0 %v4832
        %4871 = vmatprep.subr.bf16.mxu0 0
        %4872 = vmatpush1.bf16.msra.mxu0 %v4833
        %4873 = vmatprep.subr.bf16.mxu0 0
        %4874 = vmatpush1.bf16.msra.mxu0 %v4834
        %4875 = vmatprep.subr.bf16.mxu0 0
        %4876 = vmatpush1.bf16.msra.mxu0 %v4835
        %4877 = vmatprep.subr.bf16.mxu0 0
        %4878 = vmatpush1.bf16.msra.mxu0 %v4836
        %4879 = vmatprep.subr.bf16.mxu0 0
        %4880 = vmatpush1.bf16.msra.mxu0 %v4837
        %4881 = vmatprep.subr.bf16.mxu0 0
        %4882 = vmatpush1.bf16.msra.mxu0 %v4838
        %4883 = vmatprep.subr.bf16.mxu0 0
        %4884 = vmatpush1.bf16.msra.mxu0 %v4839
        %4885 = vmatprep.subr.bf16.mxu0 0
        %4886 = vmatpush1.bf16.msra.mxu0 %v4840
        %4887 = vmatprep.subr.bf16.mxu0 0
        %4888 = vmatpush1.bf16.msra.mxu0 %v4841
        %4889 = vmatprep.subr.bf16.mxu0 0
        %4890 = vmatpush1.bf16.msra.mxu0 %v4842
        %4891 = vmatprep.mubr.bf16.mxu0 %v4729
        %4892 = vmatmul.mubr.bf16.gmra.mrb[0].mxu0 %v4728
        %v4893 = vpop.f32.mrb[0].mxu0
        %v4894 = vadd.f32 %v4762, %v4893
        %v4895 = vpop.f32.mrb[0].mxu0
        %v4896 = vpop.f32.mrb[0].mxu0
        %v4897 = vpop.f32.mrb[0].mxu0
        %4898 = vdwg.mxu0
        %v4899 = vmax.f32 %v4894, 0.0
        %v4900 = vpack.c.bf16 %v4899, %v4899
        %v4901 = vld [vmem:[%s9] sm:$0xf]
        %v4902 = vld [vmem:[%s9 + $0x4] sm:$0xf]
        %v4903 = vld [vmem:[%s9 + $0x8] sm:$0xf]
        %v4904 = vld [vmem:[%s9 + $0xc] sm:$0xf]
        %v4905 = vld [vmem:[%s9 + $0x10] sm:$0xf]
        %v4906 = vld [vmem:[%s9 + $0x14] sm:$0xf]
        %v4907 = vld [vmem:[%s9 + $0x18] sm:$0xf]
        %v4908 = vld [vmem:[%s9 + $0x1c] sm:$0xf]
        %v4909 = vld [vmem:[%s9 + $0x20] sm:$0xf]
        %v4910 = vld [vmem:[%s9 + $0x24] sm:$0xf]
        %v4911 = vld [vmem:[%s9 + $0x28] sm:$0xf]
        %v4912 = vld [vmem:[%s9 + $0x2c] sm:$0xf]
        %v4913 = vld [vmem:[%s9 + $0x30] sm:$0xf]
        %v4914 = vld [vmem:[%s9 + $0x34] sm:$0xf]
        %v4915 = vld [vmem:[%s9 + $0x38] sm:$0xf]
        %v4916 = vld [vmem:[%s10] sm:$0x1]
        %v4932 = vunpack.c.l.b16 %v4901
        %v4933 = vunpack.c.l.b16 %v4902
        %v4934 = vunpack.c.l.b16 %v4903
        %v4935 = vunpack.c.l.b16 %v4904
        %v4936 = vunpack.c.l.b16 %v4905
        %v4937 = vunpack.c.l.b16 %v4906
        %v4938 = vunpack.c.l.b16 %v4907
        %v4939 = vunpack.c.l.b16 %v4908
        %v4940 = vunpack.c.l.b16 %v4909
        %v4941 = vunpack.c.l.b16 %v4910
        %v4942 = vunpack.c.l.b16 %v4911
        %v4943 = vunpack.c.l.b16 %v4912
        %v4944 = vunpack.c.l.b16 %v4913
        %v4945 = vunpack.c.l.b16 %v4914
        %v4946 = vunpack.c.l.b16 %v4915
        %v4947 = vpack.c.b16 %v4933, %v4932
        %v4948 = vpack.c.b16 %v4935, %v4934
        %v4949 = vpack.c.b16 %v4937, %v4936
        %v4950 = vpack.c.b16 %v4939, %v4938
        %v4951 = vpack.c.b16 %v4941, %v4940
        %v4952 = vpack.c.b16 %v4943, %v4942
        %v4953 = vpack.c.b16 %v4945, %v4944
        %v4954 = vpack.c.b16 %v4946, %v4946
        %vm4962 = vcmask 982016
        %v4964 = vsel %vm4962, %v4900, 0
        %v4967 = vsel %vm707, %v4954, 0
        %4969 = vmatprep.subr.bf16.mxu0 0
        %4970 = vmatpush1.bf16.msra.mxu0 %v4947
        %4971 = vmatprep.subr.bf16.mxu0 0
        %4972 = vmatpush1.bf16.msra.mxu0 %v4948
        %4973 = vmatprep.subr.bf16.mxu0 0
        %4974 = vmatpush1.bf16.msra.mxu0 %v4949
        %4975 = vmatprep.subr.bf16.mxu0 0
        %4976 = vmatpush1.bf16.msra.mxu0 %v4950
        %4977 = vmatprep.subr.bf16.mxu0 0
        %4978 = vmatpush1.bf16.msra.mxu0 %v4951
        %4979 = vmatprep.subr.bf16.mxu0 0
        %4980 = vmatpush1.bf16.msra.mxu0 %v4952
        %4981 = vmatprep.subr.bf16.mxu0 0
        %4982 = vmatpush1.bf16.msra.mxu0 %v4953
        %4983 = vmatprep.subr.bf16.mxu0 0
        %4984 = vmatpush1.bf16.msra.mxu0 %v4967
        %4985 = vmatprep.subr.bf16.mxu0 0
        %4986 = vmatpush1.bf16.msra.mxu0 0
        %4987 = vmatprep.subr.bf16.mxu0 0
        %4988 = vmatpush1.bf16.msra.mxu0 0
        %4989 = vmatprep.subr.bf16.mxu0 0
        %4990 = vmatpush1.bf16.msra.mxu0 0
        %4991 = vmatprep.subr.bf16.mxu0 0
        %4992 = vmatpush1.bf16.msra.mxu0 0
        %4993 = vmatprep.subr.bf16.mxu0 0
        %4994 = vmatpush1.bf16.msra.mxu0 0
        %4995 = vmatprep.subr.bf16.mxu0 0
        %4996 = vmatpush1.bf16.msra.mxu0 0
        %4997 = vmatprep.subr.bf16.mxu0 0
        %4998 = vmatpush1.bf16.msra.mxu0 0
        %4999 = vmatprep.subr.bf16.mxu0 0
        %5000 = vmatpush1.bf16.msra.mxu0 0
        %5001 = vmatprep.mubr.bf16.mxu0 0
        %5002 = vmatmul.mubr.bf16.gmra.mrb[0].mxu0 %v4964
        %v5003 = vpop.f32.mrb[0].mxu0
        %v5004 = vadd.f32 %v4916, %v5003
        %v5005 = vpop.f32.mrb[0].mxu0
        %v5006 = vpop.f32.mrb[0].mxu0
        %v5007 = vpop.f32.mrb[0].mxu0
        %5008 = vdwg.mxu0
        %v5009 = vmax.f32 %v5004, 0.0
        %v5010 = vpack.c.bf16 %v5009, %v5009
        %v5011 = vld [vmem:[%s11] sm:$0xf]
        %v5012 = vld [vmem:[%s11 + $0x4] sm:$0xf]
        %v5013 = vld [vmem:[%s11 + $0x8] sm:$0xf]
        %v5014 = vld [vmem:[%s11 + $0xc] sm:$0xf]
        %v5015 = vld [vmem:[%s11 + $0x10] sm:$0xf]
        %v5016 = vld [vmem:[%s11 + $0x14] sm:$0xf]
        %v5017 = vld [vmem:[%s11 + $0x18] sm:$0xf]
        %v5018 = vld [vmem:[%s11 + $0x1c] sm:$0xf]
        %v5019 = vld [vmem:[%s11 + $0x20] sm:$0xf]
        %v5020 = vld [vmem:[%s11 + $0x24] sm:$0xf]
        %v5021 = vld [vmem:[%s11 + $0x28] sm:$0x3]
        %v5022 = vld [vmem:[%s12] sm:$0x1]
        %v5034 = vunpack.c.l.b16 %v5011
        %v5035 = vunpack.c.l.b16 %v5012
        %v5036 = vunpack.c.l.b16 %v5013
        %v5037 = vunpack.c.l.b16 %v5014
        %v5038 = vunpack.c.l.b16 %v5015
        %v5039 = vunpack.c.l.b16 %v5016
        %v5040 = vunpack.c.l.b16 %v5017
        %v5041 = vunpack.c.l.b16 %v5018
        %v5042 = vunpack.c.l.b16 %v5019
        %v5043 = vunpack.c.l.b16 %v5020
        %v5044 = vunpack.c.l.b16 %v5021
        %v5045 = vpack.c.b16 %v5035, %v5034
        %v5046 = vpack.c.b16 %v5037, %v5036
        %v5047 = vpack.c.b16 %v5039, %v5038
        %v5048 = vpack.c.b16 %v5041, %v5040
        %v5049 = vpack.c.b16 %v5043, %v5042
        %v5050 = vpack.c.b16 %v5044, %v5044
        %vm5056 = vcmask 687104
        %v5058 = vsel %vm5056, %v5010, 0
        %vm5060 = vcmask 1041408
        %v5062 = vsel %vm5060, %v5050, 0
        %5064 = vmatprep.subr.bf16.mxu0 0
        %5065 = vmatpush1.bf16.msra.mxu0 %v5045
        %5066 = vmatprep.subr.bf16.mxu0 0
        %5067 = vmatpush1.bf16.msra.mxu0 %v5046
        %5068 = vmatprep.subr.bf16.mxu0 0
        %5069 = vmatpush1.bf16.msra.mxu0 %v5047
        %5070 = vmatprep.subr.bf16.mxu0 0
        %5071 = vmatpush1.bf16.msra.mxu0 %v5048
        %5072 = vmatprep.subr.bf16.mxu0 0
        %5073 = vmatpush1.bf16.msra.mxu0 %v5049
        %5074 = vmatprep.subr.bf16.mxu0 0
        %5075 = vmatpush1.bf16.msra.mxu0 %v5062
        %5076 = vmatprep.subr.bf16.mxu0 0
        %5077 = vmatpush1.bf16.msra.mxu0 0
        %5078 = vmatprep.subr.bf16.mxu0 0
        %5079 = vmatpush1.bf16.msra.mxu0 0
        %5080 = vmatprep.subr.bf16.mxu0 0
        %5081 = vmatpush1.bf16.msra.mxu0 0
        %5082 = vmatprep.subr.bf16.mxu0 0
        %5083 = vmatpush1.bf16.msra.mxu0 0
        %5084 = vmatprep.subr.bf16.mxu0 0
        %5085 = vmatpush1.bf16.msra.mxu0 0
        %5086 = vmatprep.subr.bf16.mxu0 0
        %5087 = vmatpush1.bf16.msra.mxu0 0
        %5088 = vmatprep.subr.bf16.mxu0 0
        %5089 = vmatpush1.bf16.msra.mxu0 0
        %5090 = vmatprep.subr.bf16.mxu0 0
        %5091 = vmatpush1.bf16.msra.mxu0 0
        %5092 = vmatprep.subr.bf16.mxu0 0
        %5093 = vmatpush1.bf16.msra.mxu0 0
        %5094 = vmatprep.subr.bf16.mxu0 0
        %5095 = vmatpush1.bf16.msra.mxu0 0
        %5096 = vmatprep.mubr.bf16.mxu0 0
        %5097 = vmatmul.mubr.bf16.gmra.mrb[0].mxu0 %v5058
        %v5098 = vpop.f32.mrb[0].mxu0
        %v5099 = vadd.f32 %v5022, %v5098
        %v5100 = vpop.f32.mrb[0].mxu0
        %v5101 = vpop.f32.mrb[0].mxu0
        %v5102 = vpop.f32.mrb[0].mxu0
        %5103 = vdwg.mxu0
        %vm5104 = vcmask 73728
        %5105 = vst.msk [vmem:[%s430] sm:$0x1] %vm5104, %v5099
        %s5106 = sand.u32 %s313, 1
        %s5107 = scalar_lea.sflag [#allocation5], %s5106
        %s5108 = sand.u32 %s313, 1
        %s5109 = scalar_lea.vmem [#allocation4], %s5108
        // Predicated region
        $region73: #{convnet_forward.1} parent=71 // pred_check
          %p5110 = pneg %p323
        $region74: #{convnet_forward.1} parent=71 // pred_check_branch
          %5112 = sbr.rel (%p5110) target = $region76
        $region75: #{convnet_forward.1} parent=71 // pred_region
          %s5114 = ssub.s32 16, 16
          %5115 = vsyncadd %s5107, %s5114
          %s5116 = smul.addr %s27, 16
          %s5117 = scalar_lea.hbm %s13, %s5116
          %s5119 = sshll.u32 %s5109, 4
          %s5120 = int_to_ptr.vmem [resolvable:$true] %s5119
          %5122 = dma.vmem_to_hbm [thread:$0]  %s5120, 16, %s5117, %s5107
        $region76: #{convnet_forward.1} parent=71 // pred_fallthru
          _
      $region72: #{convnet_forward.1} parent=5 // pred_fallthru
        _
      %p5123 = scmp.le.s32.totalorder 2, %s22
      // Predicated region
      $region77: #{convnet_forward.1} parent=5 // pred_check
        %p5124 = pneg %p5123
      $region78: #{convnet_forward.1} parent=5 // pred_check_branch
        %5126 = sbr.rel (%p5124) target = $region80
      $region79: #{convnet_forward.1} parent=5 // pred_region
        %s5127 = ssub.s32 %s22, 2
        // Predicated region
        $region81: #{convnet_forward.1} parent=79 // pred_check
          %p5128 = pneg %p329
        $region82: #{convnet_forward.1} parent=79 // pred_check_branch
          %5130 = sbr.rel (%p5128) target = $region84
        $region83: #{convnet_forward.1} parent=79 // pred_region
          %s5131 = sand.u32 %s314, 1
          %s5132 = scalar_lea.sflag [#allocation5], %s5131
          %s5133 = sand.u32 %s314, 1
          %s5134 = scalar_lea.vmem [#allocation4], %s5133
          %5135 = dma.done %s5132, 16
        $region84: #{convnet_forward.1} parent=79 // pred_fallthru
          _
      $region80: #{convnet_forward.1} parent=5 // pred_fallthru
        _
    $region6: #{convnet_forward.1} parent=1 // loop_footer
      %s26 = sadd.s32 1, %s22
    $region7: #{convnet_forward.1} parent=1 // loop_footer_branch
      %21 = sbr.rel target = $region3
    $region8: #{convnet_forward.1} parent=1 // loop_exit
      _
    %5136 = vsyncpa [#allocation5], 1
    %s5137 = scalar_lea.sflag [#allocation5], 1
    %5138 = vsyncpa %s5137, 1

</llo_original>
